<compile_context>
chip_gen: v7x
topology: tpu7x:2x2x1
jax: 0.10.0
libtpu: 0.0.40
codegen_flags: <defaults>
</compile_context>

<pallas_src>
import functools
import math

import jax
import jax.numpy as jnp
from jax.experimental import pallas as pl
from jax.experimental.pallas import tpu as pltpu

CONV_K = 5          # Conv2d kernel width: (1, 5)
NUM_HIGHWAY = 2     # Highway(2)


def _embedding_kernel(xc_ref, xw_ref, wc_ref, b2_ref, w1_ref, wh_ref, bh_ref,
                      o_ref, *, hidden, char_dim, wout, n_highway, mm_dtype):
    """One row-block (RB token positions) of the fused Embedding forward.

    xc_ref : (RB, W*Dc)   char embeddings (row = token, lanes = (char pos, char dim)), mm_dtype
    xw_ref : (RB, Dw)     word embeddings, mm_dtype
    wc_ref : (K*Dc, H)    per-band Conv2d weight  wc[k*Dc+dc, h] = W2[h, dc, 0, k], mm_dtype
    b2_ref : (1, H)       Conv2d bias, f32
    w1_ref : (H+Dw, H)    1x1 Conv1d weight (input-major), mm_dtype
    wh_ref : (n, H, 2H)   Highway [gate | linear] weights (input-major), mm_dtype
    bh_ref : (n, 1, 2H)   Highway [gate | linear] biases, f32
    o_ref  : (RB, H)      output rows, f32
    """
    H = hidden
    Dc = char_dim
    K = CONV_K

    # --- char branch: Conv2d(1x5, VALID) + ReLU + max over window positions ----
    # `wout` per-band matmuls folded into a running max. Bias is position-independent
    # and ReLU is monotone, so both commute with the max and are applied once.
    m = jnp.dot(xc_ref[:, 0:K * Dc], wc_ref[...],
                preferred_element_type=jnp.float32)                     # (RB, H)
    for w in range(1, wout):                                            # static unroll
        band = xc_ref[:, w * Dc:(w + K) * Dc]                           # (RB, K*Dc)
        m = jnp.maximum(m, jnp.dot(band, wc_ref[...],
                                   preferred_element_type=jnp.float32))
    ch = jnp.maximum(m + b2_ref[...], 0.0)                              # (RB, H) f32

    # --- 1x1 Conv1d over concat([char, word]) channels: one fused matmul -------
    cat = jnp.concatenate([ch.astype(mm_dtype), xw_ref[...]], axis=-1)  # (RB, H+Dw)
    x = jnp.dot(cat, w1_ref[...], preferred_element_type=jnp.float32)   # (RB, H)

    # --- Highway x n: gate and linear fused into a single (H, 2H) matmul -------
    for i in range(n_highway):                                          # static unroll (n=2)
        pre = jnp.dot(x.astype(mm_dtype), wh_ref[i],
                      preferred_element_type=jnp.float32) + bh_ref[i]   # (RB, 2H)
        # sigmoid written via tanh: exact math, transcendental stays on the EUP slot.
        gate = 0.5 * jnp.tanh(0.5 * pre[:, :H]) + 0.5
        nonlinear = pre[:, H:]
        # TODO(synk): F.dropout(nonlinear, p=keep_prob) skipped (eval mode).
        x = x + gate * (nonlinear - x)        # == gate*nonlinear + (1-gate)*x

    o_ref[...] = x.astype(o_ref.dtype)        # single lane-dense (RB, H) store


def init_params(key, hidden, char_dim, emb_dim, n_highway=NUM_HIGHWAY):
    """Weights in PyTorch layouts, matching the module's initializers."""
    ks = jax.random.split(key, 7)
    fan2 = char_dim * 1 * CONV_K
    w2 = jax.random.normal(ks[0], (hidden, char_dim, 1, CONV_K), jnp.float32) * math.sqrt(2.0 / fan2)
    b2 = jax.random.uniform(ks[1], (hidden,), jnp.float32,
                            -1.0 / math.sqrt(fan2), 1.0 / math.sqrt(fan2))
    cin1 = emb_dim + hidden
    bd1 = math.sqrt(6.0 / (cin1 + hidden))
    w1 = jax.random.uniform(ks[2], (hidden, cin1, 1), jnp.float32, -bd1, bd1)
    bdh = math.sqrt(6.0 / (hidden + hidden))
    wg = jax.random.uniform(ks[3], (n_highway, hidden, hidden, 1), jnp.float32, -bdh, bdh)
    bg = jax.random.uniform(ks[4], (n_highway, hidden), jnp.float32,
                            -1.0 / math.sqrt(hidden), 1.0 / math.sqrt(hidden))
    wl = jax.random.uniform(ks[5], (n_highway, hidden, hidden, 1), jnp.float32, -bdh, bdh)
    bl = jax.random.uniform(ks[6], (n_highway, hidden), jnp.float32,
                            -1.0 / math.sqrt(hidden), 1.0 / math.sqrt(hidden))
    return dict(w2=w2, b2=b2, w1=w1, wg=wg, bg=bg, wl=wl, bl=bl)


def pack_params(params, mm_dtype=jnp.bfloat16):
    """One-time, pure-jnp repack of PyTorch-layout weights into kernel layouts.

    Call once at init (jit-compatible); pass the result to embedding_forward.
    """
    w2 = params["w2"]                                        # (H, Dc, 1, K)
    H = w2.shape[0]
    # Per-band conv weight shared by all window positions: wc[k*Dc+dc, h] = w2[h, dc, 0, k].
    wc = jnp.transpose(w2[:, :, 0, :], (2, 1, 0)).reshape(-1, H).astype(mm_dtype)   # (K*Dc, H)
    b2 = params["b2"].reshape(1, H).astype(jnp.float32)
    w1 = jnp.transpose(params["w1"][:, :, 0], (1, 0)).astype(mm_dtype)               # (H+Dw, H)
    wh = jnp.concatenate(
        [jnp.transpose(params["wg"][:, :, :, 0], (0, 2, 1)),
         jnp.transpose(params["wl"][:, :, :, 0], (0, 2, 1))], axis=-1).astype(mm_dtype)  # (n, H, 2H)
    bh = jnp.concatenate([params["bg"], params["bl"]],
                         axis=-1)[:, None, :].astype(jnp.float32)                     # (n, 1, 2H)
    return dict(wc=wc, b2=b2, w1=w1, wh=wh, bh=bh)


def embedding_forward(packed, ch_emb, wd_emb, length=None, *, row_block=512,
                      transpose_output=True):
    """ch_emb: (N, L, W, Dc), wd_emb: (N, L, Dw)  ->  (N, H, L)   (eval mode).

    `packed` comes from pack_params (done once at init). Matmul operand dtype is
    taken from the packed weights (bf16 by default — fast path on v5e/v6e/v7x).
    """
    del length  # unused by the forward computation (API-compat argument)
    N, L, Wc, Dc = ch_emb.shape
    Dw = wd_emb.shape[-1]
    H = packed["b2"].shape[-1]
    wout = Wc - CONV_K + 1
    n_highway = packed["wh"].shape[0]
    mm_dtype = packed["wc"].dtype

    R = N * L

    # Stream activations in mm_dtype (bf16): halves HBM traffic + VMEM buffers.
    xc2 = ch_emb.reshape(R, Wc * Dc).astype(mm_dtype)   # rows = tokens
    xw2 = wd_emb.reshape(R, Dw).astype(mm_dtype)

    # Row block: as large as possible (amortize per-step pipeline overhead, fill the
    # MXU M dim), but keep the grid length >= 2 so the v7x megacore can shard it.
    RB = int(min(row_block, R))
    if pl.cdiv(R, RB) < 2 and R >= 16:
        RB = (R + 1) // 2
    RB = max(8, ((RB + 7) // 8) * 8)                    # sublane-aligned
    Rp = pl.cdiv(R, RB) * RB                            # zero-pad tail rows (no masks)
    if Rp != R:
        xc2 = jnp.pad(xc2, ((0, Rp - R), (0, 0)))
        xw2 = jnp.pad(xw2, ((0, Rp - R), (0, 0)))
    grid_r = Rp // RB

    kernel = functools.partial(_embedding_kernel, hidden=H, char_dim=Dc, wout=wout,
                               n_highway=n_highway, mm_dtype=mm_dtype)

    flops = 2 * Rp * (wout * CONV_K * Dc * H + (H + Dw) * H + n_highway * H * (2 * H))
    transcendentals = n_highway * Rp * H
    bytes_accessed = int(xc2.size * xc2.dtype.itemsize + xw2.size * xw2.dtype.itemsize
                         + sum(v.size * v.dtype.itemsize for v in packed.values())
                         + Rp * H * 4)

    out2 = pl.pallas_call(
        kernel,
        out_shape=jax.ShapeDtypeStruct((Rp, H), jnp.float32),
        grid_spec=pltpu.PrefetchScalarGridSpec(
            num_scalar_prefetch=0,
            grid=(grid_r,),
            in_specs=[
                pl.BlockSpec((RB, Wc * Dc), lambda i: (i, 0)),
                pl.BlockSpec((RB, Dw), lambda i: (i, 0)),
                # Grid-invariant weights: tiny after the per-band repack (~0.1-0.3 MiB
                # bf16 total), so default double-buffering is harmless on all chips.
                pl.BlockSpec((CONV_K * Dc, H), lambda i: (0, 0)),
                pl.BlockSpec((1, H), lambda i: (0, 0)),
                pl.BlockSpec((H + Dw, H), lambda i: (0, 0)),
                pl.BlockSpec((n_highway, H, 2 * H), lambda i: (0, 0, 0)),
                pl.BlockSpec((n_highway, 1, 2 * H), lambda i: (0, 0, 0)),
            ],
            out_specs=pl.BlockSpec((RB, H), lambda i: (i, 0)),
        ),
        compiler_params=pltpu.CompilerParams(
            dimension_semantics=("parallel",),
            vmem_limit_bytes=32 * 1024 * 1024,
        ),
        cost_estimate=pl.CostEstimate(flops=flops,
                                      transcendentals=transcendentals,
                                      bytes_accessed=bytes_accessed),
    )(xc2, xw2, packed["wc"], packed["b2"], packed["w1"], packed["wh"], packed["bh"])

    out = out2[:R].reshape(N, L, H)
    if transpose_output:
        # (N, L, H) -> (N, H, L) to match the PyTorch module's NCL output. Consumers
        # that accept NLH can pass transpose_output=False and skip this HBM round trip.
        out = jnp.transpose(out, (0, 2, 1))
    return out


def _reference_forward(params, ch_emb, wd_emb):
    """Pure-JAX f32 reference implementing the PyTorch Embedding.forward (eval mode)."""
    hp = jax.lax.Precision.HIGHEST
    x = jnp.transpose(ch_emb, (0, 3, 1, 2))                          # (N, Dc, L, W)
    y = jax.lax.conv_general_dilated(
        x, params["w2"], window_strides=(1, 1), padding="VALID",
        dimension_numbers=("NCHW", "OIHW", "NCHW"), precision=hp)    # (N, H, L, W-4)
    y = jax.nn.relu(y + params["b2"].reshape(1, -1, 1, 1))
    ch = jnp.max(y, axis=3)                                          # (N, H, L)
    wd = jnp.transpose(wd_emb, (0, 2, 1))                            # (N, Dw, L)
    emb = jnp.concatenate([ch, wd], axis=1)                          # (N, H+Dw, L)
    xcur = jnp.einsum("oc,ncl->nol", params["w1"][:, :, 0], emb, precision=hp)
    # Highway(2): per-position channel-mixing gate/linear (standard QANet semantics;
    # the spec's transpose pair is layout plumbing and `Highway(2)` cannot bind size to L).
    for i in range(params["wg"].shape[0]):
        gate = jax.nn.sigmoid(
            jnp.einsum("oc,ncl->nol", params["wg"][i, :, :, 0], xcur, precision=hp)
            + params["bg"][i].reshape(1, -1, 1))
        nonlinear = (jnp.einsum("oc,ncl->nol", params["wl"][i, :, :, 0], xcur, precision=hp)
                     + params["bl"][i].reshape(1, -1, 1))
        xcur = gate * nonlinear + (1.0 - gate) * xcur
    return xcur                                                      # (N, H, L)


if __name__ == "__main__":
    # batch=2, seq_len=64, chars/word=16, char_dim=64, word_emb_dim=128, hidden=128
    N, L, W, Dc, Dw, H = 2, 64, 16, 64, 128, 128

    key = jax.random.PRNGKey(0)
    kc, kw, kp = jax.random.split(key, 3)
    ch_emb = jax.random.normal(kc, (N, L, W, Dc), jnp.float32)
    wd_emb = jax.random.normal(kw, (N, L, Dw), jnp.float32)
    params = init_params(kp, H, Dc, Dw)

    ref = jax.block_until_ready(_reference_forward(params, ch_emb, wd_emb))

    # The wrapper is jit-able with packed params as traced args (packing runs once at init).
    fwd = jax.jit(embedding_forward, static_argnames=("row_block", "transpose_output"))

    # 1) f32 MXU operands: tight correctness check of the fused kernel math.
    packed_f32 = pack_params(params, mm_dtype=jnp.float32)
    out_f32 = jax.block_until_ready(fwd(packed_f32, ch_emb, wd_emb))
    assert out_f32.shape == (N, H, L)
    assert jnp.allclose(out_f32, ref, atol=5e-3, rtol=5e-3), (
        f"f32 kernel mismatch, max|diff|={jnp.max(jnp.abs(out_f32 - ref))}")

    # 2) bf16 MXU operands (fast path on v5e/v6e/v7x; accumulation + elementwise stay
    #    f32): looser tolerance since operands are quantized to bf16 before the MXU.
    packed_bf16 = pack_params(params, mm_dtype=jnp.bfloat16)
    out_bf16 = jax.block_until_ready(fwd(packed_bf16, ch_emb, wd_emb))
    assert out_bf16.shape == (N, H, L)
    assert jnp.allclose(out_bf16, ref, atol=2.5e-1, rtol=1e-1), (
        f"bf16 kernel mismatch, max|diff|={jnp.max(jnp.abs(out_bf16 - ref))}")

    print("KERNEL_OK")
</pallas_src>

<mosaic_0001>
module attributes {stable_mosaic.version = 11 : i64} {
  func.func @_embedding_kernel(%arg0: i32, %arg1: memref<64x1024xf32, #tpu.memory_space<vmem>>, %arg2: memref<64x128xf32, #tpu.memory_space<vmem>>, %arg3: memref<320x128xf32, #tpu.memory_space<vmem>>, %arg4: memref<1x128xf32, #tpu.memory_space<vmem>>, %arg5: memref<256x128xf32, #tpu.memory_space<vmem>>, %arg6: memref<2x128x256xf32, #tpu.memory_space<vmem>>, %arg7: memref<2x1x256xf32, #tpu.memory_space<vmem>>, %arg8: memref<64x128xf32, #tpu.memory_space<vmem>>) attributes {dimension_semantics = [#tpu.dimension_semantics<parallel>], iteration_bounds = array<i64: 2>, scalar_prefetch = 0 : i64, scratch_operands = 0 : i64, tpu.core_type = #tpu.core_type<tc>, window_params = [{transform_indices = @transform_0, window_bounds = array<i64: 64, 1024>}, {transform_indices = @transform_1, window_bounds = array<i64: 64, 128>}, {pipeline_mode = #tpu.pipeline_mode<synchronous>, transform_indices = @transform_2, window_bounds = array<i64: 320, 128>}, {pipeline_mode = #tpu.pipeline_mode<synchronous>, transform_indices = @transform_3, window_bounds = array<i64: 1, 128>}, {pipeline_mode = #tpu.pipeline_mode<synchronous>, transform_indices = @transform_4, window_bounds = array<i64: 256, 128>}, {pipeline_mode = #tpu.pipeline_mode<synchronous>, transform_indices = @transform_5, window_bounds = array<i64: 2, 128, 256>}, {pipeline_mode = #tpu.pipeline_mode<synchronous>, transform_indices = @transform_6, window_bounds = array<i64: 2, 1, 256>}, {transform_indices = @transform_7, window_bounds = array<i64: 64, 128>}]} {
    %c0 = arith.constant 0 : index
    %c0_0 = arith.constant 0 : index
    %0 = vector.load %arg1[%c0, %c0_0] : memref<64x1024xf32, #tpu.memory_space<vmem>>, vector<64x320xf32>
    %c0_1 = arith.constant 0 : index
    %c0_2 = arith.constant 0 : index
    %1 = vector.load %arg3[%c0_1, %c0_2] : memref<320x128xf32, #tpu.memory_space<vmem>>, vector<320x128xf32>
    %cst = arith.constant dense<0.000000e+00> : vector<64x128xf32>
    %2 = tpu.matmul %0, %1, %cst {dimension_numbers = #tpu.dot_dimension_numbers<[1], [0], [0], [1], [0, 0, 1, 1], [], []>} : vector<64x320xf32>, vector<320x128xf32>, vector<64x128xf32> -> vector<64x128xf32>
    %c0_3 = arith.constant 0 : index
    %c64 = arith.constant 64 : index
    %3 = vector.load %arg1[%c0_3, %c64] : memref<64x1024xf32, #tpu.memory_space<vmem>>, vector<64x320xf32>
    %c0_4 = arith.constant 0 : index
    %c0_5 = arith.constant 0 : index
    %4 = vector.load %arg3[%c0_4, %c0_5] : memref<320x128xf32, #tpu.memory_space<vmem>>, vector<320x128xf32>
    %cst_6 = arith.constant dense<0.000000e+00> : vector<64x128xf32>
    %5 = tpu.matmul %3, %4, %cst_6 {dimension_numbers = #tpu.dot_dimension_numbers<[1], [0], [0], [1], [0, 0, 1, 1], [], []>} : vector<64x320xf32>, vector<320x128xf32>, vector<64x128xf32> -> vector<64x128xf32>
    %6 = arith.maximumf %2, %5 : vector<64x128xf32>
    %c0_7 = arith.constant 0 : index
    %c128 = arith.constant 128 : index
    %7 = vector.load %arg1[%c0_7, %c128] : memref<64x1024xf32, #tpu.memory_space<vmem>>, vector<64x320xf32>
    %c0_8 = arith.constant 0 : index
    %c0_9 = arith.constant 0 : index
    %8 = vector.load %arg3[%c0_8, %c0_9] : memref<320x128xf32, #tpu.memory_space<vmem>>, vector<320x128xf32>
    %cst_10 = arith.constant dense<0.000000e+00> : vector<64x128xf32>
    %9 = tpu.matmul %7, %8, %cst_10 {dimension_numbers = #tpu.dot_dimension_numbers<[1], [0], [0], [1], [0, 0, 1, 1], [], []>} : vector<64x320xf32>, vector<320x128xf32>, vector<64x128xf32> -> vector<64x128xf32>
    %10 = arith.maximumf %6, %9 : vector<64x128xf32>
    %c0_11 = arith.constant 0 : index
    %c192 = arith.constant 192 : index
    %11 = vector.load %arg1[%c0_11, %c192] : memref<64x1024xf32, #tpu.memory_space<vmem>>, vector<64x320xf32>
    %c0_12 = arith.constant 0 : index
    %c0_13 = arith.constant 0 : index
    %12 = vector.load %arg3[%c0_12, %c0_13] : memref<320x128xf32, #tpu.memory_space<vmem>>, vector<320x128xf32>
    %cst_14 = arith.constant dense<0.000000e+00> : vector<64x128xf32>
    %13 = tpu.matmul %11, %12, %cst_14 {dimension_numbers = #tpu.dot_dimension_numbers<[1], [0], [0], [1], [0, 0, 1, 1], [], []>} : vector<64x320xf32>, vector<320x128xf32>, vector<64x128xf32> -> vector<64x128xf32>
    %14 = arith.maximumf %10, %13 : vector<64x128xf32>
    %c0_15 = arith.constant 0 : index
    %c256 = arith.constant 256 : index
    %15 = vector.load %arg1[%c0_15, %c256] : memref<64x1024xf32, #tpu.memory_space<vmem>>, vector<64x320xf32>
    %c0_16 = arith.constant 0 : index
    %c0_17 = arith.constant 0 : index
    %16 = vector.load %arg3[%c0_16, %c0_17] : memref<320x128xf32, #tpu.memory_space<vmem>>, vector<320x128xf32>
    %cst_18 = arith.constant dense<0.000000e+00> : vector<64x128xf32>
    %17 = tpu.matmul %15, %16, %cst_18 {dimension_numbers = #tpu.dot_dimension_numbers<[1], [0], [0], [1], [0, 0, 1, 1], [], []>} : vector<64x320xf32>, vector<320x128xf32>, vector<64x128xf32> -> vector<64x128xf32>
    %18 = arith.maximumf %14, %17 : vector<64x128xf32>
    %c0_19 = arith.constant 0 : index
    %c320 = arith.constant 320 : index
    %19 = vector.load %arg1[%c0_19, %c320] : memref<64x1024xf32, #tpu.memory_space<vmem>>, vector<64x320xf32>
    %c0_20 = arith.constant 0 : index
    %c0_21 = arith.constant 0 : index
    %20 = vector.load %arg3[%c0_20, %c0_21] : memref<320x128xf32, #tpu.memory_space<vmem>>, vector<320x128xf32>
    %cst_22 = arith.constant dense<0.000000e+00> : vector<64x128xf32>
    %21 = tpu.matmul %19, %20, %cst_22 {dimension_numbers = #tpu.dot_dimension_numbers<[1], [0], [0], [1], [0, 0, 1, 1], [], []>} : vector<64x320xf32>, vector<320x128xf32>, vector<64x128xf32> -> vector<64x128xf32>
    %22 = arith.maximumf %18, %21 : vector<64x128xf32>
    %c0_23 = arith.constant 0 : index
    %c384 = arith.constant 384 : index
    %23 = vector.load %arg1[%c0_23, %c384] : memref<64x1024xf32, #tpu.memory_space<vmem>>, vector<64x320xf32>
    %c0_24 = arith.constant 0 : index
    %c0_25 = arith.constant 0 : index
    %24 = vector.load %arg3[%c0_24, %c0_25] : memref<320x128xf32, #tpu.memory_space<vmem>>, vector<320x128xf32>
    %cst_26 = arith.constant dense<0.000000e+00> : vector<64x128xf32>
    %25 = tpu.matmul %23, %24, %cst_26 {dimension_numbers = #tpu.dot_dimension_numbers<[1], [0], [0], [1], [0, 0, 1, 1], [], []>} : vector<64x320xf32>, vector<320x128xf32>, vector<64x128xf32> -> vector<64x128xf32>
    %26 = arith.maximumf %22, %25 : vector<64x128xf32>
    %c0_27 = arith.constant 0 : index
    %c448 = arith.constant 448 : index
    %27 = vector.load %arg1[%c0_27, %c448] : memref<64x1024xf32, #tpu.memory_space<vmem>>, vector<64x320xf32>
    %c0_28 = arith.constant 0 : index
    %c0_29 = arith.constant 0 : index
    %28 = vector.load %arg3[%c0_28, %c0_29] : memref<320x128xf32, #tpu.memory_space<vmem>>, vector<320x128xf32>
    %cst_30 = arith.constant dense<0.000000e+00> : vector<64x128xf32>
    %29 = tpu.matmul %27, %28, %cst_30 {dimension_numbers = #tpu.dot_dimension_numbers<[1], [0], [0], [1], [0, 0, 1, 1], [], []>} : vector<64x320xf32>, vector<320x128xf32>, vector<64x128xf32> -> vector<64x128xf32>
    %30 = arith.maximumf %26, %29 : vector<64x128xf32>
    %c0_31 = arith.constant 0 : index
    %c512 = arith.constant 512 : index
    %31 = vector.load %arg1[%c0_31, %c512] : memref<64x1024xf32, #tpu.memory_space<vmem>>, vector<64x320xf32>
    %c0_32 = arith.constant 0 : index
    %c0_33 = arith.constant 0 : index
    %32 = vector.load %arg3[%c0_32, %c0_33] : memref<320x128xf32, #tpu.memory_space<vmem>>, vector<320x128xf32>
    %cst_34 = arith.constant dense<0.000000e+00> : vector<64x128xf32>
    %33 = tpu.matmul %31, %32, %cst_34 {dimension_numbers = #tpu.dot_dimension_numbers<[1], [0], [0], [1], [0, 0, 1, 1], [], []>} : vector<64x320xf32>, vector<320x128xf32>, vector<64x128xf32> -> vector<64x128xf32>
    %34 = arith.maximumf %30, %33 : vector<64x128xf32>
    %c0_35 = arith.constant 0 : index
    %c576 = arith.constant 576 : index
    %35 = vector.load %arg1[%c0_35, %c576] : memref<64x1024xf32, #tpu.memory_space<vmem>>, vector<64x320xf32>
    %c0_36 = arith.constant 0 : index
    %c0_37 = arith.constant 0 : index
    %36 = vector.load %arg3[%c0_36, %c0_37] : memref<320x128xf32, #tpu.memory_space<vmem>>, vector<320x128xf32>
    %cst_38 = arith.constant dense<0.000000e+00> : vector<64x128xf32>
    %37 = tpu.matmul %35, %36, %cst_38 {dimension_numbers = #tpu.dot_dimension_numbers<[1], [0], [0], [1], [0, 0, 1, 1], [], []>} : vector<64x320xf32>, vector<320x128xf32>, vector<64x128xf32> -> vector<64x128xf32>
    %38 = arith.maximumf %34, %37 : vector<64x128xf32>
    %c0_39 = arith.constant 0 : index
    %c640 = arith.constant 640 : index
    %39 = vector.load %arg1[%c0_39, %c640] : memref<64x1024xf32, #tpu.memory_space<vmem>>, vector<64x320xf32>
    %c0_40 = arith.constant 0 : index
    %c0_41 = arith.constant 0 : index
    %40 = vector.load %arg3[%c0_40, %c0_41] : memref<320x128xf32, #tpu.memory_space<vmem>>, vector<320x128xf32>
    %cst_42 = arith.constant dense<0.000000e+00> : vector<64x128xf32>
    %41 = tpu.matmul %39, %40, %cst_42 {dimension_numbers = #tpu.dot_dimension_numbers<[1], [0], [0], [1], [0, 0, 1, 1], [], []>} : vector<64x320xf32>, vector<320x128xf32>, vector<64x128xf32> -> vector<64x128xf32>
    %42 = arith.maximumf %38, %41 : vector<64x128xf32>
    %c0_43 = arith.constant 0 : index
    %c704 = arith.constant 704 : index
    %43 = vector.load %arg1[%c0_43, %c704] : memref<64x1024xf32, #tpu.memory_space<vmem>>, vector<64x320xf32>
    %c0_44 = arith.constant 0 : index
    %c0_45 = arith.constant 0 : index
    %44 = vector.load %arg3[%c0_44, %c0_45] : memref<320x128xf32, #tpu.memory_space<vmem>>, vector<320x128xf32>
    %cst_46 = arith.constant dense<0.000000e+00> : vector<64x128xf32>
    %45 = tpu.matmul %43, %44, %cst_46 {dimension_numbers = #tpu.dot_dimension_numbers<[1], [0], [0], [1], [0, 0, 1, 1], [], []>} : vector<64x320xf32>, vector<320x128xf32>, vector<64x128xf32> -> vector<64x128xf32>
    %46 = arith.maximumf %42, %45 : vector<64x128xf32>
    %c0_47 = arith.constant 0 : index
    %c0_48 = arith.constant 0 : index
    %47 = vector.load %arg4[%c0_47, %c0_48] : memref<1x128xf32, #tpu.memory_space<vmem>>, vector<1x128xf32>
    %48 = vector.broadcast %47 : vector<1x128xf32> to vector<64x128xf32>
    %49 = arith.addf %46, %48 : vector<64x128xf32>
    %cst_49 = arith.constant 0.000000e+00 : f32
    %50 = vector.broadcast %cst_49 : f32 to vector<64x128xf32>
    %51 = arith.maximumf %49, %50 : vector<64x128xf32>
    %c0_50 = arith.constant 0 : index
    %c0_51 = arith.constant 0 : index
    %52 = vector.load %arg2[%c0_50, %c0_51] : memref<64x128xf32, #tpu.memory_space<vmem>>, vector<64x128xf32>
    %53 = tpu.concatenate %51, %52 in 1 : vector<64x128xf32>, vector<64x128xf32> -> vector<64x256xf32>
    %c0_52 = arith.constant 0 : index
    %c0_53 = arith.constant 0 : index
    %54 = vector.load %arg5[%c0_52, %c0_53] : memref<256x128xf32, #tpu.memory_space<vmem>>, vector<256x128xf32>
    %cst_54 = arith.constant dense<0.000000e+00> : vector<64x128xf32>
    %55 = tpu.matmul %53, %54, %cst_54 {dimension_numbers = #tpu.dot_dimension_numbers<[1], [0], [0], [1], [0, 0, 1, 1], [], []>} : vector<64x256xf32>, vector<256x128xf32>, vector<64x128xf32> -> vector<64x128xf32>
    %c0_55 = arith.constant 0 : index
    %c0_56 = arith.constant 0 : index
    %c0_57 = arith.constant 0 : index
    %56 = vector.load %arg6[%c0_55, %c0_56, %c0_57] : memref<2x128x256xf32, #tpu.memory_space<vmem>>, vector<1x128x256xf32>
    %57 = vector.shape_cast %56 : vector<1x128x256xf32> to vector<128x256xf32>
    %cst_58 = arith.constant dense<0.000000e+00> : vector<64x256xf32>
    %58 = tpu.matmul %55, %57, %cst_58 {dimension_numbers = #tpu.dot_dimension_numbers<[1], [0], [0], [1], [0, 0, 1, 1], [], []>} : vector<64x128xf32>, vector<128x256xf32>, vector<64x256xf32> -> vector<64x256xf32>
    %c0_59 = arith.constant 0 : index
    %c0_60 = arith.constant 0 : index
    %c0_61 = arith.constant 0 : index
    %59 = vector.load %arg7[%c0_59, %c0_60, %c0_61] : memref<2x1x256xf32, #tpu.memory_space<vmem>>, vector<1x1x256xf32>
    %60 = vector.shape_cast %59 : vector<1x1x256xf32> to vector<1x256xf32>
    %61 = vector.broadcast %60 : vector<1x256xf32> to vector<64x256xf32>
    %62 = arith.addf %58, %61 : vector<64x256xf32>
    %63 = vector.extract_strided_slice %62 {offsets = [0, 0], sizes = [64, 128], strides = [1, 1]} : vector<64x256xf32> to vector<64x128xf32>
    %cst_62 = arith.constant 5.000000e-01 : f32
    %64 = vector.broadcast %cst_62 : f32 to vector<64x128xf32>
    %65 = arith.mulf %64, %63 : vector<64x128xf32>
    %66 = math.tanh %65 : vector<64x128xf32>
    %cst_63 = arith.constant 5.000000e-01 : f32
    %67 = vector.broadcast %cst_63 : f32 to vector<64x128xf32>
    %68 = arith.mulf %67, %66 : vector<64x128xf32>
    %cst_64 = arith.constant 5.000000e-01 : f32
    %69 = vector.broadcast %cst_64 : f32 to vector<64x128xf32>
    %70 = arith.addf %68, %69 : vector<64x128xf32>
    %71 = vector.extract_strided_slice %62 {offsets = [0, 128], sizes = [64, 128], strides = [1, 1]} : vector<64x256xf32> to vector<64x128xf32>
    %72 = arith.subf %71, %55 : vector<64x128xf32>
    %73 = arith.mulf %70, %72 : vector<64x128xf32>
    %74 = arith.addf %55, %73 : vector<64x128xf32>
    %c1 = arith.constant 1 : index
    %c0_65 = arith.constant 0 : index
    %c0_66 = arith.constant 0 : index
    %75 = vector.load %arg6[%c1, %c0_65, %c0_66] : memref<2x128x256xf32, #tpu.memory_space<vmem>>, vector<1x128x256xf32>
    %76 = vector.shape_cast %75 : vector<1x128x256xf32> to vector<128x256xf32>
    %cst_67 = arith.constant dense<0.000000e+00> : vector<64x256xf32>
    %77 = tpu.matmul %74, %76, %cst_67 {dimension_numbers = #tpu.dot_dimension_numbers<[1], [0], [0], [1], [0, 0, 1, 1], [], []>} : vector<64x128xf32>, vector<128x256xf32>, vector<64x256xf32> -> vector<64x256xf32>
    %c1_68 = arith.constant 1 : index
    %c0_69 = arith.constant 0 : index
    %c0_70 = arith.constant 0 : index
    %78 = vector.load %arg7[%c1_68, %c0_69, %c0_70] : memref<2x1x256xf32, #tpu.memory_space<vmem>>, vector<1x1x256xf32>
    %79 = vector.shape_cast %78 : vector<1x1x256xf32> to vector<1x256xf32>
    %80 = vector.broadcast %79 : vector<1x256xf32> to vector<64x256xf32>
    %81 = arith.addf %77, %80 : vector<64x256xf32>
    %82 = vector.extract_strided_slice %81 {offsets = [0, 0], sizes = [64, 128], strides = [1, 1]} : vector<64x256xf32> to vector<64x128xf32>
    %cst_71 = arith.constant 5.000000e-01 : f32
    %83 = vector.broadcast %cst_71 : f32 to vector<64x128xf32>
    %84 = arith.mulf %83, %82 : vector<64x128xf32>
    %85 = math.tanh %84 : vector<64x128xf32>
    %cst_72 = arith.constant 5.000000e-01 : f32
    %86 = vector.broadcast %cst_72 : f32 to vector<64x128xf32>
    %87 = arith.mulf %86, %85 : vector<64x128xf32>
    %cst_73 = arith.constant 5.000000e-01 : f32
    %88 = vector.broadcast %cst_73 : f32 to vector<64x128xf32>
    %89 = arith.addf %87, %88 : vector<64x128xf32>
    %90 = vector.extract_strided_slice %81 {offsets = [0, 128], sizes = [64, 128], strides = [1, 1]} : vector<64x256xf32> to vector<64x128xf32>
    %91 = arith.subf %90, %74 : vector<64x128xf32>
    %92 = arith.mulf %89, %91 : vector<64x128xf32>
    %93 = arith.addf %74, %92 : vector<64x128xf32>
    %c0_74 = arith.constant 0 : index
    %c0_75 = arith.constant 0 : index
    %94 = vector.load %arg8[%c0_74, %c0_75] : memref<64x128xf32, #tpu.memory_space<vmem>>, vector<64x128xf32>
    tpu.vector_store %arg8[%c0_74, %c0_75], %93 {strides = array<i32>} : memref<64x128xf32, #tpu.memory_space<vmem>>, vector<64x128xf32>,
    return
  }
  func.func @transform_0(%arg0: i32) -> (i32, i32) {
    %c0_i32 = arith.constant 0 : i32
    %c0_i32_0 = arith.constant 0 : i32
    return %arg0, %c0_i32 : i32, i32
  }
  func.func @transform_1(%arg0: i32) -> (i32, i32) {
    %c0_i32 = arith.constant 0 : i32
    %c0_i32_0 = arith.constant 0 : i32
    return %arg0, %c0_i32 : i32, i32
  }
  func.func @transform_2(%arg0: i32) -> (i32, i32) {
    %c0_i32 = arith.constant 0 : i32
    %c0_i32_0 = arith.constant 0 : i32
    %c0_i32_1 = arith.constant 0 : i32
    return %c0_i32, %c0_i32_0 : i32, i32
  }
  func.func @transform_3(%arg0: i32) -> (i32, i32) {
    %c0_i32 = arith.constant 0 : i32
    %c0_i32_0 = arith.constant 0 : i32
    %c0_i32_1 = arith.constant 0 : i32
    return %c0_i32, %c0_i32_0 : i32, i32
  }
  func.func @transform_4(%arg0: i32) -> (i32, i32) {
    %c0_i32 = arith.constant 0 : i32
    %c0_i32_0 = arith.constant 0 : i32
    %c0_i32_1 = arith.constant 0 : i32
    return %c0_i32, %c0_i32_0 : i32, i32
  }
  func.func @transform_5(%arg0: i32) -> (i32, i32, i32) {
    %c0_i32 = arith.constant 0 : i32
    %c0_i32_0 = arith.constant 0 : i32
    %c0_i32_1 = arith.constant 0 : i32
    %c0_i32_2 = arith.constant 0 : i32
    return %c0_i32, %c0_i32_0, %c0_i32_1 : i32, i32, i32
  }
  func.func @transform_6(%arg0: i32) -> (i32, i32, i32) {
    %c0_i32 = arith.constant 0 : i32
    %c0_i32_0 = arith.constant 0 : i32
    %c0_i32_1 = arith.constant 0 : i32
    %c0_i32_2 = arith.constant 0 : i32
    return %c0_i32, %c0_i32_0, %c0_i32_1 : i32, i32, i32
  }
  func.func @transform_7(%arg0: i32) -> (i32, i32) {
    %c0_i32 = arith.constant 0 : i32
    %c0_i32_0 = arith.constant 0 : i32
    return %arg0, %c0_i32 : i32, i32
  }
}

</mosaic_0001>

<llo_original>
// kernel: embedding_forward.1
$region0: #{embedding_forward.1}
  #allocation0 [shape = 'u32[]', space=smem, size = 0x4, offset = 0x4, fixed_abs, tag = 'smem constant byte address 0x4 - core index']
  #allocation1 [shape = 'u32[144,128]{1,0:T(1,128)}', space=vmem, size = 0x12000, scoped, tag = 'internal scratch']
  %s0 = inlined_call_operand.vmem [shape: f32[128,1024], index: 0, kind: input, shape index: {}]
  %s1 = inlined_call_operand.vmem [shape: f32[128,128], index: 1, kind: input, shape index: {}]
  %s2 = inlined_call_operand.vmem [shape: f32[320,128], index: 2, kind: input, shape index: {}]
  %s3 = inlined_call_operand.vmem [shape: f32[1,128], index: 3, kind: input, shape index: {}]
  %s4 = inlined_call_operand.vmem [shape: f32[256,128], index: 4, kind: input, shape index: {}]
  %s5 = inlined_call_operand.vmem [shape: f32[2,128,256], index: 5, kind: input, shape index: {}]
  %s6 = inlined_call_operand.vmem [shape: f32[2,1,256], index: 6, kind: input, shape index: {}]
  %s7 = inlined_call_operand.hbm [shape: f32[128,128], index: 7, kind: output, shape index: {}]
  %s8 = sld [smem:[#allocation0]]
  $region61: #{embedding_forward.1} parent=0
    _
  %s10 = ssub.s32 1, %s8
  %s11 = scalar_select 0, %s10, %s8
  $region1: #{embedding_forward.1} parent=0
    #allocation2 [shape = 'u8[65536]{0}', space=vmem, size = 0x10000, scoped, tag = 'output window, operand 0']
    #allocation3 [shape = 's32[2]{0}', space=sflag, size = 0x8, scoped, tag = 'scoped memory for embedding_forward.1']
    %12 = vsyncpa [#allocation3], 0
    %s13 = scalar_lea.sflag [#allocation3], 1
    %14 = vsyncpa %s13, 0
    loop: start=0, step=1, limit=4
    $region2: #{embedding_forward.1} parent=1 // loop_pre_header
      _
    $region3: #{embedding_forward.1} parent=1 // loop_header
      %s16 = sphi 0, %s20
      %p17 = scmp.ge.s32.totalorder %s16, 4
      %s26 = sphi 0, %s28
      %s29 = sphi 0, %s26
      %s30 = sphi 0, %s29
      %s46 = sphi 0, %s30
      %s52 = sphi 0, %s54
      %s55 = sphi 0, %s52
      %s56 = sphi 0, %s55
      %s72 = sphi 0, %s56
      %s76 = sphi 0, %s76
      %s78 = sphi 0, %s76
      %s79 = sphi 0, %s78
      %s93 = sphi 0, %s79
      %s97 = sphi 0, %s97
      %s99 = sphi 0, %s97
      %s100 = sphi 0, %s99
      %s114 = sphi 0, %s100
      %s118 = sphi 0, %s118
      %s120 = sphi 0, %s118
      %s121 = sphi 0, %s120
      %s135 = sphi 0, %s121
      %s139 = sphi 0, %s139
      %s141 = sphi 0, %s139
      %s142 = sphi 0, %s141
      %s156 = sphi 0, %s142
      %s160 = sphi 0, %s160
      %s162 = sphi 0, %s160
      %s163 = sphi 0, %s162
      %s177 = sphi 0, %s163
      %s183 = sphi 0, %s185
      %s186 = sphi 0, %s183
      %s187 = sphi 0, %s186
      %s203 = sphi 0, %s187
    $region4: #{embedding_forward.1} parent=1 // loop_header_branch
      %19 = sbr.rel (%p17) target = $region8
    $region5: #{embedding_forward.1} parent=1 // loop_body
      %s21 = ssub.s32 %s16, 1
      %s22 = ssub.s32 %s16, 2
      %s23 = sadd.s32 %s16, 1
      %s24 = ssub.s32 %s16, %s23
      %p25 = scmp.eq.s32.totalorder %s24, 0
      %s27 = sadd.s32 %s26, 1
      %s28 = scalar_select %p25, %s26, %s27
      %p31 = pneg %p25
      %p32 = scmp.eq.s32.totalorder %s16, 1
      %p33 = por %p31, %p32
      %p34 = scmp.ne.s32.totalorder %s26, %s29
      %p35 = scmp.eq.s32.totalorder %s16, 0
      %p36 = por %p34, %p35
      %p37 = scmp.ne.s32.totalorder %s26, %s29
      %p38 = scmp.eq.s32.totalorder %s21, 1
      %p39 = por %p37, %p38
      %p40 = scmp.ne.s32.totalorder %s29, %s30
      %p41 = scmp.eq.s32.totalorder %s21, 0
      %p42 = por %p40, %p41
      %p43 = scmp.ne.s32.totalorder %s29, %s30
      %p44 = scmp.eq.s32.totalorder %s22, 1
      %p45 = por %p43, %p44
      %p47 = scmp.ne.s32.totalorder %s30, %s46
      %p48 = scmp.eq.s32.totalorder %s22, 0
      %p49 = por %p47, %p48
      %s50 = ssub.s32 %s16, %s23
      %p51 = scmp.eq.s32.totalorder %s50, 0
      %s53 = sadd.s32 %s52, 1
      %s54 = scalar_select %p51, %s52, %s53
      %p57 = pneg %p51
      %p58 = scmp.eq.s32.totalorder %s16, 1
      %p59 = por %p57, %p58
      %p60 = scmp.ne.s32.totalorder %s52, %s55
      %p61 = scmp.eq.s32.totalorder %s16, 0
      %p62 = por %p60, %p61
      %p63 = scmp.ne.s32.totalorder %s52, %s55
      %p64 = scmp.eq.s32.totalorder %s21, 1
      %p65 = por %p63, %p64
      %p66 = scmp.ne.s32.totalorder %s55, %s56
      %p67 = scmp.eq.s32.totalorder %s21, 0
      %p68 = por %p66, %p67
      %p69 = scmp.ne.s32.totalorder %s55, %s56
      %p70 = scmp.eq.s32.totalorder %s22, 1
      %p71 = por %p69, %p70
      %p73 = scmp.ne.s32.totalorder %s56, %s72
      %p74 = scmp.eq.s32.totalorder %s22, 0
      %p75 = por %p73, %p74
      %s77 = sadd.s32 %s76, 1
      %p80 = scmp.eq.s32.totalorder %s16, 1
      %p81 = scmp.ne.s32.totalorder %s76, %s78
      %p82 = scmp.eq.s32.totalorder %s16, 0
      %p83 = por %p81, %p82
      %p84 = scmp.ne.s32.totalorder %s76, %s78
      %p85 = scmp.eq.s32.totalorder %s21, 1
      %p86 = por %p84, %p85
      %p87 = scmp.ne.s32.totalorder %s78, %s79
      %p88 = scmp.eq.s32.totalorder %s21, 0
      %p89 = por %p87, %p88
      %p90 = scmp.ne.s32.totalorder %s78, %s79
      %p91 = scmp.eq.s32.totalorder %s22, 1
      %p92 = por %p90, %p91
      %p94 = scmp.ne.s32.totalorder %s79, %s93
      %p95 = scmp.eq.s32.totalorder %s22, 0
      %p96 = por %p94, %p95
      %s98 = sadd.s32 %s97, 1
      %p101 = scmp.eq.s32.totalorder %s16, 1
      %p102 = scmp.ne.s32.totalorder %s97, %s99
      %p103 = scmp.eq.s32.totalorder %s16, 0
      %p104 = por %p102, %p103
      %p105 = scmp.ne.s32.totalorder %s97, %s99
      %p106 = scmp.eq.s32.totalorder %s21, 1
      %p107 = por %p105, %p106
      %p108 = scmp.ne.s32.totalorder %s99, %s100
      %p109 = scmp.eq.s32.totalorder %s21, 0
      %p110 = por %p108, %p109
      %p111 = scmp.ne.s32.totalorder %s99, %s100
      %p112 = scmp.eq.s32.totalorder %s22, 1
      %p113 = por %p111, %p112
      %p115 = scmp.ne.s32.totalorder %s100, %s114
      %p116 = scmp.eq.s32.totalorder %s22, 0
      %p117 = por %p115, %p116
      %s119 = sadd.s32 %s118, 1
      %p122 = scmp.eq.s32.totalorder %s16, 1
      %p123 = scmp.ne.s32.totalorder %s118, %s120
      %p124 = scmp.eq.s32.totalorder %s16, 0
      %p125 = por %p123, %p124
      %p126 = scmp.ne.s32.totalorder %s118, %s120
      %p127 = scmp.eq.s32.totalorder %s21, 1
      %p128 = por %p126, %p127
      %p129 = scmp.ne.s32.totalorder %s120, %s121
      %p130 = scmp.eq.s32.totalorder %s21, 0
      %p131 = por %p129, %p130
      %p132 = scmp.ne.s32.totalorder %s120, %s121
      %p133 = scmp.eq.s32.totalorder %s22, 1
      %p134 = por %p132, %p133
      %p136 = scmp.ne.s32.totalorder %s121, %s135
      %p137 = scmp.eq.s32.totalorder %s22, 0
      %p138 = por %p136, %p137
      %s140 = sadd.s32 %s139, 1
      %p143 = scmp.eq.s32.totalorder %s16, 1
      %p144 = scmp.ne.s32.totalorder %s139, %s141
      %p145 = scmp.eq.s32.totalorder %s16, 0
      %p146 = por %p144, %p145
      %p147 = scmp.ne.s32.totalorder %s139, %s141
      %p148 = scmp.eq.s32.totalorder %s21, 1
      %p149 = por %p147, %p148
      %p150 = scmp.ne.s32.totalorder %s141, %s142
      %p151 = scmp.eq.s32.totalorder %s21, 0
      %p152 = por %p150, %p151
      %p153 = scmp.ne.s32.totalorder %s141, %s142
      %p154 = scmp.eq.s32.totalorder %s22, 1
      %p155 = por %p153, %p154
      %p157 = scmp.ne.s32.totalorder %s142, %s156
      %p158 = scmp.eq.s32.totalorder %s22, 0
      %p159 = por %p157, %p158
      %s161 = sadd.s32 %s160, 1
      %p164 = scmp.eq.s32.totalorder %s16, 1
      %p165 = scmp.ne.s32.totalorder %s160, %s162
      %p166 = scmp.eq.s32.totalorder %s16, 0
      %p167 = por %p165, %p166
      %p168 = scmp.ne.s32.totalorder %s160, %s162
      %p169 = scmp.eq.s32.totalorder %s21, 1
      %p170 = por %p168, %p169
      %p171 = scmp.ne.s32.totalorder %s162, %s163
      %p172 = scmp.eq.s32.totalorder %s21, 0
      %p173 = por %p171, %p172
      %p174 = scmp.ne.s32.totalorder %s162, %s163
      %p175 = scmp.eq.s32.totalorder %s22, 1
      %p176 = por %p174, %p175
      %p178 = scmp.ne.s32.totalorder %s163, %s177
      %p179 = scmp.eq.s32.totalorder %s22, 0
      %p180 = por %p178, %p179
      %s181 = ssub.s32 %s16, %s23
      %p182 = scmp.eq.s32.totalorder %s181, 0
      %s184 = sadd.s32 %s183, 1
      %s185 = scalar_select %p182, %s183, %s184
      %p188 = pneg %p182
      %p189 = scmp.eq.s32.totalorder %s16, 1
      %p190 = por %p188, %p189
      %p191 = scmp.ne.s32.totalorder %s183, %s186
      %p192 = scmp.eq.s32.totalorder %s16, 0
      %p193 = por %p191, %p192
      %p194 = scmp.ne.s32.totalorder %s183, %s186
      %p195 = scmp.eq.s32.totalorder %s21, 1
      %p196 = por %p194, %p195
      %p197 = scmp.ne.s32.totalorder %s186, %s187
      %p198 = scmp.eq.s32.totalorder %s21, 0
      %p199 = por %p197, %p198
      %p200 = scmp.ne.s32.totalorder %s186, %s187
      %p201 = scmp.eq.s32.totalorder %s22, 1
      %p202 = por %p200, %p201
      %p204 = scmp.ne.s32.totalorder %s187, %s203
      %p205 = scmp.eq.s32.totalorder %s22, 0
      %p206 = por %p204, %p205
      %p207 = scmp.le.s32.totalorder 1, %s16
      %p208 = scmp.lt.s32.totalorder %s16, 3
      %p209 = pnand %p207, %p208
      %p210 = pneg %p209
      // Predicated region
      $region9: #{embedding_forward.1} parent=5 // pred_check
        _
      $region10: #{embedding_forward.1} parent=5 // pred_check_branch
        %212 = sbr.rel (%p209) target = $region12
      $region11: #{embedding_forward.1} parent=5 // pred_region
        %s213 = ssub.s32 %s16, 1
        // Predicated region
        $region13: #{embedding_forward.1} parent=11 // pred_check
          %p214 = pneg %p89
        $region14: #{embedding_forward.1} parent=11 // pred_check_branch
          %216 = sbr.rel (%p214) target = $region16
        $region15: #{embedding_forward.1} parent=11 // pred_region
          _
        $region16: #{embedding_forward.1} parent=11 // pred_fallthru
          _
        // Predicated region
        $region17: #{embedding_forward.1} parent=11 // pred_check
          %p217 = pneg %p110
        $region18: #{embedding_forward.1} parent=11 // pred_check_branch
          %219 = sbr.rel (%p217) target = $region20
        $region19: #{embedding_forward.1} parent=11 // pred_region
          _
        $region20: #{embedding_forward.1} parent=11 // pred_fallthru
          _
        // Predicated region
        $region21: #{embedding_forward.1} parent=11 // pred_check
          %p220 = pneg %p131
        $region22: #{embedding_forward.1} parent=11 // pred_check_branch
          %222 = sbr.rel (%p220) target = $region24
        $region23: #{embedding_forward.1} parent=11 // pred_region
          _
        $region24: #{embedding_forward.1} parent=11 // pred_fallthru
          _
        // Predicated region
        $region25: #{embedding_forward.1} parent=11 // pred_check
          %p223 = pneg %p152
        $region26: #{embedding_forward.1} parent=11 // pred_check_branch
          %225 = sbr.rel (%p223) target = $region28
        $region27: #{embedding_forward.1} parent=11 // pred_region
          _
        $region28: #{embedding_forward.1} parent=11 // pred_fallthru
          _
        // Predicated region
        $region29: #{embedding_forward.1} parent=11 // pred_check
          %p226 = pneg %p173
        $region30: #{embedding_forward.1} parent=11 // pred_check_branch
          %228 = sbr.rel (%p226) target = $region32
        $region31: #{embedding_forward.1} parent=11 // pred_region
          _
        $region32: #{embedding_forward.1} parent=11 // pred_fallthru
          _
      $region12: #{embedding_forward.1} parent=5 // pred_fallthru
        _
      %p229 = scmp.lt.s32.totalorder %s16, 2
      // Predicated region
      $region33: #{embedding_forward.1} parent=5 // pred_check
        %p230 = pneg %p229
      $region34: #{embedding_forward.1} parent=5 // pred_check_branch
        %232 = sbr.rel (%p230) target = $region36
      $region35: #{embedding_forward.1} parent=5 // pred_region
        // Predicated region
        $region37: #{embedding_forward.1} parent=35 // pred_check
          %p233 = pneg %p36
        $region38: #{embedding_forward.1} parent=35 // pred_check_branch
          %235 = sbr.rel (%p233) target = $region40
        $region39: #{embedding_forward.1} parent=35 // pred_region
          %s236 = smul.u32 8, %s16
          %p237 = scmp.lt.s32.totalorder %s236, 15
          %s238 = scalar_select %p237, %s236, 15
          %s239 = smul.addr %s238, 8
          %s240 = smul.addr %s239, 8
          %s241 = scalar_lea.vmem %s0, %s240
          %s242 = smul.u32 8, %s16
        $region40: #{embedding_forward.1} parent=35 // pred_fallthru
          _
        // Predicated region
        $region41: #{embedding_forward.1} parent=35 // pred_check
          %p243 = pneg %p62
        $region42: #{embedding_forward.1} parent=35 // pred_check_branch
          %245 = sbr.rel (%p243) target = $region44
        $region43: #{embedding_forward.1} parent=35 // pred_region
          %s246 = smul.u32 8, %s16
          %p247 = scmp.lt.s32.totalorder %s246, 15
          %s248 = scalar_select %p247, %s246, 15
          %s249 = smul.addr %s248, 8
          %s250 = scalar_lea.vmem %s1, %s249
          %s251 = smul.u32 8, %s16
        $region44: #{embedding_forward.1} parent=35 // pred_fallthru
          _
      $region36: #{embedding_forward.1} parent=5 // pred_fallthru
        _
      %p252 = scmp.le.s32.totalorder 1, %s16
      %p253 = scmp.lt.s32.totalorder %s16, 3
      %p254 = pnand %p252, %p253
      %p255 = pneg %p254
      // Predicated region
      $region45: #{embedding_forward.1} parent=5 // pred_check
        _
      $region46: #{embedding_forward.1} parent=5 // pred_check_branch
        %257 = sbr.rel (%p254) target = $region48
      $region47: #{embedding_forward.1} parent=5 // pred_region
        %s258 = ssub.s32 %s16, 1
        %s259 = smul.u32 8, %s21
        %p260 = scmp.lt.s32.totalorder %s259, 15
        %s261 = scalar_select %p260, %s259, 15
        %s262 = smul.addr %s261, 8
        %s263 = smul.addr %s262, 8
        %s264 = scalar_lea.vmem %s0, %s263
        %p265 = pneg %p42
        %p266 = pneg %p39
        %s267 = smul.u32 8, %s21
        %p268 = scmp.lt.s32.totalorder %s267, 15
        %s269 = scalar_select %p268, %s267, 15
        %s270 = smul.addr %s269, 8
        %s271 = scalar_lea.vmem %s1, %s270
        %p272 = pneg %p68
        %p273 = pneg %p65
        %p274 = pneg %p89
        %p275 = pneg %p86
        %p276 = pneg %p110
        %p277 = pneg %p107
        %p278 = pneg %p131
        %p279 = pneg %p128
        %p280 = pneg %p152
        %p281 = pneg %p149
        %p282 = pneg %p173
        %p283 = pneg %p170
        %p284 = pneg %p199
        %p285 = pneg %p196
        %s286 = sand.u32 %s186, 1
        %s287 = scalar_lea.sflag [#allocation3], %s286
        %s288 = sand.u32 %s186, 1
        %s289 = smul.addr %s288, 64
        %s290 = scalar_lea.vmem [#allocation2], %s289
        %s291 = smul.u32 8, %s21
        %p292 = scmp.lt.s32.totalorder %s291, 15
        %s293 = scalar_select %p292, %s291, 15
        %s294 = smul.addr %s293, 8
        %s295 = smul.addr %s294, 8
        %s296 = scalar_lea.vmem %s0, %s295
        %s297 = smul.u32 8, %s21
        %s298 = smul.u32 8, %s21
        %p299 = scmp.lt.s32.totalorder %s298, 15
        %s300 = scalar_select %p299, %s298, 15
        %s301 = smul.addr %s300, 8
        %s302 = scalar_lea.vmem %s1, %s301
        %s303 = smul.u32 8, %s21
        %s304 = smul.u32 8, %s21
        %v305 = vld [vmem:[%s296] sm:$0xff]
        %v306 = vld [vmem:[%s296 + $0x8] sm:$0xff]
        %v307 = vld [vmem:[%s296 + $0x10] sm:$0xff]
        %v308 = vld [vmem:[%s296 + $0x40] sm:$0xff]
        %v309 = vld [vmem:[%s296 + $0x48] sm:$0xff]
        %v310 = vld [vmem:[%s296 + $0x50] sm:$0xff]
        %v311 = vld [vmem:[%s296 + $0x80] sm:$0xff]
        %v312 = vld [vmem:[%s296 + $0x88] sm:$0xff]
        %v313 = vld [vmem:[%s296 + $0x90] sm:$0xff]
        %v314 = vld [vmem:[%s296 + $0xc0] sm:$0xff]
        %v315 = vld [vmem:[%s296 + $0xc8] sm:$0xff]
        %v316 = vld [vmem:[%s296 + $0xd0] sm:$0xff]
        %v317 = vld [vmem:[%s296 + $0x100] sm:$0xff]
        %v318 = vld [vmem:[%s296 + $0x108] sm:$0xff]
        %v319 = vld [vmem:[%s296 + $0x110] sm:$0xff]
        %v320 = vld [vmem:[%s296 + $0x140] sm:$0xff]
        %v321 = vld [vmem:[%s296 + $0x148] sm:$0xff]
        %v322 = vld [vmem:[%s296 + $0x150] sm:$0xff]
        %v323 = vld [vmem:[%s296 + $0x180] sm:$0xff]
        %v324 = vld [vmem:[%s296 + $0x188] sm:$0xff]
        %v325 = vld [vmem:[%s296 + $0x190] sm:$0xff]
        %v326 = vld [vmem:[%s296 + $0x1c0] sm:$0xff]
        %v327 = vld [vmem:[%s296 + $0x1c8] sm:$0xff]
        %v328 = vld [vmem:[%s296 + $0x1d0] sm:$0xff]
        %v329 = vld [vmem:[%s2] sm:$0xff]
        %v330 = vld [vmem:[%s2 + $0x8] sm:$0xff]
        %v331 = vld [vmem:[%s2 + $0x10] sm:$0xff]
        %v332 = vld [vmem:[%s2 + $0x18] sm:$0xff]
        %v333 = vld [vmem:[%s2 + $0x20] sm:$0xff]
        %v334 = vld [vmem:[%s2 + $0x28] sm:$0xff]
        %v335 = vld [vmem:[%s2 + $0x30] sm:$0xff]
        %v336 = vld [vmem:[%s2 + $0x38] sm:$0xff]
        %v337 = vld [vmem:[%s2 + $0x40] sm:$0xff]
        %v338 = vld [vmem:[%s2 + $0x48] sm:$0xff]
        %v339 = vld [vmem:[%s2 + $0x50] sm:$0xff]
        %v340 = vld [vmem:[%s2 + $0x58] sm:$0xff]
        %v341 = vld [vmem:[%s2 + $0x60] sm:$0xff]
        %v342 = vld [vmem:[%s2 + $0x68] sm:$0xff]
        %v343 = vld [vmem:[%s2 + $0x70] sm:$0xff]
        %v344 = vld [vmem:[%s2 + $0x78] sm:$0xff]
        %v345 = vld [vmem:[%s2 + $0x80] sm:$0xff]
        %v346 = vld [vmem:[%s2 + $0x88] sm:$0xff]
        %v347 = vld [vmem:[%s2 + $0x90] sm:$0xff]
        %v348 = vld [vmem:[%s2 + $0x98] sm:$0xff]
        %v349 = vld [vmem:[%s2 + $0xa0] sm:$0xff]
        %v350 = vld [vmem:[%s2 + $0xa8] sm:$0xff]
        %v351 = vld [vmem:[%s2 + $0xb0] sm:$0xff]
        %v352 = vld [vmem:[%s2 + $0xb8] sm:$0xff]
        %v353 = vld [vmem:[%s2 + $0xc0] sm:$0xff]
        %v354 = vld [vmem:[%s2 + $0xc8] sm:$0xff]
        %v355 = vld [vmem:[%s2 + $0xd0] sm:$0xff]
        %v356 = vld [vmem:[%s2 + $0xd8] sm:$0xff]
        %v357 = vld [vmem:[%s2 + $0xe0] sm:$0xff]
        %v358 = vld [vmem:[%s2 + $0xe8] sm:$0xff]
        %v359 = vld [vmem:[%s2 + $0xf0] sm:$0xff]
        %v360 = vld [vmem:[%s2 + $0xf8] sm:$0xff]
        %v361 = vld [vmem:[%s2 + $0x100] sm:$0xff]
        %v362 = vld [vmem:[%s2 + $0x108] sm:$0xff]
        %v363 = vld [vmem:[%s2 + $0x110] sm:$0xff]
        %v364 = vld [vmem:[%s2 + $0x118] sm:$0xff]
        %v365 = vld [vmem:[%s2 + $0x120] sm:$0xff]
        %v366 = vld [vmem:[%s2 + $0x128] sm:$0xff]
        %v367 = vld [vmem:[%s2 + $0x130] sm:$0xff]
        %v368 = vld [vmem:[%s2 + $0x138] sm:$0xff]
        %vm369 = vcmask 523264
        %v371 = vsel %vm369, %v307, 0
        %v374 = vsel %vm369, %v310, 0
        %v377 = vsel %vm369, %v313, 0
        %v380 = vsel %vm369, %v316, 0
        %v383 = vsel %vm369, %v319, 0
        %v386 = vsel %vm369, %v322, 0
        %v389 = vsel %vm369, %v325, 0
        %v392 = vsel %vm369, %v328, 0
        %394 = vmatprep.subr.mxu0 0.0
        %395 = vmatpush1.msra.mxu0 %v329
        %396 = vmatprep.subr.mxu0 0.0
        %397 = vmatpush1.msra.mxu0 %v330
        %398 = vmatprep.subr.mxu0 0.0
        %399 = vmatpush1.msra.mxu0 %v331
        %400 = vmatprep.subr.mxu0 0.0
        %401 = vmatpush1.msra.mxu0 %v332
        %402 = vmatprep.subr.mxu0 0.0
        %403 = vmatpush1.msra.mxu0 %v333
        %404 = vmatprep.subr.mxu0 0.0
        %405 = vmatpush1.msra.mxu0 %v334
        %406 = vmatprep.subr.mxu0 0.0
        %407 = vmatpush1.msra.mxu0 %v335
        %408 = vmatprep.subr.mxu0 0.0
        %409 = vmatpush1.msra.mxu0 %v336
        %410 = vmatprep.subr.mxu0 0.0
        %411 = vmatpush1.msra.mxu0 %v337
        %412 = vmatprep.subr.mxu0 0.0
        %413 = vmatpush1.msra.mxu0 %v338
        %414 = vmatprep.subr.mxu0 0.0
        %415 = vmatpush1.msra.mxu0 %v339
        %416 = vmatprep.subr.mxu0 0.0
        %417 = vmatpush1.msra.mxu0 %v340
        %418 = vmatprep.subr.mxu0 0.0
        %419 = vmatpush1.msra.mxu0 %v341
        %420 = vmatprep.subr.mxu0 0.0
        %421 = vmatpush1.msra.mxu0 %v342
        %422 = vmatprep.subr.mxu0 0.0
        %423 = vmatpush1.msra.mxu0 %v343
        %424 = vmatprep.subr.mxu0 0.0
        %425 = vmatpush1.msra.mxu0 %v344
        %426 = vmatprep.subr.mxu0 0.0
        %427 = vmatpush1.msra.mxu0 %v345
        %428 = vmatprep.subr.mxu0 0.0
        %429 = vmatpush1.msra.mxu0 %v346
        %430 = vmatprep.subr.mxu0 0.0
        %431 = vmatpush1.msra.mxu0 %v347
        %432 = vmatprep.subr.mxu0 0.0
        %433 = vmatpush1.msra.mxu0 %v348
        %434 = vmatprep.subr.mxu0 0.0
        %435 = vmatpush1.msra.mxu0 %v349
        %436 = vmatprep.subr.mxu0 0.0
        %437 = vmatpush1.msra.mxu0 %v350
        %438 = vmatprep.subr.mxu0 0.0
        %439 = vmatpush1.msra.mxu0 %v351
        %440 = vmatprep.subr.mxu0 0.0
        %441 = vmatpush1.msra.mxu0 %v352
        %442 = vmatprep.subr.mxu0 0.0
        %443 = vmatpush1.msra.mxu0 %v353
        %444 = vmatprep.subr.mxu0 0.0
        %445 = vmatpush1.msra.mxu0 %v354
        %446 = vmatprep.subr.mxu0 0.0
        %447 = vmatpush1.msra.mxu0 %v355
        %448 = vmatprep.subr.mxu0 0.0
        %449 = vmatpush1.msra.mxu0 %v356
        %450 = vmatprep.subr.mxu0 0.0
        %451 = vmatpush1.msra.mxu0 %v357
        %452 = vmatprep.subr.mxu0 0.0
        %453 = vmatpush1.msra.mxu0 %v358
        %454 = vmatprep.subr.mxu0 0.0
        %455 = vmatpush1.msra.mxu0 %v359
        %456 = vmatprep.subr.mxu0 0.0
        %457 = vmatpush1.msra.mxu0 %v360
        %458 = vmatprep.mubr.f32.mxu0 %v306
        %459 = vmatmul.mubr.f32.gmra.mrb[0].mxu0 %v305
        %v460 = vpop.f32.mrb[0].mxu0
        %v461 = vadd.f32 0.0, %v460
        %v462 = vpop.f32.mrb[0].mxu0
        %463 = vmatprep.mubr.f32.mxu0 %v309
        %464 = vmatmul.mubr.f32.gmra.mrb[0].mxu0 %v308
        %v465 = vpop.f32.mrb[0].mxu0
        %v466 = vadd.f32 0.0, %v465
        %v467 = vpop.f32.mrb[0].mxu0
        %468 = vmatprep.mubr.f32.mxu0 %v312
        %469 = vmatmul.mubr.f32.gmra.mrb[0].mxu0 %v311
        %v470 = vpop.f32.mrb[0].mxu0
        %v471 = vadd.f32 0.0, %v470
        %v472 = vpop.f32.mrb[0].mxu0
        %473 = vmatprep.mubr.f32.mxu0 %v315
        %474 = vmatmul.mubr.f32.gmra.mrb[0].mxu0 %v314
        %v475 = vpop.f32.mrb[0].mxu0
        %v476 = vadd.f32 0.0, %v475
        %v477 = vpop.f32.mrb[0].mxu0
        %478 = vmatprep.mubr.f32.mxu0 %v318
        %479 = vmatmul.mubr.f32.gmra.mrb[0].mxu0 %v317
        %v480 = vpop.f32.mrb[0].mxu0
        %v481 = vadd.f32 0.0, %v480
        %v482 = vpop.f32.mrb[0].mxu0
        %483 = vmatprep.mubr.f32.mxu0 %v321
        %484 = vmatmul.mubr.f32.gmra.mrb[0].mxu0 %v320
        %v485 = vpop.f32.mrb[0].mxu0
        %v486 = vadd.f32 0.0, %v485
        %v487 = vpop.f32.mrb[0].mxu0
        %488 = vmatprep.mubr.f32.mxu0 %v324
        %489 = vmatmul.mubr.f32.gmra.mrb[0].mxu0 %v323
        %v490 = vpop.f32.mrb[0].mxu0
        %v491 = vadd.f32 0.0, %v490
        %v492 = vpop.f32.mrb[0].mxu0
        %493 = vmatprep.mubr.f32.mxu0 %v327
        %494 = vmatmul.mubr.f32.gmra.mrb[0].mxu0 %v326
        %v495 = vpop.f32.mrb[0].mxu0
        %v496 = vadd.f32 0.0, %v495
        %v497 = vpop.f32.mrb[0].mxu0
        %498 = vdwg.mxu0
        %499 = vmatprep.subr.mxu0 0.0
        %500 = vmatpush1.msra.mxu0 %v361
        %501 = vmatprep.subr.mxu0 0.0
        %502 = vmatpush1.msra.mxu0 %v362
        %503 = vmatprep.subr.mxu0 0.0
        %504 = vmatpush1.msra.mxu0 %v363
        %505 = vmatprep.subr.mxu0 0.0
        %506 = vmatpush1.msra.mxu0 %v364
        %507 = vmatprep.subr.mxu0 0.0
        %508 = vmatpush1.msra.mxu0 %v365
        %509 = vmatprep.subr.mxu0 0.0
        %510 = vmatpush1.msra.mxu0 %v366
        %511 = vmatprep.subr.mxu0 0.0
        %512 = vmatpush1.msra.mxu0 %v367
        %513 = vmatprep.subr.mxu0 0.0
        %514 = vmatpush1.msra.mxu0 %v368
        %515 = vmatprep.subr.mxu0 0.0
        %516 = vmatpush1.msra.mxu0 0.0
        %517 = vmatprep.subr.mxu0 0.0
        %518 = vmatpush1.msra.mxu0 0.0
        %519 = vmatprep.subr.mxu0 0.0
        %520 = vmatpush1.msra.mxu0 0.0
        %521 = vmatprep.subr.mxu0 0.0
        %522 = vmatpush1.msra.mxu0 0.0
        %523 = vmatprep.subr.mxu0 0.0
        %524 = vmatpush1.msra.mxu0 0.0
        %525 = vmatprep.subr.mxu0 0.0
        %526 = vmatpush1.msra.mxu0 0.0
        %527 = vmatprep.subr.mxu0 0.0
        %528 = vmatpush1.msra.mxu0 0.0
        %529 = vmatprep.subr.mxu0 0.0
        %530 = vmatpush1.msra.mxu0 0.0
        %531 = vmatprep.subr.mxu0 0.0
        %532 = vmatpush1.msra.mxu0 0.0
        %533 = vmatprep.subr.mxu0 0.0
        %534 = vmatpush1.msra.mxu0 0.0
        %535 = vmatprep.subr.mxu0 0.0
        %536 = vmatpush1.msra.mxu0 0.0
        %537 = vmatprep.subr.mxu0 0.0
        %538 = vmatpush1.msra.mxu0 0.0
        %539 = vmatprep.subr.mxu0 0.0
        %540 = vmatpush1.msra.mxu0 0.0
        %541 = vmatprep.subr.mxu0 0.0
        %542 = vmatpush1.msra.mxu0 0.0
        %543 = vmatprep.subr.mxu0 0.0
        %544 = vmatpush1.msra.mxu0 0.0
        %545 = vmatprep.subr.mxu0 0.0
        %546 = vmatpush1.msra.mxu0 0.0
        %547 = vmatprep.subr.mxu0 0.0
        %548 = vmatpush1.msra.mxu0 0.0
        %549 = vmatprep.subr.mxu0 0.0
        %550 = vmatpush1.msra.mxu0 0.0
        %551 = vmatprep.subr.mxu0 0.0
        %552 = vmatpush1.msra.mxu0 0.0
        %553 = vmatprep.subr.mxu0 0.0
        %554 = vmatpush1.msra.mxu0 0.0
        %555 = vmatprep.subr.mxu0 0.0
        %556 = vmatpush1.msra.mxu0 0.0
        %557 = vmatprep.subr.mxu0 0.0
        %558 = vmatpush1.msra.mxu0 0.0
        %559 = vmatprep.subr.mxu0 0.0
        %560 = vmatpush1.msra.mxu0 0.0
        %561 = vmatprep.subr.mxu0 0.0
        %562 = vmatpush1.msra.mxu0 0.0
        %563 = vmatprep.mubr.f32.mxu0 0.0
        %564 = vmatmul.mubr.f32.gmra.mrb[0].mxu0 %v371
        %v565 = vpop.f32.mrb[0].mxu0
        %v566 = vadd.f32 %v461, %v565
        %v567 = vpop.f32.mrb[0].mxu0
        %568 = vmatprep.mubr.f32.mxu0 0.0
        %569 = vmatmul.mubr.f32.gmra.mrb[0].mxu0 %v374
        %v570 = vpop.f32.mrb[0].mxu0
        %v571 = vadd.f32 %v466, %v570
        %v572 = vpop.f32.mrb[0].mxu0
        %573 = vmatprep.mubr.f32.mxu0 0.0
        %574 = vmatmul.mubr.f32.gmra.mrb[0].mxu0 %v377
        %v575 = vpop.f32.mrb[0].mxu0
        %v576 = vadd.f32 %v471, %v575
        %v577 = vpop.f32.mrb[0].mxu0
        %578 = vmatprep.mubr.f32.mxu0 0.0
        %579 = vmatmul.mubr.f32.gmra.mrb[0].mxu0 %v380
        %v580 = vpop.f32.mrb[0].mxu0
        %v581 = vadd.f32 %v476, %v580
        %v582 = vpop.f32.mrb[0].mxu0
        %583 = vmatprep.mubr.f32.mxu0 0.0
        %584 = vmatmul.mubr.f32.gmra.mrb[0].mxu0 %v383
        %v585 = vpop.f32.mrb[0].mxu0
        %v586 = vadd.f32 %v481, %v585
        %v587 = vpop.f32.mrb[0].mxu0
        %588 = vmatprep.mubr.f32.mxu0 0.0
        %589 = vmatmul.mubr.f32.gmra.mrb[0].mxu0 %v386
        %v590 = vpop.f32.mrb[0].mxu0
        %v591 = vadd.f32 %v486, %v590
        %v592 = vpop.f32.mrb[0].mxu0
        %593 = vmatprep.mubr.f32.mxu0 0.0
        %594 = vmatmul.mubr.f32.gmra.mrb[0].mxu0 %v389
        %v595 = vpop.f32.mrb[0].mxu0
        %v596 = vadd.f32 %v491, %v595
        %v597 = vpop.f32.mrb[0].mxu0
        %598 = vmatprep.mubr.f32.mxu0 0.0
        %599 = vmatmul.mubr.f32.gmra.mrb[0].mxu0 %v392
        %v600 = vpop.f32.mrb[0].mxu0
        %v601 = vadd.f32 %v496, %v600
        %v602 = vpop.f32.mrb[0].mxu0
        %603 = vdwg.mxu0
        %620 = vrot.lane.b32.xlu0 %v305, 64
        %v621 = vpop.permute.xlu0 %620
        %622 = vrot.lane.b32.xlu0 %v306, 64
        %v623 = vpop.permute.xlu0 %622
        %624 = vrot.lane.b32.xlu0 %v307, 64
        %v625 = vpop.permute.xlu0 %624
        %626 = vrot.lane.b32.xlu0 %v308, 64
        %v627 = vpop.permute.xlu0 %626
        %628 = vrot.lane.b32.xlu0 %v309, 64
        %v629 = vpop.permute.xlu0 %628
        %630 = vrot.lane.b32.xlu0 %v310, 64
        %v631 = vpop.permute.xlu0 %630
        %632 = vrot.lane.b32.xlu0 %v311, 64
        %v633 = vpop.permute.xlu0 %632
        %634 = vrot.lane.b32.xlu0 %v312, 64
        %v635 = vpop.permute.xlu0 %634
        %636 = vrot.lane.b32.xlu0 %v313, 64
        %v637 = vpop.permute.xlu0 %636
        %638 = vrot.lane.b32.xlu0 %v314, 64
        %v639 = vpop.permute.xlu0 %638
        %640 = vrot.lane.b32.xlu0 %v315, 64
        %v641 = vpop.permute.xlu0 %640
        %642 = vrot.lane.b32.xlu0 %v316, 64
        %v643 = vpop.permute.xlu0 %642
        %644 = vrot.lane.b32.xlu0 %v317, 64
        %v645 = vpop.permute.xlu0 %644
        %646 = vrot.lane.b32.xlu0 %v318, 64
        %v647 = vpop.permute.xlu0 %646
        %648 = vrot.lane.b32.xlu0 %v319, 64
        %v649 = vpop.permute.xlu0 %648
        %650 = vrot.lane.b32.xlu0 %v320, 64
        %v651 = vpop.permute.xlu0 %650
        %652 = vrot.lane.b32.xlu0 %v321, 64
        %v653 = vpop.permute.xlu0 %652
        %654 = vrot.lane.b32.xlu0 %v322, 64
        %v655 = vpop.permute.xlu0 %654
        %656 = vrot.lane.b32.xlu0 %v323, 64
        %v657 = vpop.permute.xlu0 %656
        %658 = vrot.lane.b32.xlu0 %v324, 64
        %v659 = vpop.permute.xlu0 %658
        %660 = vrot.lane.b32.xlu0 %v325, 64
        %v661 = vpop.permute.xlu0 %660
        %662 = vrot.lane.b32.xlu0 %v326, 64
        %v663 = vpop.permute.xlu0 %662
        %664 = vrot.lane.b32.xlu0 %v327, 64
        %v665 = vpop.permute.xlu0 %664
        %666 = vrot.lane.b32.xlu0 %v328, 64
        %v667 = vpop.permute.xlu0 %666
        %v668 = vsel %vm369, %v621, %v623
        %v669 = vsel %vm369, %v623, %v625
        %v670 = vsel %vm369, %v627, %v629
        %v671 = vsel %vm369, %v629, %v631
        %v672 = vsel %vm369, %v633, %v635
        %v673 = vsel %vm369, %v635, %v637
        %v674 = vsel %vm369, %v639, %v641
        %v675 = vsel %vm369, %v641, %v643
        %v676 = vsel %vm369, %v645, %v647
        %v677 = vsel %vm369, %v647, %v649
        %v678 = vsel %vm369, %v651, %v653
        %v679 = vsel %vm369, %v653, %v655
        %v680 = vsel %vm369, %v657, %v659
        %v681 = vsel %vm369, %v659, %v661
        %v682 = vsel %vm369, %v663, %v665
        %v683 = vsel %vm369, %v665, %v667
        %v700 = vsel %vm369, %v625, 0
        %v702 = vsel %vm369, %v631, 0
        %v704 = vsel %vm369, %v637, 0
        %v706 = vsel %vm369, %v643, 0
        %v708 = vsel %vm369, %v649, 0
        %v710 = vsel %vm369, %v655, 0
        %v712 = vsel %vm369, %v661, 0
        %v714 = vsel %vm369, %v667, 0
        %716 = vmatprep.subr.mxu0 0.0
        %717 = vmatpush1.msra.mxu0 %v329
        %718 = vmatprep.subr.mxu0 0.0
        %719 = vmatpush1.msra.mxu0 %v330
        %720 = vmatprep.subr.mxu0 0.0
        %721 = vmatpush1.msra.mxu0 %v331
        %722 = vmatprep.subr.mxu0 0.0
        %723 = vmatpush1.msra.mxu0 %v332
        %724 = vmatprep.subr.mxu0 0.0
        %725 = vmatpush1.msra.mxu0 %v333
        %726 = vmatprep.subr.mxu0 0.0
        %727 = vmatpush1.msra.mxu0 %v334
        %728 = vmatprep.subr.mxu0 0.0
        %729 = vmatpush1.msra.mxu0 %v335
        %730 = vmatprep.subr.mxu0 0.0
        %731 = vmatpush1.msra.mxu0 %v336
        %732 = vmatprep.subr.mxu0 0.0
        %733 = vmatpush1.msra.mxu0 %v337
        %734 = vmatprep.subr.mxu0 0.0
        %735 = vmatpush1.msra.mxu0 %v338
        %736 = vmatprep.subr.mxu0 0.0
        %737 = vmatpush1.msra.mxu0 %v339
        %738 = vmatprep.subr.mxu0 0.0
        %739 = vmatpush1.msra.mxu0 %v340
        %740 = vmatprep.subr.mxu0 0.0
        %741 = vmatpush1.msra.mxu0 %v341
        %742 = vmatprep.subr.mxu0 0.0
        %743 = vmatpush1.msra.mxu0 %v342
        %744 = vmatprep.subr.mxu0 0.0
        %745 = vmatpush1.msra.mxu0 %v343
        %746 = vmatprep.subr.mxu0 0.0
        %747 = vmatpush1.msra.mxu0 %v344
        %748 = vmatprep.subr.mxu0 0.0
        %749 = vmatpush1.msra.mxu0 %v345
        %750 = vmatprep.subr.mxu0 0.0
        %751 = vmatpush1.msra.mxu0 %v346
        %752 = vmatprep.subr.mxu0 0.0
        %753 = vmatpush1.msra.mxu0 %v347
        %754 = vmatprep.subr.mxu0 0.0
        %755 = vmatpush1.msra.mxu0 %v348
        %756 = vmatprep.subr.mxu0 0.0
        %757 = vmatpush1.msra.mxu0 %v349
        %758 = vmatprep.subr.mxu0 0.0
        %759 = vmatpush1.msra.mxu0 %v350
        %760 = vmatprep.subr.mxu0 0.0
        %761 = vmatpush1.msra.mxu0 %v351
        %762 = vmatprep.subr.mxu0 0.0
        %763 = vmatpush1.msra.mxu0 %v352
        %764 = vmatprep.subr.mxu0 0.0
        %765 = vmatpush1.msra.mxu0 %v353
        %766 = vmatprep.subr.mxu0 0.0
        %767 = vmatpush1.msra.mxu0 %v354
        %768 = vmatprep.subr.mxu0 0.0
        %769 = vmatpush1.msra.mxu0 %v355
        %770 = vmatprep.subr.mxu0 0.0
        %771 = vmatpush1.msra.mxu0 %v356
        %772 = vmatprep.subr.mxu0 0.0
        %773 = vmatpush1.msra.mxu0 %v357
        %774 = vmatprep.subr.mxu0 0.0
        %775 = vmatpush1.msra.mxu0 %v358
        %776 = vmatprep.subr.mxu0 0.0
        %777 = vmatpush1.msra.mxu0 %v359
        %778 = vmatprep.subr.mxu0 0.0
        %779 = vmatpush1.msra.mxu0 %v360
        %780 = vmatprep.mubr.f32.mxu0 %v669
        %781 = vmatmul.mubr.f32.gmra.mrb[0].mxu0 %v668
        %v782 = vpop.f32.mrb[0].mxu0
        %v783 = vadd.f32 0.0, %v782
        %v784 = vpop.f32.mrb[0].mxu0
        %785 = vmatprep.mubr.f32.mxu0 %v671
        %786 = vmatmul.mubr.f32.gmra.mrb[0].mxu0 %v670
        %v787 = vpop.f32.mrb[0].mxu0
        %v788 = vadd.f32 0.0, %v787
        %v789 = vpop.f32.mrb[0].mxu0
        %790 = vmatprep.mubr.f32.mxu0 %v673
        %791 = vmatmul.mubr.f32.gmra.mrb[0].mxu0 %v672
        %v792 = vpop.f32.mrb[0].mxu0
        %v793 = vadd.f32 0.0, %v792
        %v794 = vpop.f32.mrb[0].mxu0
        %795 = vmatprep.mubr.f32.mxu0 %v675
        %796 = vmatmul.mubr.f32.gmra.mrb[0].mxu0 %v674
        %v797 = vpop.f32.mrb[0].mxu0
        %v798 = vadd.f32 0.0, %v797
        %v799 = vpop.f32.mrb[0].mxu0
        %800 = vmatprep.mubr.f32.mxu0 %v677
        %801 = vmatmul.mubr.f32.gmra.mrb[0].mxu0 %v676
        %v802 = vpop.f32.mrb[0].mxu0
        %v803 = vadd.f32 0.0, %v802
        %v804 = vpop.f32.mrb[0].mxu0
        %805 = vmatprep.mubr.f32.mxu0 %v679
        %806 = vmatmul.mubr.f32.gmra.mrb[0].mxu0 %v678
        %v807 = vpop.f32.mrb[0].mxu0
        %v808 = vadd.f32 0.0, %v807
        %v809 = vpop.f32.mrb[0].mxu0
        %810 = vmatprep.mubr.f32.mxu0 %v681
        %811 = vmatmul.mubr.f32.gmra.mrb[0].mxu0 %v680
        %v812 = vpop.f32.mrb[0].mxu0
        %v813 = vadd.f32 0.0, %v812
        %v814 = vpop.f32.mrb[0].mxu0
        %815 = vmatprep.mubr.f32.mxu0 %v683
        %816 = vmatmul.mubr.f32.gmra.mrb[0].mxu0 %v682
        %v817 = vpop.f32.mrb[0].mxu0
        %v818 = vadd.f32 0.0, %v817
        %v819 = vpop.f32.mrb[0].mxu0
        %820 = vdwg.mxu0
        %821 = vmatprep.subr.mxu0 0.0
        %822 = vmatpush1.msra.mxu0 %v361
        %823 = vmatprep.subr.mxu0 0.0
        %824 = vmatpush1.msra.mxu0 %v362
        %825 = vmatprep.subr.mxu0 0.0
        %826 = vmatpush1.msra.mxu0 %v363
        %827 = vmatprep.subr.mxu0 0.0
        %828 = vmatpush1.msra.mxu0 %v364
        %829 = vmatprep.subr.mxu0 0.0
        %830 = vmatpush1.msra.mxu0 %v365
        %831 = vmatprep.subr.mxu0 0.0
        %832 = vmatpush1.msra.mxu0 %v366
        %833 = vmatprep.subr.mxu0 0.0
        %834 = vmatpush1.msra.mxu0 %v367
        %835 = vmatprep.subr.mxu0 0.0
        %836 = vmatpush1.msra.mxu0 %v368
        %837 = vmatprep.subr.mxu0 0.0
        %838 = vmatpush1.msra.mxu0 0.0
        %839 = vmatprep.subr.mxu0 0.0
        %840 = vmatpush1.msra.mxu0 0.0
        %841 = vmatprep.subr.mxu0 0.0
        %842 = vmatpush1.msra.mxu0 0.0
        %843 = vmatprep.subr.mxu0 0.0
        %844 = vmatpush1.msra.mxu0 0.0
        %845 = vmatprep.subr.mxu0 0.0
        %846 = vmatpush1.msra.mxu0 0.0
        %847 = vmatprep.subr.mxu0 0.0
        %848 = vmatpush1.msra.mxu0 0.0
        %849 = vmatprep.subr.mxu0 0.0
        %850 = vmatpush1.msra.mxu0 0.0
        %851 = vmatprep.subr.mxu0 0.0
        %852 = vmatpush1.msra.mxu0 0.0
        %853 = vmatprep.subr.mxu0 0.0
        %854 = vmatpush1.msra.mxu0 0.0
        %855 = vmatprep.subr.mxu0 0.0
        %856 = vmatpush1.msra.mxu0 0.0
        %857 = vmatprep.subr.mxu0 0.0
        %858 = vmatpush1.msra.mxu0 0.0
        %859 = vmatprep.subr.mxu0 0.0
        %860 = vmatpush1.msra.mxu0 0.0
        %861 = vmatprep.subr.mxu0 0.0
        %862 = vmatpush1.msra.mxu0 0.0
        %863 = vmatprep.subr.mxu0 0.0
        %864 = vmatpush1.msra.mxu0 0.0
        %865 = vmatprep.subr.mxu0 0.0
        %866 = vmatpush1.msra.mxu0 0.0
        %867 = vmatprep.subr.mxu0 0.0
        %868 = vmatpush1.msra.mxu0 0.0
        %869 = vmatprep.subr.mxu0 0.0
        %870 = vmatpush1.msra.mxu0 0.0
        %871 = vmatprep.subr.mxu0 0.0
        %872 = vmatpush1.msra.mxu0 0.0
        %873 = vmatprep.subr.mxu0 0.0
        %874 = vmatpush1.msra.mxu0 0.0
        %875 = vmatprep.subr.mxu0 0.0
        %876 = vmatpush1.msra.mxu0 0.0
        %877 = vmatprep.subr.mxu0 0.0
        %878 = vmatpush1.msra.mxu0 0.0
        %879 = vmatprep.subr.mxu0 0.0
        %880 = vmatpush1.msra.mxu0 0.0
        %881 = vmatprep.subr.mxu0 0.0
        %882 = vmatpush1.msra.mxu0 0.0
        %883 = vmatprep.subr.mxu0 0.0
        %884 = vmatpush1.msra.mxu0 0.0
        %885 = vmatprep.mubr.f32.mxu0 0.0
        %886 = vmatmul.mubr.f32.gmra.mrb[0].mxu0 %v700
        %v887 = vpop.f32.mrb[0].mxu0
        %v888 = vadd.f32 %v783, %v887
        %v889 = vpop.f32.mrb[0].mxu0
        %890 = vmatprep.mubr.f32.mxu0 0.0
        %891 = vmatmul.mubr.f32.gmra.mrb[0].mxu0 %v702
        %v892 = vpop.f32.mrb[0].mxu0
        %v893 = vadd.f32 %v788, %v892
        %v894 = vpop.f32.mrb[0].mxu0
        %895 = vmatprep.mubr.f32.mxu0 0.0
        %896 = vmatmul.mubr.f32.gmra.mrb[0].mxu0 %v704
        %v897 = vpop.f32.mrb[0].mxu0
        %v898 = vadd.f32 %v793, %v897
        %v899 = vpop.f32.mrb[0].mxu0
        %900 = vmatprep.mubr.f32.mxu0 0.0
        %901 = vmatmul.mubr.f32.gmra.mrb[0].mxu0 %v706
        %v902 = vpop.f32.mrb[0].mxu0
        %v903 = vadd.f32 %v798, %v902
        %v904 = vpop.f32.mrb[0].mxu0
        %905 = vmatprep.mubr.f32.mxu0 0.0
        %906 = vmatmul.mubr.f32.gmra.mrb[0].mxu0 %v708
        %v907 = vpop.f32.mrb[0].mxu0
        %v908 = vadd.f32 %v803, %v907
        %v909 = vpop.f32.mrb[0].mxu0
        %910 = vmatprep.mubr.f32.mxu0 0.0
        %911 = vmatmul.mubr.f32.gmra.mrb[0].mxu0 %v710
        %v912 = vpop.f32.mrb[0].mxu0
        %v913 = vadd.f32 %v808, %v912
        %v914 = vpop.f32.mrb[0].mxu0
        %915 = vmatprep.mubr.f32.mxu0 0.0
        %916 = vmatmul.mubr.f32.gmra.mrb[0].mxu0 %v712
        %v917 = vpop.f32.mrb[0].mxu0
        %v918 = vadd.f32 %v813, %v917
        %v919 = vpop.f32.mrb[0].mxu0
        %920 = vmatprep.mubr.f32.mxu0 0.0
        %921 = vmatmul.mubr.f32.gmra.mrb[0].mxu0 %v714
        %v922 = vpop.f32.mrb[0].mxu0
        %v923 = vadd.f32 %v818, %v922
        %v924 = vpop.f32.mrb[0].mxu0
        %925 = vdwg.mxu0
        %v926 = vmax.f32 %v566, %v888
        %v927 = vmax.f32 %v571, %v893
        %v928 = vmax.f32 %v576, %v898
        %v929 = vmax.f32 %v581, %v903
        %v930 = vmax.f32 %v586, %v908
        %v931 = vmax.f32 %v591, %v913
        %v932 = vmax.f32 %v596, %v918
        %v933 = vmax.f32 %v601, %v923
        %v934 = vld [vmem:[%s296 + $0x8] sm:$0xff]
        %v935 = vld [vmem:[%s296 + $0x10] sm:$0xff]
        %v936 = vld [vmem:[%s296 + $0x18] sm:$0xff]
        %v937 = vld [vmem:[%s296 + $0x48] sm:$0xff]
        %v938 = vld [vmem:[%s296 + $0x50] sm:$0xff]
        %v939 = vld [vmem:[%s296 + $0x58] sm:$0xff]
        %v940 = vld [vmem:[%s296 + $0x88] sm:$0xff]
        %v941 = vld [vmem:[%s296 + $0x90] sm:$0xff]
        %v942 = vld [vmem:[%s296 + $0x98] sm:$0xff]
        %v943 = vld [vmem:[%s296 + $0xc8] sm:$0xff]
        %v944 = vld [vmem:[%s296 + $0xd0] sm:$0xff]
        %v945 = vld [vmem:[%s296 + $0xd8] sm:$0xff]
        %v946 = vld [vmem:[%s296 + $0x108] sm:$0xff]
        %v947 = vld [vmem:[%s296 + $0x110] sm:$0xff]
        %v948 = vld [vmem:[%s296 + $0x118] sm:$0xff]
        %v949 = vld [vmem:[%s296 + $0x148] sm:$0xff]
        %v950 = vld [vmem:[%s296 + $0x150] sm:$0xff]
        %v951 = vld [vmem:[%s296 + $0x158] sm:$0xff]
        %v952 = vld [vmem:[%s296 + $0x188] sm:$0xff]
        %v953 = vld [vmem:[%s296 + $0x190] sm:$0xff]
        %v954 = vld [vmem:[%s296 + $0x198] sm:$0xff]
        %v955 = vld [vmem:[%s296 + $0x1c8] sm:$0xff]
        %v956 = vld [vmem:[%s296 + $0x1d0] sm:$0xff]
        %v957 = vld [vmem:[%s296 + $0x1d8] sm:$0xff]
        %v959 = vsel %vm369, %v936, 0
        %v962 = vsel %vm369, %v939, 0
        %v965 = vsel %vm369, %v942, 0
        %v968 = vsel %vm369, %v945, 0
        %v971 = vsel %vm369, %v948, 0
        %v974 = vsel %vm369, %v951, 0
        %v977 = vsel %vm369, %v954, 0
        %v980 = vsel %vm369, %v957, 0
        %982 = vmatprep.subr.mxu0 0.0
        %983 = vmatpush1.msra.mxu0 %v329
        %984 = vmatprep.subr.mxu0 0.0
        %985 = vmatpush1.msra.mxu0 %v330
        %986 = vmatprep.subr.mxu0 0.0
        %987 = vmatpush1.msra.mxu0 %v331
        %988 = vmatprep.subr.mxu0 0.0
        %989 = vmatpush1.msra.mxu0 %v332
        %990 = vmatprep.subr.mxu0 0.0
        %991 = vmatpush1.msra.mxu0 %v333
        %992 = vmatprep.subr.mxu0 0.0
        %993 = vmatpush1.msra.mxu0 %v334
        %994 = vmatprep.subr.mxu0 0.0
        %995 = vmatpush1.msra.mxu0 %v335
        %996 = vmatprep.subr.mxu0 0.0
        %997 = vmatpush1.msra.mxu0 %v336
        %998 = vmatprep.subr.mxu0 0.0
        %999 = vmatpush1.msra.mxu0 %v337
        %1000 = vmatprep.subr.mxu0 0.0
        %1001 = vmatpush1.msra.mxu0 %v338
        %1002 = vmatprep.subr.mxu0 0.0
        %1003 = vmatpush1.msra.mxu0 %v339
        %1004 = vmatprep.subr.mxu0 0.0
        %1005 = vmatpush1.msra.mxu0 %v340
        %1006 = vmatprep.subr.mxu0 0.0
        %1007 = vmatpush1.msra.mxu0 %v341
        %1008 = vmatprep.subr.mxu0 0.0
        %1009 = vmatpush1.msra.mxu0 %v342
        %1010 = vmatprep.subr.mxu0 0.0
        %1011 = vmatpush1.msra.mxu0 %v343
        %1012 = vmatprep.subr.mxu0 0.0
        %1013 = vmatpush1.msra.mxu0 %v344
        %1014 = vmatprep.subr.mxu0 0.0
        %1015 = vmatpush1.msra.mxu0 %v345
        %1016 = vmatprep.subr.mxu0 0.0
        %1017 = vmatpush1.msra.mxu0 %v346
        %1018 = vmatprep.subr.mxu0 0.0
        %1019 = vmatpush1.msra.mxu0 %v347
        %1020 = vmatprep.subr.mxu0 0.0
        %1021 = vmatpush1.msra.mxu0 %v348
        %1022 = vmatprep.subr.mxu0 0.0
        %1023 = vmatpush1.msra.mxu0 %v349
        %1024 = vmatprep.subr.mxu0 0.0
        %1025 = vmatpush1.msra.mxu0 %v350
        %1026 = vmatprep.subr.mxu0 0.0
        %1027 = vmatpush1.msra.mxu0 %v351
        %1028 = vmatprep.subr.mxu0 0.0
        %1029 = vmatpush1.msra.mxu0 %v352
        %1030 = vmatprep.subr.mxu0 0.0
        %1031 = vmatpush1.msra.mxu0 %v353
        %1032 = vmatprep.subr.mxu0 0.0
        %1033 = vmatpush1.msra.mxu0 %v354
        %1034 = vmatprep.subr.mxu0 0.0
        %1035 = vmatpush1.msra.mxu0 %v355
        %1036 = vmatprep.subr.mxu0 0.0
        %1037 = vmatpush1.msra.mxu0 %v356
        %1038 = vmatprep.subr.mxu0 0.0
        %1039 = vmatpush1.msra.mxu0 %v357
        %1040 = vmatprep.subr.mxu0 0.0
        %1041 = vmatpush1.msra.mxu0 %v358
        %1042 = vmatprep.subr.mxu0 0.0
        %1043 = vmatpush1.msra.mxu0 %v359
        %1044 = vmatprep.subr.mxu0 0.0
        %1045 = vmatpush1.msra.mxu0 %v360
        %1046 = vmatprep.mubr.f32.mxu0 %v935
        %1047 = vmatmul.mubr.f32.gmra.mrb[0].mxu0 %v934
        %v1048 = vpop.f32.mrb[0].mxu0
        %v1049 = vadd.f32 0.0, %v1048
        %v1050 = vpop.f32.mrb[0].mxu0
        %1051 = vmatprep.mubr.f32.mxu0 %v938
        %1052 = vmatmul.mubr.f32.gmra.mrb[0].mxu0 %v937
        %v1053 = vpop.f32.mrb[0].mxu0
        %v1054 = vadd.f32 0.0, %v1053
        %v1055 = vpop.f32.mrb[0].mxu0
        %1056 = vmatprep.mubr.f32.mxu0 %v941
        %1057 = vmatmul.mubr.f32.gmra.mrb[0].mxu0 %v940
        %v1058 = vpop.f32.mrb[0].mxu0
        %v1059 = vadd.f32 0.0, %v1058
        %v1060 = vpop.f32.mrb[0].mxu0
        %1061 = vmatprep.mubr.f32.mxu0 %v944
        %1062 = vmatmul.mubr.f32.gmra.mrb[0].mxu0 %v943
        %v1063 = vpop.f32.mrb[0].mxu0
        %v1064 = vadd.f32 0.0, %v1063
        %v1065 = vpop.f32.mrb[0].mxu0
        %1066 = vmatprep.mubr.f32.mxu0 %v947
        %1067 = vmatmul.mubr.f32.gmra.mrb[0].mxu0 %v946
        %v1068 = vpop.f32.mrb[0].mxu0
        %v1069 = vadd.f32 0.0, %v1068
        %v1070 = vpop.f32.mrb[0].mxu0
        %1071 = vmatprep.mubr.f32.mxu0 %v950
        %1072 = vmatmul.mubr.f32.gmra.mrb[0].mxu0 %v949
        %v1073 = vpop.f32.mrb[0].mxu0
        %v1074 = vadd.f32 0.0, %v1073
        %v1075 = vpop.f32.mrb[0].mxu0
        %1076 = vmatprep.mubr.f32.mxu0 %v953
        %1077 = vmatmul.mubr.f32.gmra.mrb[0].mxu0 %v952
        %v1078 = vpop.f32.mrb[0].mxu0
        %v1079 = vadd.f32 0.0, %v1078
        %v1080 = vpop.f32.mrb[0].mxu0
        %1081 = vmatprep.mubr.f32.mxu0 %v956
        %1082 = vmatmul.mubr.f32.gmra.mrb[0].mxu0 %v955
        %v1083 = vpop.f32.mrb[0].mxu0
        %v1084 = vadd.f32 0.0, %v1083
        %v1085 = vpop.f32.mrb[0].mxu0
        %1086 = vdwg.mxu0
        %1087 = vmatprep.subr.mxu0 0.0
        %1088 = vmatpush1.msra.mxu0 %v361
        %1089 = vmatprep.subr.mxu0 0.0
        %1090 = vmatpush1.msra.mxu0 %v362
        %1091 = vmatprep.subr.mxu0 0.0
        %1092 = vmatpush1.msra.mxu0 %v363
        %1093 = vmatprep.subr.mxu0 0.0
        %1094 = vmatpush1.msra.mxu0 %v364
        %1095 = vmatprep.subr.mxu0 0.0
        %1096 = vmatpush1.msra.mxu0 %v365
        %1097 = vmatprep.subr.mxu0 0.0
        %1098 = vmatpush1.msra.mxu0 %v366
        %1099 = vmatprep.subr.mxu0 0.0
        %1100 = vmatpush1.msra.mxu0 %v367
        %1101 = vmatprep.subr.mxu0 0.0
        %1102 = vmatpush1.msra.mxu0 %v368
        %1103 = vmatprep.subr.mxu0 0.0
        %1104 = vmatpush1.msra.mxu0 0.0
        %1105 = vmatprep.subr.mxu0 0.0
        %1106 = vmatpush1.msra.mxu0 0.0
        %1107 = vmatprep.subr.mxu0 0.0
        %1108 = vmatpush1.msra.mxu0 0.0
        %1109 = vmatprep.subr.mxu0 0.0
        %1110 = vmatpush1.msra.mxu0 0.0
        %1111 = vmatprep.subr.mxu0 0.0
        %1112 = vmatpush1.msra.mxu0 0.0
        %1113 = vmatprep.subr.mxu0 0.0
        %1114 = vmatpush1.msra.mxu0 0.0
        %1115 = vmatprep.subr.mxu0 0.0
        %1116 = vmatpush1.msra.mxu0 0.0
        %1117 = vmatprep.subr.mxu0 0.0
        %1118 = vmatpush1.msra.mxu0 0.0
        %1119 = vmatprep.subr.mxu0 0.0
        %1120 = vmatpush1.msra.mxu0 0.0
        %1121 = vmatprep.subr.mxu0 0.0
        %1122 = vmatpush1.msra.mxu0 0.0
        %1123 = vmatprep.subr.mxu0 0.0
        %1124 = vmatpush1.msra.mxu0 0.0
        %1125 = vmatprep.subr.mxu0 0.0
        %1126 = vmatpush1.msra.mxu0 0.0
        %1127 = vmatprep.subr.mxu0 0.0
        %1128 = vmatpush1.msra.mxu0 0.0
        %1129 = vmatprep.subr.mxu0 0.0
        %1130 = vmatpush1.msra.mxu0 0.0
        %1131 = vmatprep.subr.mxu0 0.0
        %1132 = vmatpush1.msra.mxu0 0.0
        %1133 = vmatprep.subr.mxu0 0.0
        %1134 = vmatpush1.msra.mxu0 0.0
        %1135 = vmatprep.subr.mxu0 0.0
        %1136 = vmatpush1.msra.mxu0 0.0
        %1137 = vmatprep.subr.mxu0 0.0
        %1138 = vmatpush1.msra.mxu0 0.0
        %1139 = vmatprep.subr.mxu0 0.0
        %1140 = vmatpush1.msra.mxu0 0.0
        %1141 = vmatprep.subr.mxu0 0.0
        %1142 = vmatpush1.msra.mxu0 0.0
        %1143 = vmatprep.subr.mxu0 0.0
        %1144 = vmatpush1.msra.mxu0 0.0
        %1145 = vmatprep.subr.mxu0 0.0
        %1146 = vmatpush1.msra.mxu0 0.0
        %1147 = vmatprep.subr.mxu0 0.0
        %1148 = vmatpush1.msra.mxu0 0.0
        %1149 = vmatprep.subr.mxu0 0.0
        %1150 = vmatpush1.msra.mxu0 0.0
        %1151 = vmatprep.mubr.f32.mxu0 0.0
        %1152 = vmatmul.mubr.f32.gmra.mrb[0].mxu0 %v959
        %v1153 = vpop.f32.mrb[0].mxu0
        %v1154 = vadd.f32 %v1049, %v1153
        %v1155 = vpop.f32.mrb[0].mxu0
        %1156 = vmatprep.mubr.f32.mxu0 0.0
        %1157 = vmatmul.mubr.f32.gmra.mrb[0].mxu0 %v962
        %v1158 = vpop.f32.mrb[0].mxu0
        %v1159 = vadd.f32 %v1054, %v1158
        %v1160 = vpop.f32.mrb[0].mxu0
        %1161 = vmatprep.mubr.f32.mxu0 0.0
        %1162 = vmatmul.mubr.f32.gmra.mrb[0].mxu0 %v965
        %v1163 = vpop.f32.mrb[0].mxu0
        %v1164 = vadd.f32 %v1059, %v1163
        %v1165 = vpop.f32.mrb[0].mxu0
        %1166 = vmatprep.mubr.f32.mxu0 0.0
        %1167 = vmatmul.mubr.f32.gmra.mrb[0].mxu0 %v968
        %v1168 = vpop.f32.mrb[0].mxu0
        %v1169 = vadd.f32 %v1064, %v1168
        %v1170 = vpop.f32.mrb[0].mxu0
        %1171 = vmatprep.mubr.f32.mxu0 0.0
        %1172 = vmatmul.mubr.f32.gmra.mrb[0].mxu0 %v971
        %v1173 = vpop.f32.mrb[0].mxu0
        %v1174 = vadd.f32 %v1069, %v1173
        %v1175 = vpop.f32.mrb[0].mxu0
        %1176 = vmatprep.mubr.f32.mxu0 0.0
        %1177 = vmatmul.mubr.f32.gmra.mrb[0].mxu0 %v974
        %v1178 = vpop.f32.mrb[0].mxu0
        %v1179 = vadd.f32 %v1074, %v1178
        %v1180 = vpop.f32.mrb[0].mxu0
        %1181 = vmatprep.mubr.f32.mxu0 0.0
        %1182 = vmatmul.mubr.f32.gmra.mrb[0].mxu0 %v977
        %v1183 = vpop.f32.mrb[0].mxu0
        %v1184 = vadd.f32 %v1079, %v1183
        %v1185 = vpop.f32.mrb[0].mxu0
        %1186 = vmatprep.mubr.f32.mxu0 0.0
        %1187 = vmatmul.mubr.f32.gmra.mrb[0].mxu0 %v980
        %v1188 = vpop.f32.mrb[0].mxu0
        %v1189 = vadd.f32 %v1084, %v1188
        %v1190 = vpop.f32.mrb[0].mxu0
        %1191 = vdwg.mxu0
        %v1192 = vmax.f32 %v926, %v1154
        %v1193 = vmax.f32 %v927, %v1159
        %v1194 = vmax.f32 %v928, %v1164
        %v1195 = vmax.f32 %v929, %v1169
        %v1196 = vmax.f32 %v930, %v1174
        %v1197 = vmax.f32 %v931, %v1179
        %v1198 = vmax.f32 %v932, %v1184
        %v1199 = vmax.f32 %v933, %v1189
        %1216 = vrot.lane.b32.xlu0 %v934, 64
        %v1217 = vpop.permute.xlu0 %1216
        %1218 = vrot.lane.b32.xlu0 %v935, 64
        %v1219 = vpop.permute.xlu0 %1218
        %1220 = vrot.lane.b32.xlu0 %v936, 64
        %v1221 = vpop.permute.xlu0 %1220
        %1222 = vrot.lane.b32.xlu0 %v937, 64
        %v1223 = vpop.permute.xlu0 %1222
        %1224 = vrot.lane.b32.xlu0 %v938, 64
        %v1225 = vpop.permute.xlu0 %1224
        %1226 = vrot.lane.b32.xlu0 %v939, 64
        %v1227 = vpop.permute.xlu0 %1226
        %1228 = vrot.lane.b32.xlu0 %v940, 64
        %v1229 = vpop.permute.xlu0 %1228
        %1230 = vrot.lane.b32.xlu0 %v941, 64
        %v1231 = vpop.permute.xlu0 %1230
        %1232 = vrot.lane.b32.xlu0 %v942, 64
        %v1233 = vpop.permute.xlu0 %1232
        %1234 = vrot.lane.b32.xlu0 %v943, 64
        %v1235 = vpop.permute.xlu0 %1234
        %1236 = vrot.lane.b32.xlu0 %v944, 64
        %v1237 = vpop.permute.xlu0 %1236
        %1238 = vrot.lane.b32.xlu0 %v945, 64
        %v1239 = vpop.permute.xlu0 %1238
        %1240 = vrot.lane.b32.xlu0 %v946, 64
        %v1241 = vpop.permute.xlu0 %1240
        %1242 = vrot.lane.b32.xlu0 %v947, 64
        %v1243 = vpop.permute.xlu0 %1242
        %1244 = vrot.lane.b32.xlu0 %v948, 64
        %v1245 = vpop.permute.xlu0 %1244
        %1246 = vrot.lane.b32.xlu0 %v949, 64
        %v1247 = vpop.permute.xlu0 %1246
        %1248 = vrot.lane.b32.xlu0 %v950, 64
        %v1249 = vpop.permute.xlu0 %1248
        %1250 = vrot.lane.b32.xlu0 %v951, 64
        %v1251 = vpop.permute.xlu0 %1250
        %1252 = vrot.lane.b32.xlu0 %v952, 64
        %v1253 = vpop.permute.xlu0 %1252
        %1254 = vrot.lane.b32.xlu0 %v953, 64
        %v1255 = vpop.permute.xlu0 %1254
        %1256 = vrot.lane.b32.xlu0 %v954, 64
        %v1257 = vpop.permute.xlu0 %1256
        %1258 = vrot.lane.b32.xlu0 %v955, 64
        %v1259 = vpop.permute.xlu0 %1258
        %1260 = vrot.lane.b32.xlu0 %v956, 64
        %v1261 = vpop.permute.xlu0 %1260
        %1262 = vrot.lane.b32.xlu0 %v957, 64
        %v1263 = vpop.permute.xlu0 %1262
        %v1264 = vsel %vm369, %v1217, %v1219
        %v1265 = vsel %vm369, %v1219, %v1221
        %v1266 = vsel %vm369, %v1223, %v1225
        %v1267 = vsel %vm369, %v1225, %v1227
        %v1268 = vsel %vm369, %v1229, %v1231
        %v1269 = vsel %vm369, %v1231, %v1233
        %v1270 = vsel %vm369, %v1235, %v1237
        %v1271 = vsel %vm369, %v1237, %v1239
        %v1272 = vsel %vm369, %v1241, %v1243
        %v1273 = vsel %vm369, %v1243, %v1245
        %v1274 = vsel %vm369, %v1247, %v1249
        %v1275 = vsel %vm369, %v1249, %v1251
        %v1276 = vsel %vm369, %v1253, %v1255
        %v1277 = vsel %vm369, %v1255, %v1257
        %v1278 = vsel %vm369, %v1259, %v1261
        %v1279 = vsel %vm369, %v1261, %v1263
        %v1296 = vsel %vm369, %v1221, 0
        %v1298 = vsel %vm369, %v1227, 0
        %v1300 = vsel %vm369, %v1233, 0
        %v1302 = vsel %vm369, %v1239, 0
        %v1304 = vsel %vm369, %v1245, 0
        %v1306 = vsel %vm369, %v1251, 0
        %v1308 = vsel %vm369, %v1257, 0
        %v1310 = vsel %vm369, %v1263, 0
        %1312 = vmatprep.subr.mxu0 0.0
        %1313 = vmatpush1.msra.mxu0 %v329
        %1314 = vmatprep.subr.mxu0 0.0
        %1315 = vmatpush1.msra.mxu0 %v330
        %1316 = vmatprep.subr.mxu0 0.0
        %1317 = vmatpush1.msra.mxu0 %v331
        %1318 = vmatprep.subr.mxu0 0.0
        %1319 = vmatpush1.msra.mxu0 %v332
        %1320 = vmatprep.subr.mxu0 0.0
        %1321 = vmatpush1.msra.mxu0 %v333
        %1322 = vmatprep.subr.mxu0 0.0
        %1323 = vmatpush1.msra.mxu0 %v334
        %1324 = vmatprep.subr.mxu0 0.0
        %1325 = vmatpush1.msra.mxu0 %v335
        %1326 = vmatprep.subr.mxu0 0.0
        %1327 = vmatpush1.msra.mxu0 %v336
        %1328 = vmatprep.subr.mxu0 0.0
        %1329 = vmatpush1.msra.mxu0 %v337
        %1330 = vmatprep.subr.mxu0 0.0
        %1331 = vmatpush1.msra.mxu0 %v338
        %1332 = vmatprep.subr.mxu0 0.0
        %1333 = vmatpush1.msra.mxu0 %v339
        %1334 = vmatprep.subr.mxu0 0.0
        %1335 = vmatpush1.msra.mxu0 %v340
        %1336 = vmatprep.subr.mxu0 0.0
        %1337 = vmatpush1.msra.mxu0 %v341
        %1338 = vmatprep.subr.mxu0 0.0
        %1339 = vmatpush1.msra.mxu0 %v342
        %1340 = vmatprep.subr.mxu0 0.0
        %1341 = vmatpush1.msra.mxu0 %v343
        %1342 = vmatprep.subr.mxu0 0.0
        %1343 = vmatpush1.msra.mxu0 %v344
        %1344 = vmatprep.subr.mxu0 0.0
        %1345 = vmatpush1.msra.mxu0 %v345
        %1346 = vmatprep.subr.mxu0 0.0
        %1347 = vmatpush1.msra.mxu0 %v346
        %1348 = vmatprep.subr.mxu0 0.0
        %1349 = vmatpush1.msra.mxu0 %v347
        %1350 = vmatprep.subr.mxu0 0.0
        %1351 = vmatpush1.msra.mxu0 %v348
        %1352 = vmatprep.subr.mxu0 0.0
        %1353 = vmatpush1.msra.mxu0 %v349
        %1354 = vmatprep.subr.mxu0 0.0
        %1355 = vmatpush1.msra.mxu0 %v350
        %1356 = vmatprep.subr.mxu0 0.0
        %1357 = vmatpush1.msra.mxu0 %v351
        %1358 = vmatprep.subr.mxu0 0.0
        %1359 = vmatpush1.msra.mxu0 %v352
        %1360 = vmatprep.subr.mxu0 0.0
        %1361 = vmatpush1.msra.mxu0 %v353
        %1362 = vmatprep.subr.mxu0 0.0
        %1363 = vmatpush1.msra.mxu0 %v354
        %1364 = vmatprep.subr.mxu0 0.0
        %1365 = vmatpush1.msra.mxu0 %v355
        %1366 = vmatprep.subr.mxu0 0.0
        %1367 = vmatpush1.msra.mxu0 %v356
        %1368 = vmatprep.subr.mxu0 0.0
        %1369 = vmatpush1.msra.mxu0 %v357
        %1370 = vmatprep.subr.mxu0 0.0
        %1371 = vmatpush1.msra.mxu0 %v358
        %1372 = vmatprep.subr.mxu0 0.0
        %1373 = vmatpush1.msra.mxu0 %v359
        %1374 = vmatprep.subr.mxu0 0.0
        %1375 = vmatpush1.msra.mxu0 %v360
        %1376 = vmatprep.mubr.f32.mxu0 %v1265
        %1377 = vmatmul.mubr.f32.gmra.mrb[0].mxu0 %v1264
        %v1378 = vpop.f32.mrb[0].mxu0
        %v1379 = vadd.f32 0.0, %v1378
        %v1380 = vpop.f32.mrb[0].mxu0
        %1381 = vmatprep.mubr.f32.mxu0 %v1267
        %1382 = vmatmul.mubr.f32.gmra.mrb[0].mxu0 %v1266
        %v1383 = vpop.f32.mrb[0].mxu0
        %v1384 = vadd.f32 0.0, %v1383
        %v1385 = vpop.f32.mrb[0].mxu0
        %1386 = vmatprep.mubr.f32.mxu0 %v1269
        %1387 = vmatmul.mubr.f32.gmra.mrb[0].mxu0 %v1268
        %v1388 = vpop.f32.mrb[0].mxu0
        %v1389 = vadd.f32 0.0, %v1388
        %v1390 = vpop.f32.mrb[0].mxu0
        %1391 = vmatprep.mubr.f32.mxu0 %v1271
        %1392 = vmatmul.mubr.f32.gmra.mrb[0].mxu0 %v1270
        %v1393 = vpop.f32.mrb[0].mxu0
        %v1394 = vadd.f32 0.0, %v1393
        %v1395 = vpop.f32.mrb[0].mxu0
        %1396 = vmatprep.mubr.f32.mxu0 %v1273
        %1397 = vmatmul.mubr.f32.gmra.mrb[0].mxu0 %v1272
        %v1398 = vpop.f32.mrb[0].mxu0
        %v1399 = vadd.f32 0.0, %v1398
        %v1400 = vpop.f32.mrb[0].mxu0
        %1401 = vmatprep.mubr.f32.mxu0 %v1275
        %1402 = vmatmul.mubr.f32.gmra.mrb[0].mxu0 %v1274
        %v1403 = vpop.f32.mrb[0].mxu0
        %v1404 = vadd.f32 0.0, %v1403
        %v1405 = vpop.f32.mrb[0].mxu0
        %1406 = vmatprep.mubr.f32.mxu0 %v1277
        %1407 = vmatmul.mubr.f32.gmra.mrb[0].mxu0 %v1276
        %v1408 = vpop.f32.mrb[0].mxu0
        %v1409 = vadd.f32 0.0, %v1408
        %v1410 = vpop.f32.mrb[0].mxu0
        %1411 = vmatprep.mubr.f32.mxu0 %v1279
        %1412 = vmatmul.mubr.f32.gmra.mrb[0].mxu0 %v1278
        %v1413 = vpop.f32.mrb[0].mxu0
        %v1414 = vadd.f32 0.0, %v1413
        %v1415 = vpop.f32.mrb[0].mxu0
        %1416 = vdwg.mxu0
        %1417 = vmatprep.subr.mxu0 0.0
        %1418 = vmatpush1.msra.mxu0 %v361
        %1419 = vmatprep.subr.mxu0 0.0
        %1420 = vmatpush1.msra.mxu0 %v362
        %1421 = vmatprep.subr.mxu0 0.0
        %1422 = vmatpush1.msra.mxu0 %v363
        %1423 = vmatprep.subr.mxu0 0.0
        %1424 = vmatpush1.msra.mxu0 %v364
        %1425 = vmatprep.subr.mxu0 0.0
        %1426 = vmatpush1.msra.mxu0 %v365
        %1427 = vmatprep.subr.mxu0 0.0
        %1428 = vmatpush1.msra.mxu0 %v366
        %1429 = vmatprep.subr.mxu0 0.0
        %1430 = vmatpush1.msra.mxu0 %v367
        %1431 = vmatprep.subr.mxu0 0.0
        %1432 = vmatpush1.msra.mxu0 %v368
        %1433 = vmatprep.subr.mxu0 0.0
        %1434 = vmatpush1.msra.mxu0 0.0
        %1435 = vmatprep.subr.mxu0 0.0
        %1436 = vmatpush1.msra.mxu0 0.0
        %1437 = vmatprep.subr.mxu0 0.0
        %1438 = vmatpush1.msra.mxu0 0.0
        %1439 = vmatprep.subr.mxu0 0.0
        %1440 = vmatpush1.msra.mxu0 0.0
        %1441 = vmatprep.subr.mxu0 0.0
        %1442 = vmatpush1.msra.mxu0 0.0
        %1443 = vmatprep.subr.mxu0 0.0
        %1444 = vmatpush1.msra.mxu0 0.0
        %1445 = vmatprep.subr.mxu0 0.0
        %1446 = vmatpush1.msra.mxu0 0.0
        %1447 = vmatprep.subr.mxu0 0.0
        %1448 = vmatpush1.msra.mxu0 0.0
        %1449 = vmatprep.subr.mxu0 0.0
        %1450 = vmatpush1.msra.mxu0 0.0
        %1451 = vmatprep.subr.mxu0 0.0
        %1452 = vmatpush1.msra.mxu0 0.0
        %1453 = vmatprep.subr.mxu0 0.0
        %1454 = vmatpush1.msra.mxu0 0.0
        %1455 = vmatprep.subr.mxu0 0.0
        %1456 = vmatpush1.msra.mxu0 0.0
        %1457 = vmatprep.subr.mxu0 0.0
        %1458 = vmatpush1.msra.mxu0 0.0
        %1459 = vmatprep.subr.mxu0 0.0
        %1460 = vmatpush1.msra.mxu0 0.0
        %1461 = vmatprep.subr.mxu0 0.0
        %1462 = vmatpush1.msra.mxu0 0.0
        %1463 = vmatprep.subr.mxu0 0.0
        %1464 = vmatpush1.msra.mxu0 0.0
        %1465 = vmatprep.subr.mxu0 0.0
        %1466 = vmatpush1.msra.mxu0 0.0
        %1467 = vmatprep.subr.mxu0 0.0
        %1468 = vmatpush1.msra.mxu0 0.0
        %1469 = vmatprep.subr.mxu0 0.0
        %1470 = vmatpush1.msra.mxu0 0.0
        %1471 = vmatprep.subr.mxu0 0.0
        %1472 = vmatpush1.msra.mxu0 0.0
        %1473 = vmatprep.subr.mxu0 0.0
        %1474 = vmatpush1.msra.mxu0 0.0
        %1475 = vmatprep.subr.mxu0 0.0
        %1476 = vmatpush1.msra.mxu0 0.0
        %1477 = vmatprep.subr.mxu0 0.0
        %1478 = vmatpush1.msra.mxu0 0.0
        %1479 = vmatprep.subr.mxu0 0.0
        %1480 = vmatpush1.msra.mxu0 0.0
        %1481 = vmatprep.mubr.f32.mxu0 0.0
        %1482 = vmatmul.mubr.f32.gmra.mrb[0].mxu0 %v1296
        %v1483 = vpop.f32.mrb[0].mxu0
        %v1484 = vadd.f32 %v1379, %v1483
        %v1485 = vpop.f32.mrb[0].mxu0
        %1486 = vmatprep.mubr.f32.mxu0 0.0
        %1487 = vmatmul.mubr.f32.gmra.mrb[0].mxu0 %v1298
        %v1488 = vpop.f32.mrb[0].mxu0
        %v1489 = vadd.f32 %v1384, %v1488
        %v1490 = vpop.f32.mrb[0].mxu0
        %1491 = vmatprep.mubr.f32.mxu0 0.0
        %1492 = vmatmul.mubr.f32.gmra.mrb[0].mxu0 %v1300
        %v1493 = vpop.f32.mrb[0].mxu0
        %v1494 = vadd.f32 %v1389, %v1493
        %v1495 = vpop.f32.mrb[0].mxu0
        %1496 = vmatprep.mubr.f32.mxu0 0.0
        %1497 = vmatmul.mubr.f32.gmra.mrb[0].mxu0 %v1302
        %v1498 = vpop.f32.mrb[0].mxu0
        %v1499 = vadd.f32 %v1394, %v1498
        %v1500 = vpop.f32.mrb[0].mxu0
        %1501 = vmatprep.mubr.f32.mxu0 0.0
        %1502 = vmatmul.mubr.f32.gmra.mrb[0].mxu0 %v1304
        %v1503 = vpop.f32.mrb[0].mxu0
        %v1504 = vadd.f32 %v1399, %v1503
        %v1505 = vpop.f32.mrb[0].mxu0
        %1506 = vmatprep.mubr.f32.mxu0 0.0
        %1507 = vmatmul.mubr.f32.gmra.mrb[0].mxu0 %v1306
        %v1508 = vpop.f32.mrb[0].mxu0
        %v1509 = vadd.f32 %v1404, %v1508
        %v1510 = vpop.f32.mrb[0].mxu0
        %1511 = vmatprep.mubr.f32.mxu0 0.0
        %1512 = vmatmul.mubr.f32.gmra.mrb[0].mxu0 %v1308
        %v1513 = vpop.f32.mrb[0].mxu0
        %v1514 = vadd.f32 %v1409, %v1513
        %v1515 = vpop.f32.mrb[0].mxu0
        %1516 = vmatprep.mubr.f32.mxu0 0.0
        %1517 = vmatmul.mubr.f32.gmra.mrb[0].mxu0 %v1310
        %v1518 = vpop.f32.mrb[0].mxu0
        %v1519 = vadd.f32 %v1414, %v1518
        %v1520 = vpop.f32.mrb[0].mxu0
        %1521 = vdwg.mxu0
        %v1522 = vmax.f32 %v1192, %v1484
        %v1523 = vmax.f32 %v1193, %v1489
        %v1524 = vmax.f32 %v1194, %v1494
        %v1525 = vmax.f32 %v1195, %v1499
        %v1526 = vmax.f32 %v1196, %v1504
        %v1527 = vmax.f32 %v1197, %v1509
        %v1528 = vmax.f32 %v1198, %v1514
        %v1529 = vmax.f32 %v1199, %v1519
        %v1530 = vld [vmem:[%s296 + $0x10] sm:$0xff]
        %v1531 = vld [vmem:[%s296 + $0x18] sm:$0xff]
        %v1532 = vld [vmem:[%s296 + $0x20] sm:$0xff]
        %v1533 = vld [vmem:[%s296 + $0x50] sm:$0xff]
        %v1534 = vld [vmem:[%s296 + $0x58] sm:$0xff]
        %v1535 = vld [vmem:[%s296 + $0x60] sm:$0xff]
        %v1536 = vld [vmem:[%s296 + $0x90] sm:$0xff]
        %v1537 = vld [vmem:[%s296 + $0x98] sm:$0xff]
        %v1538 = vld [vmem:[%s296 + $0xa0] sm:$0xff]
        %v1539 = vld [vmem:[%s296 + $0xd0] sm:$0xff]
        %v1540 = vld [vmem:[%s296 + $0xd8] sm:$0xff]
        %v1541 = vld [vmem:[%s296 + $0xe0] sm:$0xff]
        %v1542 = vld [vmem:[%s296 + $0x110] sm:$0xff]
        %v1543 = vld [vmem:[%s296 + $0x118] sm:$0xff]
        %v1544 = vld [vmem:[%s296 + $0x120] sm:$0xff]
        %v1545 = vld [vmem:[%s296 + $0x150] sm:$0xff]
        %v1546 = vld [vmem:[%s296 + $0x158] sm:$0xff]
        %v1547 = vld [vmem:[%s296 + $0x160] sm:$0xff]
        %v1548 = vld [vmem:[%s296 + $0x190] sm:$0xff]
        %v1549 = vld [vmem:[%s296 + $0x198] sm:$0xff]
        %v1550 = vld [vmem:[%s296 + $0x1a0] sm:$0xff]
        %v1551 = vld [vmem:[%s296 + $0x1d0] sm:$0xff]
        %v1552 = vld [vmem:[%s296 + $0x1d8] sm:$0xff]
        %v1553 = vld [vmem:[%s296 + $0x1e0] sm:$0xff]
        %v1555 = vsel %vm369, %v1532, 0
        %v1558 = vsel %vm369, %v1535, 0
        %v1561 = vsel %vm369, %v1538, 0
        %v1564 = vsel %vm369, %v1541, 0
        %v1567 = vsel %vm369, %v1544, 0
        %v1570 = vsel %vm369, %v1547, 0
        %v1573 = vsel %vm369, %v1550, 0
        %v1576 = vsel %vm369, %v1553, 0
        %1578 = vmatprep.subr.mxu0 0.0
        %1579 = vmatpush1.msra.mxu0 %v329
        %1580 = vmatprep.subr.mxu0 0.0
        %1581 = vmatpush1.msra.mxu0 %v330
        %1582 = vmatprep.subr.mxu0 0.0
        %1583 = vmatpush1.msra.mxu0 %v331
        %1584 = vmatprep.subr.mxu0 0.0
        %1585 = vmatpush1.msra.mxu0 %v332
        %1586 = vmatprep.subr.mxu0 0.0
        %1587 = vmatpush1.msra.mxu0 %v333
        %1588 = vmatprep.subr.mxu0 0.0
        %1589 = vmatpush1.msra.mxu0 %v334
        %1590 = vmatprep.subr.mxu0 0.0
        %1591 = vmatpush1.msra.mxu0 %v335
        %1592 = vmatprep.subr.mxu0 0.0
        %1593 = vmatpush1.msra.mxu0 %v336
        %1594 = vmatprep.subr.mxu0 0.0
        %1595 = vmatpush1.msra.mxu0 %v337
        %1596 = vmatprep.subr.mxu0 0.0
        %1597 = vmatpush1.msra.mxu0 %v338
        %1598 = vmatprep.subr.mxu0 0.0
        %1599 = vmatpush1.msra.mxu0 %v339
        %1600 = vmatprep.subr.mxu0 0.0
        %1601 = vmatpush1.msra.mxu0 %v340
        %1602 = vmatprep.subr.mxu0 0.0
        %1603 = vmatpush1.msra.mxu0 %v341
        %1604 = vmatprep.subr.mxu0 0.0
        %1605 = vmatpush1.msra.mxu0 %v342
        %1606 = vmatprep.subr.mxu0 0.0
        %1607 = vmatpush1.msra.mxu0 %v343
        %1608 = vmatprep.subr.mxu0 0.0
        %1609 = vmatpush1.msra.mxu0 %v344
        %1610 = vmatprep.subr.mxu0 0.0
        %1611 = vmatpush1.msra.mxu0 %v345
        %1612 = vmatprep.subr.mxu0 0.0
        %1613 = vmatpush1.msra.mxu0 %v346
        %1614 = vmatprep.subr.mxu0 0.0
        %1615 = vmatpush1.msra.mxu0 %v347
        %1616 = vmatprep.subr.mxu0 0.0
        %1617 = vmatpush1.msra.mxu0 %v348
        %1618 = vmatprep.subr.mxu0 0.0
        %1619 = vmatpush1.msra.mxu0 %v349
        %1620 = vmatprep.subr.mxu0 0.0
        %1621 = vmatpush1.msra.mxu0 %v350
        %1622 = vmatprep.subr.mxu0 0.0
        %1623 = vmatpush1.msra.mxu0 %v351
        %1624 = vmatprep.subr.mxu0 0.0
        %1625 = vmatpush1.msra.mxu0 %v352
        %1626 = vmatprep.subr.mxu0 0.0
        %1627 = vmatpush1.msra.mxu0 %v353
        %1628 = vmatprep.subr.mxu0 0.0
        %1629 = vmatpush1.msra.mxu0 %v354
        %1630 = vmatprep.subr.mxu0 0.0
        %1631 = vmatpush1.msra.mxu0 %v355
        %1632 = vmatprep.subr.mxu0 0.0
        %1633 = vmatpush1.msra.mxu0 %v356
        %1634 = vmatprep.subr.mxu0 0.0
        %1635 = vmatpush1.msra.mxu0 %v357
        %1636 = vmatprep.subr.mxu0 0.0
        %1637 = vmatpush1.msra.mxu0 %v358
        %1638 = vmatprep.subr.mxu0 0.0
        %1639 = vmatpush1.msra.mxu0 %v359
        %1640 = vmatprep.subr.mxu0 0.0
        %1641 = vmatpush1.msra.mxu0 %v360
        %1642 = vmatprep.mubr.f32.mxu0 %v1531
        %1643 = vmatmul.mubr.f32.gmra.mrb[0].mxu0 %v1530
        %v1644 = vpop.f32.mrb[0].mxu0
        %v1645 = vadd.f32 0.0, %v1644
        %v1646 = vpop.f32.mrb[0].mxu0
        %1647 = vmatprep.mubr.f32.mxu0 %v1534
        %1648 = vmatmul.mubr.f32.gmra.mrb[0].mxu0 %v1533
        %v1649 = vpop.f32.mrb[0].mxu0
        %v1650 = vadd.f32 0.0, %v1649
        %v1651 = vpop.f32.mrb[0].mxu0
        %1652 = vmatprep.mubr.f32.mxu0 %v1537
        %1653 = vmatmul.mubr.f32.gmra.mrb[0].mxu0 %v1536
        %v1654 = vpop.f32.mrb[0].mxu0
        %v1655 = vadd.f32 0.0, %v1654
        %v1656 = vpop.f32.mrb[0].mxu0
        %1657 = vmatprep.mubr.f32.mxu0 %v1540
        %1658 = vmatmul.mubr.f32.gmra.mrb[0].mxu0 %v1539
        %v1659 = vpop.f32.mrb[0].mxu0
        %v1660 = vadd.f32 0.0, %v1659
        %v1661 = vpop.f32.mrb[0].mxu0
        %1662 = vmatprep.mubr.f32.mxu0 %v1543
        %1663 = vmatmul.mubr.f32.gmra.mrb[0].mxu0 %v1542
        %v1664 = vpop.f32.mrb[0].mxu0
        %v1665 = vadd.f32 0.0, %v1664
        %v1666 = vpop.f32.mrb[0].mxu0
        %1667 = vmatprep.mubr.f32.mxu0 %v1546
        %1668 = vmatmul.mubr.f32.gmra.mrb[0].mxu0 %v1545
        %v1669 = vpop.f32.mrb[0].mxu0
        %v1670 = vadd.f32 0.0, %v1669
        %v1671 = vpop.f32.mrb[0].mxu0
        %1672 = vmatprep.mubr.f32.mxu0 %v1549
        %1673 = vmatmul.mubr.f32.gmra.mrb[0].mxu0 %v1548
        %v1674 = vpop.f32.mrb[0].mxu0
        %v1675 = vadd.f32 0.0, %v1674
        %v1676 = vpop.f32.mrb[0].mxu0
        %1677 = vmatprep.mubr.f32.mxu0 %v1552
        %1678 = vmatmul.mubr.f32.gmra.mrb[0].mxu0 %v1551
        %v1679 = vpop.f32.mrb[0].mxu0
        %v1680 = vadd.f32 0.0, %v1679
        %v1681 = vpop.f32.mrb[0].mxu0
        %1682 = vdwg.mxu0
        %1683 = vmatprep.subr.mxu0 0.0
        %1684 = vmatpush1.msra.mxu0 %v361
        %1685 = vmatprep.subr.mxu0 0.0
        %1686 = vmatpush1.msra.mxu0 %v362
        %1687 = vmatprep.subr.mxu0 0.0
        %1688 = vmatpush1.msra.mxu0 %v363
        %1689 = vmatprep.subr.mxu0 0.0
        %1690 = vmatpush1.msra.mxu0 %v364
        %1691 = vmatprep.subr.mxu0 0.0
        %1692 = vmatpush1.msra.mxu0 %v365
        %1693 = vmatprep.subr.mxu0 0.0
        %1694 = vmatpush1.msra.mxu0 %v366
        %1695 = vmatprep.subr.mxu0 0.0
        %1696 = vmatpush1.msra.mxu0 %v367
        %1697 = vmatprep.subr.mxu0 0.0
        %1698 = vmatpush1.msra.mxu0 %v368
        %1699 = vmatprep.subr.mxu0 0.0
        %1700 = vmatpush1.msra.mxu0 0.0
        %1701 = vmatprep.subr.mxu0 0.0
        %1702 = vmatpush1.msra.mxu0 0.0
        %1703 = vmatprep.subr.mxu0 0.0
        %1704 = vmatpush1.msra.mxu0 0.0
        %1705 = vmatprep.subr.mxu0 0.0
        %1706 = vmatpush1.msra.mxu0 0.0
        %1707 = vmatprep.subr.mxu0 0.0
        %1708 = vmatpush1.msra.mxu0 0.0
        %1709 = vmatprep.subr.mxu0 0.0
        %1710 = vmatpush1.msra.mxu0 0.0
        %1711 = vmatprep.subr.mxu0 0.0
        %1712 = vmatpush1.msra.mxu0 0.0
        %1713 = vmatprep.subr.mxu0 0.0
        %1714 = vmatpush1.msra.mxu0 0.0
        %1715 = vmatprep.subr.mxu0 0.0
        %1716 = vmatpush1.msra.mxu0 0.0
        %1717 = vmatprep.subr.mxu0 0.0
        %1718 = vmatpush1.msra.mxu0 0.0
        %1719 = vmatprep.subr.mxu0 0.0
        %1720 = vmatpush1.msra.mxu0 0.0
        %1721 = vmatprep.subr.mxu0 0.0
        %1722 = vmatpush1.msra.mxu0 0.0
        %1723 = vmatprep.subr.mxu0 0.0
        %1724 = vmatpush1.msra.mxu0 0.0
        %1725 = vmatprep.subr.mxu0 0.0
        %1726 = vmatpush1.msra.mxu0 0.0
        %1727 = vmatprep.subr.mxu0 0.0
        %1728 = vmatpush1.msra.mxu0 0.0
        %1729 = vmatprep.subr.mxu0 0.0
        %1730 = vmatpush1.msra.mxu0 0.0
        %1731 = vmatprep.subr.mxu0 0.0
        %1732 = vmatpush1.msra.mxu0 0.0
        %1733 = vmatprep.subr.mxu0 0.0
        %1734 = vmatpush1.msra.mxu0 0.0
        %1735 = vmatprep.subr.mxu0 0.0
        %1736 = vmatpush1.msra.mxu0 0.0
        %1737 = vmatprep.subr.mxu0 0.0
        %1738 = vmatpush1.msra.mxu0 0.0
        %1739 = vmatprep.subr.mxu0 0.0
        %1740 = vmatpush1.msra.mxu0 0.0
        %1741 = vmatprep.subr.mxu0 0.0
        %1742 = vmatpush1.msra.mxu0 0.0
        %1743 = vmatprep.subr.mxu0 0.0
        %1744 = vmatpush1.msra.mxu0 0.0
        %1745 = vmatprep.subr.mxu0 0.0
        %1746 = vmatpush1.msra.mxu0 0.0
        %1747 = vmatprep.mubr.f32.mxu0 0.0
        %1748 = vmatmul.mubr.f32.gmra.mrb[0].mxu0 %v1555
        %v1749 = vpop.f32.mrb[0].mxu0
        %v1750 = vadd.f32 %v1645, %v1749
        %v1751 = vpop.f32.mrb[0].mxu0
        %1752 = vmatprep.mubr.f32.mxu0 0.0
        %1753 = vmatmul.mubr.f32.gmra.mrb[0].mxu0 %v1558
        %v1754 = vpop.f32.mrb[0].mxu0
        %v1755 = vadd.f32 %v1650, %v1754
        %v1756 = vpop.f32.mrb[0].mxu0
        %1757 = vmatprep.mubr.f32.mxu0 0.0
        %1758 = vmatmul.mubr.f32.gmra.mrb[0].mxu0 %v1561
        %v1759 = vpop.f32.mrb[0].mxu0
        %v1760 = vadd.f32 %v1655, %v1759
        %v1761 = vpop.f32.mrb[0].mxu0
        %1762 = vmatprep.mubr.f32.mxu0 0.0
        %1763 = vmatmul.mubr.f32.gmra.mrb[0].mxu0 %v1564
        %v1764 = vpop.f32.mrb[0].mxu0
        %v1765 = vadd.f32 %v1660, %v1764
        %v1766 = vpop.f32.mrb[0].mxu0
        %1767 = vmatprep.mubr.f32.mxu0 0.0
        %1768 = vmatmul.mubr.f32.gmra.mrb[0].mxu0 %v1567
        %v1769 = vpop.f32.mrb[0].mxu0
        %v1770 = vadd.f32 %v1665, %v1769
        %v1771 = vpop.f32.mrb[0].mxu0
        %1772 = vmatprep.mubr.f32.mxu0 0.0
        %1773 = vmatmul.mubr.f32.gmra.mrb[0].mxu0 %v1570
        %v1774 = vpop.f32.mrb[0].mxu0
        %v1775 = vadd.f32 %v1670, %v1774
        %v1776 = vpop.f32.mrb[0].mxu0
        %1777 = vmatprep.mubr.f32.mxu0 0.0
        %1778 = vmatmul.mubr.f32.gmra.mrb[0].mxu0 %v1573
        %v1779 = vpop.f32.mrb[0].mxu0
        %v1780 = vadd.f32 %v1675, %v1779
        %v1781 = vpop.f32.mrb[0].mxu0
        %1782 = vmatprep.mubr.f32.mxu0 0.0
        %1783 = vmatmul.mubr.f32.gmra.mrb[0].mxu0 %v1576
        %v1784 = vpop.f32.mrb[0].mxu0
        %v1785 = vadd.f32 %v1680, %v1784
        %v1786 = vpop.f32.mrb[0].mxu0
        %1787 = vdwg.mxu0
        %v1788 = vmax.f32 %v1522, %v1750
        %v1789 = vmax.f32 %v1523, %v1755
        %v1790 = vmax.f32 %v1524, %v1760
        %v1791 = vmax.f32 %v1525, %v1765
        %v1792 = vmax.f32 %v1526, %v1770
        %v1793 = vmax.f32 %v1527, %v1775
        %v1794 = vmax.f32 %v1528, %v1780
        %v1795 = vmax.f32 %v1529, %v1785
        %1812 = vrot.lane.b32.xlu0 %v1530, 64
        %v1813 = vpop.permute.xlu0 %1812
        %1814 = vrot.lane.b32.xlu0 %v1531, 64
        %v1815 = vpop.permute.xlu0 %1814
        %1816 = vrot.lane.b32.xlu0 %v1532, 64
        %v1817 = vpop.permute.xlu0 %1816
        %1818 = vrot.lane.b32.xlu0 %v1533, 64
        %v1819 = vpop.permute.xlu0 %1818
        %1820 = vrot.lane.b32.xlu0 %v1534, 64
        %v1821 = vpop.permute.xlu0 %1820
        %1822 = vrot.lane.b32.xlu0 %v1535, 64
        %v1823 = vpop.permute.xlu0 %1822
        %1824 = vrot.lane.b32.xlu0 %v1536, 64
        %v1825 = vpop.permute.xlu0 %1824
        %1826 = vrot.lane.b32.xlu0 %v1537, 64
        %v1827 = vpop.permute.xlu0 %1826
        %1828 = vrot.lane.b32.xlu0 %v1538, 64
        %v1829 = vpop.permute.xlu0 %1828
        %1830 = vrot.lane.b32.xlu0 %v1539, 64
        %v1831 = vpop.permute.xlu0 %1830
        %1832 = vrot.lane.b32.xlu0 %v1540, 64
        %v1833 = vpop.permute.xlu0 %1832
        %1834 = vrot.lane.b32.xlu0 %v1541, 64
        %v1835 = vpop.permute.xlu0 %1834
        %1836 = vrot.lane.b32.xlu0 %v1542, 64
        %v1837 = vpop.permute.xlu0 %1836
        %1838 = vrot.lane.b32.xlu0 %v1543, 64
        %v1839 = vpop.permute.xlu0 %1838
        %1840 = vrot.lane.b32.xlu0 %v1544, 64
        %v1841 = vpop.permute.xlu0 %1840
        %1842 = vrot.lane.b32.xlu0 %v1545, 64
        %v1843 = vpop.permute.xlu0 %1842
        %1844 = vrot.lane.b32.xlu0 %v1546, 64
        %v1845 = vpop.permute.xlu0 %1844
        %1846 = vrot.lane.b32.xlu0 %v1547, 64
        %v1847 = vpop.permute.xlu0 %1846
        %1848 = vrot.lane.b32.xlu0 %v1548, 64
        %v1849 = vpop.permute.xlu0 %1848
        %1850 = vrot.lane.b32.xlu0 %v1549, 64
        %v1851 = vpop.permute.xlu0 %1850
        %1852 = vrot.lane.b32.xlu0 %v1550, 64
        %v1853 = vpop.permute.xlu0 %1852
        %1854 = vrot.lane.b32.xlu0 %v1551, 64
        %v1855 = vpop.permute.xlu0 %1854
        %1856 = vrot.lane.b32.xlu0 %v1552, 64
        %v1857 = vpop.permute.xlu0 %1856
        %1858 = vrot.lane.b32.xlu0 %v1553, 64
        %v1859 = vpop.permute.xlu0 %1858
        %v1860 = vsel %vm369, %v1813, %v1815
        %v1861 = vsel %vm369, %v1815, %v1817
        %v1862 = vsel %vm369, %v1819, %v1821
        %v1863 = vsel %vm369, %v1821, %v1823
        %v1864 = vsel %vm369, %v1825, %v1827
        %v1865 = vsel %vm369, %v1827, %v1829
        %v1866 = vsel %vm369, %v1831, %v1833
        %v1867 = vsel %vm369, %v1833, %v1835
        %v1868 = vsel %vm369, %v1837, %v1839
        %v1869 = vsel %vm369, %v1839, %v1841
        %v1870 = vsel %vm369, %v1843, %v1845
        %v1871 = vsel %vm369, %v1845, %v1847
        %v1872 = vsel %vm369, %v1849, %v1851
        %v1873 = vsel %vm369, %v1851, %v1853
        %v1874 = vsel %vm369, %v1855, %v1857
        %v1875 = vsel %vm369, %v1857, %v1859
        %v1892 = vsel %vm369, %v1817, 0
        %v1894 = vsel %vm369, %v1823, 0
        %v1896 = vsel %vm369, %v1829, 0
        %v1898 = vsel %vm369, %v1835, 0
        %v1900 = vsel %vm369, %v1841, 0
        %v1902 = vsel %vm369, %v1847, 0
        %v1904 = vsel %vm369, %v1853, 0
        %v1906 = vsel %vm369, %v1859, 0
        %1908 = vmatprep.subr.mxu0 0.0
        %1909 = vmatpush1.msra.mxu0 %v329
        %1910 = vmatprep.subr.mxu0 0.0
        %1911 = vmatpush1.msra.mxu0 %v330
        %1912 = vmatprep.subr.mxu0 0.0
        %1913 = vmatpush1.msra.mxu0 %v331
        %1914 = vmatprep.subr.mxu0 0.0
        %1915 = vmatpush1.msra.mxu0 %v332
        %1916 = vmatprep.subr.mxu0 0.0
        %1917 = vmatpush1.msra.mxu0 %v333
        %1918 = vmatprep.subr.mxu0 0.0
        %1919 = vmatpush1.msra.mxu0 %v334
        %1920 = vmatprep.subr.mxu0 0.0
        %1921 = vmatpush1.msra.mxu0 %v335
        %1922 = vmatprep.subr.mxu0 0.0
        %1923 = vmatpush1.msra.mxu0 %v336
        %1924 = vmatprep.subr.mxu0 0.0
        %1925 = vmatpush1.msra.mxu0 %v337
        %1926 = vmatprep.subr.mxu0 0.0
        %1927 = vmatpush1.msra.mxu0 %v338
        %1928 = vmatprep.subr.mxu0 0.0
        %1929 = vmatpush1.msra.mxu0 %v339
        %1930 = vmatprep.subr.mxu0 0.0
        %1931 = vmatpush1.msra.mxu0 %v340
        %1932 = vmatprep.subr.mxu0 0.0
        %1933 = vmatpush1.msra.mxu0 %v341
        %1934 = vmatprep.subr.mxu0 0.0
        %1935 = vmatpush1.msra.mxu0 %v342
        %1936 = vmatprep.subr.mxu0 0.0
        %1937 = vmatpush1.msra.mxu0 %v343
        %1938 = vmatprep.subr.mxu0 0.0
        %1939 = vmatpush1.msra.mxu0 %v344
        %1940 = vmatprep.subr.mxu0 0.0
        %1941 = vmatpush1.msra.mxu0 %v345
        %1942 = vmatprep.subr.mxu0 0.0
        %1943 = vmatpush1.msra.mxu0 %v346
        %1944 = vmatprep.subr.mxu0 0.0
        %1945 = vmatpush1.msra.mxu0 %v347
        %1946 = vmatprep.subr.mxu0 0.0
        %1947 = vmatpush1.msra.mxu0 %v348
        %1948 = vmatprep.subr.mxu0 0.0
        %1949 = vmatpush1.msra.mxu0 %v349
        %1950 = vmatprep.subr.mxu0 0.0
        %1951 = vmatpush1.msra.mxu0 %v350
        %1952 = vmatprep.subr.mxu0 0.0
        %1953 = vmatpush1.msra.mxu0 %v351
        %1954 = vmatprep.subr.mxu0 0.0
        %1955 = vmatpush1.msra.mxu0 %v352
        %1956 = vmatprep.subr.mxu0 0.0
        %1957 = vmatpush1.msra.mxu0 %v353
        %1958 = vmatprep.subr.mxu0 0.0
        %1959 = vmatpush1.msra.mxu0 %v354
        %1960 = vmatprep.subr.mxu0 0.0
        %1961 = vmatpush1.msra.mxu0 %v355
        %1962 = vmatprep.subr.mxu0 0.0
        %1963 = vmatpush1.msra.mxu0 %v356
        %1964 = vmatprep.subr.mxu0 0.0
        %1965 = vmatpush1.msra.mxu0 %v357
        %1966 = vmatprep.subr.mxu0 0.0
        %1967 = vmatpush1.msra.mxu0 %v358
        %1968 = vmatprep.subr.mxu0 0.0
        %1969 = vmatpush1.msra.mxu0 %v359
        %1970 = vmatprep.subr.mxu0 0.0
        %1971 = vmatpush1.msra.mxu0 %v360
        %1972 = vmatprep.mubr.f32.mxu0 %v1861
        %1973 = vmatmul.mubr.f32.gmra.mrb[0].mxu0 %v1860
        %v1974 = vpop.f32.mrb[0].mxu0
        %v1975 = vadd.f32 0.0, %v1974
        %v1976 = vpop.f32.mrb[0].mxu0
        %1977 = vmatprep.mubr.f32.mxu0 %v1863
        %1978 = vmatmul.mubr.f32.gmra.mrb[0].mxu0 %v1862
        %v1979 = vpop.f32.mrb[0].mxu0
        %v1980 = vadd.f32 0.0, %v1979
        %v1981 = vpop.f32.mrb[0].mxu0
        %1982 = vmatprep.mubr.f32.mxu0 %v1865
        %1983 = vmatmul.mubr.f32.gmra.mrb[0].mxu0 %v1864
        %v1984 = vpop.f32.mrb[0].mxu0
        %v1985 = vadd.f32 0.0, %v1984
        %v1986 = vpop.f32.mrb[0].mxu0
        %1987 = vmatprep.mubr.f32.mxu0 %v1867
        %1988 = vmatmul.mubr.f32.gmra.mrb[0].mxu0 %v1866
        %v1989 = vpop.f32.mrb[0].mxu0
        %v1990 = vadd.f32 0.0, %v1989
        %v1991 = vpop.f32.mrb[0].mxu0
        %1992 = vmatprep.mubr.f32.mxu0 %v1869
        %1993 = vmatmul.mubr.f32.gmra.mrb[0].mxu0 %v1868
        %v1994 = vpop.f32.mrb[0].mxu0
        %v1995 = vadd.f32 0.0, %v1994
        %v1996 = vpop.f32.mrb[0].mxu0
        %1997 = vmatprep.mubr.f32.mxu0 %v1871
        %1998 = vmatmul.mubr.f32.gmra.mrb[0].mxu0 %v1870
        %v1999 = vpop.f32.mrb[0].mxu0
        %v2000 = vadd.f32 0.0, %v1999
        %v2001 = vpop.f32.mrb[0].mxu0
        %2002 = vmatprep.mubr.f32.mxu0 %v1873
        %2003 = vmatmul.mubr.f32.gmra.mrb[0].mxu0 %v1872
        %v2004 = vpop.f32.mrb[0].mxu0
        %v2005 = vadd.f32 0.0, %v2004
        %v2006 = vpop.f32.mrb[0].mxu0
        %2007 = vmatprep.mubr.f32.mxu0 %v1875
        %2008 = vmatmul.mubr.f32.gmra.mrb[0].mxu0 %v1874
        %v2009 = vpop.f32.mrb[0].mxu0
        %v2010 = vadd.f32 0.0, %v2009
        %v2011 = vpop.f32.mrb[0].mxu0
        %2012 = vdwg.mxu0
        %2013 = vmatprep.subr.mxu0 0.0
        %2014 = vmatpush1.msra.mxu0 %v361
        %2015 = vmatprep.subr.mxu0 0.0
        %2016 = vmatpush1.msra.mxu0 %v362
        %2017 = vmatprep.subr.mxu0 0.0
        %2018 = vmatpush1.msra.mxu0 %v363
        %2019 = vmatprep.subr.mxu0 0.0
        %2020 = vmatpush1.msra.mxu0 %v364
        %2021 = vmatprep.subr.mxu0 0.0
        %2022 = vmatpush1.msra.mxu0 %v365
        %2023 = vmatprep.subr.mxu0 0.0
        %2024 = vmatpush1.msra.mxu0 %v366
        %2025 = vmatprep.subr.mxu0 0.0
        %2026 = vmatpush1.msra.mxu0 %v367
        %2027 = vmatprep.subr.mxu0 0.0
        %2028 = vmatpush1.msra.mxu0 %v368
        %2029 = vmatprep.subr.mxu0 0.0
        %2030 = vmatpush1.msra.mxu0 0.0
        %2031 = vmatprep.subr.mxu0 0.0
        %2032 = vmatpush1.msra.mxu0 0.0
        %2033 = vmatprep.subr.mxu0 0.0
        %2034 = vmatpush1.msra.mxu0 0.0
        %2035 = vmatprep.subr.mxu0 0.0
        %2036 = vmatpush1.msra.mxu0 0.0
        %2037 = vmatprep.subr.mxu0 0.0
        %2038 = vmatpush1.msra.mxu0 0.0
        %2039 = vmatprep.subr.mxu0 0.0
        %2040 = vmatpush1.msra.mxu0 0.0
        %2041 = vmatprep.subr.mxu0 0.0
        %2042 = vmatpush1.msra.mxu0 0.0
        %2043 = vmatprep.subr.mxu0 0.0
        %2044 = vmatpush1.msra.mxu0 0.0
        %2045 = vmatprep.subr.mxu0 0.0
        %2046 = vmatpush1.msra.mxu0 0.0
        %2047 = vmatprep.subr.mxu0 0.0
        %2048 = vmatpush1.msra.mxu0 0.0
        %2049 = vmatprep.subr.mxu0 0.0
        %2050 = vmatpush1.msra.mxu0 0.0
        %2051 = vmatprep.subr.mxu0 0.0
        %2052 = vmatpush1.msra.mxu0 0.0
        %2053 = vmatprep.subr.mxu0 0.0
        %2054 = vmatpush1.msra.mxu0 0.0
        %2055 = vmatprep.subr.mxu0 0.0
        %2056 = vmatpush1.msra.mxu0 0.0
        %2057 = vmatprep.subr.mxu0 0.0
        %2058 = vmatpush1.msra.mxu0 0.0
        %2059 = vmatprep.subr.mxu0 0.0
        %2060 = vmatpush1.msra.mxu0 0.0
        %2061 = vmatprep.subr.mxu0 0.0
        %2062 = vmatpush1.msra.mxu0 0.0
        %2063 = vmatprep.subr.mxu0 0.0
        %2064 = vmatpush1.msra.mxu0 0.0
        %2065 = vmatprep.subr.mxu0 0.0
        %2066 = vmatpush1.msra.mxu0 0.0
        %2067 = vmatprep.subr.mxu0 0.0
        %2068 = vmatpush1.msra.mxu0 0.0
        %2069 = vmatprep.subr.mxu0 0.0
        %2070 = vmatpush1.msra.mxu0 0.0
        %2071 = vmatprep.subr.mxu0 0.0
        %2072 = vmatpush1.msra.mxu0 0.0
        %2073 = vmatprep.subr.mxu0 0.0
        %2074 = vmatpush1.msra.mxu0 0.0
        %2075 = vmatprep.subr.mxu0 0.0
        %2076 = vmatpush1.msra.mxu0 0.0
        %2077 = vmatprep.mubr.f32.mxu0 0.0
        %2078 = vmatmul.mubr.f32.gmra.mrb[0].mxu0 %v1892
        %v2079 = vpop.f32.mrb[0].mxu0
        %v2080 = vadd.f32 %v1975, %v2079
        %v2081 = vpop.f32.mrb[0].mxu0
        %2082 = vmatprep.mubr.f32.mxu0 0.0
        %2083 = vmatmul.mubr.f32.gmra.mrb[0].mxu0 %v1894
        %v2084 = vpop.f32.mrb[0].mxu0
        %v2085 = vadd.f32 %v1980, %v2084
        %v2086 = vpop.f32.mrb[0].mxu0
        %2087 = vmatprep.mubr.f32.mxu0 0.0
        %2088 = vmatmul.mubr.f32.gmra.mrb[0].mxu0 %v1896
        %v2089 = vpop.f32.mrb[0].mxu0
        %v2090 = vadd.f32 %v1985, %v2089
        %v2091 = vpop.f32.mrb[0].mxu0
        %2092 = vmatprep.mubr.f32.mxu0 0.0
        %2093 = vmatmul.mubr.f32.gmra.mrb[0].mxu0 %v1898
        %v2094 = vpop.f32.mrb[0].mxu0
        %v2095 = vadd.f32 %v1990, %v2094
        %v2096 = vpop.f32.mrb[0].mxu0
        %2097 = vmatprep.mubr.f32.mxu0 0.0
        %2098 = vmatmul.mubr.f32.gmra.mrb[0].mxu0 %v1900
        %v2099 = vpop.f32.mrb[0].mxu0
        %v2100 = vadd.f32 %v1995, %v2099
        %v2101 = vpop.f32.mrb[0].mxu0
        %2102 = vmatprep.mubr.f32.mxu0 0.0
        %2103 = vmatmul.mubr.f32.gmra.mrb[0].mxu0 %v1902
        %v2104 = vpop.f32.mrb[0].mxu0
        %v2105 = vadd.f32 %v2000, %v2104
        %v2106 = vpop.f32.mrb[0].mxu0
        %2107 = vmatprep.mubr.f32.mxu0 0.0
        %2108 = vmatmul.mubr.f32.gmra.mrb[0].mxu0 %v1904
        %v2109 = vpop.f32.mrb[0].mxu0
        %v2110 = vadd.f32 %v2005, %v2109
        %v2111 = vpop.f32.mrb[0].mxu0
        %2112 = vmatprep.mubr.f32.mxu0 0.0
        %2113 = vmatmul.mubr.f32.gmra.mrb[0].mxu0 %v1906
        %v2114 = vpop.f32.mrb[0].mxu0
        %v2115 = vadd.f32 %v2010, %v2114
        %v2116 = vpop.f32.mrb[0].mxu0
        %2117 = vdwg.mxu0
        %v2118 = vmax.f32 %v1788, %v2080
        %v2119 = vmax.f32 %v1789, %v2085
        %v2120 = vmax.f32 %v1790, %v2090
        %v2121 = vmax.f32 %v1791, %v2095
        %v2122 = vmax.f32 %v1792, %v2100
        %v2123 = vmax.f32 %v1793, %v2105
        %v2124 = vmax.f32 %v1794, %v2110
        %v2125 = vmax.f32 %v1795, %v2115
        %v2126 = vld [vmem:[%s296 + $0x18] sm:$0xff]
        %v2127 = vld [vmem:[%s296 + $0x20] sm:$0xff]
        %v2128 = vld [vmem:[%s296 + $0x28] sm:$0xff]
        %v2129 = vld [vmem:[%s296 + $0x58] sm:$0xff]
        %v2130 = vld [vmem:[%s296 + $0x60] sm:$0xff]
        %v2131 = vld [vmem:[%s296 + $0x68] sm:$0xff]
        %v2132 = vld [vmem:[%s296 + $0x98] sm:$0xff]
        %v2133 = vld [vmem:[%s296 + $0xa0] sm:$0xff]
        %v2134 = vld [vmem:[%s296 + $0xa8] sm:$0xff]
        %v2135 = vld [vmem:[%s296 + $0xd8] sm:$0xff]
        %v2136 = vld [vmem:[%s296 + $0xe0] sm:$0xff]
        %v2137 = vld [vmem:[%s296 + $0xe8] sm:$0xff]
        %v2138 = vld [vmem:[%s296 + $0x118] sm:$0xff]
        %v2139 = vld [vmem:[%s296 + $0x120] sm:$0xff]
        %v2140 = vld [vmem:[%s296 + $0x128] sm:$0xff]
        %v2141 = vld [vmem:[%s296 + $0x158] sm:$0xff]
        %v2142 = vld [vmem:[%s296 + $0x160] sm:$0xff]
        %v2143 = vld [vmem:[%s296 + $0x168] sm:$0xff]
        %v2144 = vld [vmem:[%s296 + $0x198] sm:$0xff]
        %v2145 = vld [vmem:[%s296 + $0x1a0] sm:$0xff]
        %v2146 = vld [vmem:[%s296 + $0x1a8] sm:$0xff]
        %v2147 = vld [vmem:[%s296 + $0x1d8] sm:$0xff]
        %v2148 = vld [vmem:[%s296 + $0x1e0] sm:$0xff]
        %v2149 = vld [vmem:[%s296 + $0x1e8] sm:$0xff]
        %v2151 = vsel %vm369, %v2128, 0
        %v2154 = vsel %vm369, %v2131, 0
        %v2157 = vsel %vm369, %v2134, 0
        %v2160 = vsel %vm369, %v2137, 0
        %v2163 = vsel %vm369, %v2140, 0
        %v2166 = vsel %vm369, %v2143, 0
        %v2169 = vsel %vm369, %v2146, 0
        %v2172 = vsel %vm369, %v2149, 0
        %2174 = vmatprep.subr.mxu0 0.0
        %2175 = vmatpush1.msra.mxu0 %v329
        %2176 = vmatprep.subr.mxu0 0.0
        %2177 = vmatpush1.msra.mxu0 %v330
        %2178 = vmatprep.subr.mxu0 0.0
        %2179 = vmatpush1.msra.mxu0 %v331
        %2180 = vmatprep.subr.mxu0 0.0
        %2181 = vmatpush1.msra.mxu0 %v332
        %2182 = vmatprep.subr.mxu0 0.0
        %2183 = vmatpush1.msra.mxu0 %v333
        %2184 = vmatprep.subr.mxu0 0.0
        %2185 = vmatpush1.msra.mxu0 %v334
        %2186 = vmatprep.subr.mxu0 0.0
        %2187 = vmatpush1.msra.mxu0 %v335
        %2188 = vmatprep.subr.mxu0 0.0
        %2189 = vmatpush1.msra.mxu0 %v336
        %2190 = vmatprep.subr.mxu0 0.0
        %2191 = vmatpush1.msra.mxu0 %v337
        %2192 = vmatprep.subr.mxu0 0.0
        %2193 = vmatpush1.msra.mxu0 %v338
        %2194 = vmatprep.subr.mxu0 0.0
        %2195 = vmatpush1.msra.mxu0 %v339
        %2196 = vmatprep.subr.mxu0 0.0
        %2197 = vmatpush1.msra.mxu0 %v340
        %2198 = vmatprep.subr.mxu0 0.0
        %2199 = vmatpush1.msra.mxu0 %v341
        %2200 = vmatprep.subr.mxu0 0.0
        %2201 = vmatpush1.msra.mxu0 %v342
        %2202 = vmatprep.subr.mxu0 0.0
        %2203 = vmatpush1.msra.mxu0 %v343
        %2204 = vmatprep.subr.mxu0 0.0
        %2205 = vmatpush1.msra.mxu0 %v344
        %2206 = vmatprep.subr.mxu0 0.0
        %2207 = vmatpush1.msra.mxu0 %v345
        %2208 = vmatprep.subr.mxu0 0.0
        %2209 = vmatpush1.msra.mxu0 %v346
        %2210 = vmatprep.subr.mxu0 0.0
        %2211 = vmatpush1.msra.mxu0 %v347
        %2212 = vmatprep.subr.mxu0 0.0
        %2213 = vmatpush1.msra.mxu0 %v348
        %2214 = vmatprep.subr.mxu0 0.0
        %2215 = vmatpush1.msra.mxu0 %v349
        %2216 = vmatprep.subr.mxu0 0.0
        %2217 = vmatpush1.msra.mxu0 %v350
        %2218 = vmatprep.subr.mxu0 0.0
        %2219 = vmatpush1.msra.mxu0 %v351
        %2220 = vmatprep.subr.mxu0 0.0
        %2221 = vmatpush1.msra.mxu0 %v352
        %2222 = vmatprep.subr.mxu0 0.0
        %2223 = vmatpush1.msra.mxu0 %v353
        %2224 = vmatprep.subr.mxu0 0.0
        %2225 = vmatpush1.msra.mxu0 %v354
        %2226 = vmatprep.subr.mxu0 0.0
        %2227 = vmatpush1.msra.mxu0 %v355
        %2228 = vmatprep.subr.mxu0 0.0
        %2229 = vmatpush1.msra.mxu0 %v356
        %2230 = vmatprep.subr.mxu0 0.0
        %2231 = vmatpush1.msra.mxu0 %v357
        %2232 = vmatprep.subr.mxu0 0.0
        %2233 = vmatpush1.msra.mxu0 %v358
        %2234 = vmatprep.subr.mxu0 0.0
        %2235 = vmatpush1.msra.mxu0 %v359
        %2236 = vmatprep.subr.mxu0 0.0
        %2237 = vmatpush1.msra.mxu0 %v360
        %2238 = vmatprep.mubr.f32.mxu0 %v2127
        %2239 = vmatmul.mubr.f32.gmra.mrb[0].mxu0 %v2126
        %v2240 = vpop.f32.mrb[0].mxu0
        %v2241 = vadd.f32 0.0, %v2240
        %v2242 = vpop.f32.mrb[0].mxu0
        %2243 = vmatprep.mubr.f32.mxu0 %v2130
        %2244 = vmatmul.mubr.f32.gmra.mrb[0].mxu0 %v2129
        %v2245 = vpop.f32.mrb[0].mxu0
        %v2246 = vadd.f32 0.0, %v2245
        %v2247 = vpop.f32.mrb[0].mxu0
        %2248 = vmatprep.mubr.f32.mxu0 %v2133
        %2249 = vmatmul.mubr.f32.gmra.mrb[0].mxu0 %v2132
        %v2250 = vpop.f32.mrb[0].mxu0
        %v2251 = vadd.f32 0.0, %v2250
        %v2252 = vpop.f32.mrb[0].mxu0
        %2253 = vmatprep.mubr.f32.mxu0 %v2136
        %2254 = vmatmul.mubr.f32.gmra.mrb[0].mxu0 %v2135
        %v2255 = vpop.f32.mrb[0].mxu0
        %v2256 = vadd.f32 0.0, %v2255
        %v2257 = vpop.f32.mrb[0].mxu0
        %2258 = vmatprep.mubr.f32.mxu0 %v2139
        %2259 = vmatmul.mubr.f32.gmra.mrb[0].mxu0 %v2138
        %v2260 = vpop.f32.mrb[0].mxu0
        %v2261 = vadd.f32 0.0, %v2260
        %v2262 = vpop.f32.mrb[0].mxu0
        %2263 = vmatprep.mubr.f32.mxu0 %v2142
        %2264 = vmatmul.mubr.f32.gmra.mrb[0].mxu0 %v2141
        %v2265 = vpop.f32.mrb[0].mxu0
        %v2266 = vadd.f32 0.0, %v2265
        %v2267 = vpop.f32.mrb[0].mxu0
        %2268 = vmatprep.mubr.f32.mxu0 %v2145
        %2269 = vmatmul.mubr.f32.gmra.mrb[0].mxu0 %v2144
        %v2270 = vpop.f32.mrb[0].mxu0
        %v2271 = vadd.f32 0.0, %v2270
        %v2272 = vpop.f32.mrb[0].mxu0
        %2273 = vmatprep.mubr.f32.mxu0 %v2148
        %2274 = vmatmul.mubr.f32.gmra.mrb[0].mxu0 %v2147
        %v2275 = vpop.f32.mrb[0].mxu0
        %v2276 = vadd.f32 0.0, %v2275
        %v2277 = vpop.f32.mrb[0].mxu0
        %2278 = vdwg.mxu0
        %2279 = vmatprep.subr.mxu0 0.0
        %2280 = vmatpush1.msra.mxu0 %v361
        %2281 = vmatprep.subr.mxu0 0.0
        %2282 = vmatpush1.msra.mxu0 %v362
        %2283 = vmatprep.subr.mxu0 0.0
        %2284 = vmatpush1.msra.mxu0 %v363
        %2285 = vmatprep.subr.mxu0 0.0
        %2286 = vmatpush1.msra.mxu0 %v364
        %2287 = vmatprep.subr.mxu0 0.0
        %2288 = vmatpush1.msra.mxu0 %v365
        %2289 = vmatprep.subr.mxu0 0.0
        %2290 = vmatpush1.msra.mxu0 %v366
        %2291 = vmatprep.subr.mxu0 0.0
        %2292 = vmatpush1.msra.mxu0 %v367
        %2293 = vmatprep.subr.mxu0 0.0
        %2294 = vmatpush1.msra.mxu0 %v368
        %2295 = vmatprep.subr.mxu0 0.0
        %2296 = vmatpush1.msra.mxu0 0.0
        %2297 = vmatprep.subr.mxu0 0.0
        %2298 = vmatpush1.msra.mxu0 0.0
        %2299 = vmatprep.subr.mxu0 0.0
        %2300 = vmatpush1.msra.mxu0 0.0
        %2301 = vmatprep.subr.mxu0 0.0
        %2302 = vmatpush1.msra.mxu0 0.0
        %2303 = vmatprep.subr.mxu0 0.0
        %2304 = vmatpush1.msra.mxu0 0.0
        %2305 = vmatprep.subr.mxu0 0.0
        %2306 = vmatpush1.msra.mxu0 0.0
        %2307 = vmatprep.subr.mxu0 0.0
        %2308 = vmatpush1.msra.mxu0 0.0
        %2309 = vmatprep.subr.mxu0 0.0
        %2310 = vmatpush1.msra.mxu0 0.0
        %2311 = vmatprep.subr.mxu0 0.0
        %2312 = vmatpush1.msra.mxu0 0.0
        %2313 = vmatprep.subr.mxu0 0.0
        %2314 = vmatpush1.msra.mxu0 0.0
        %2315 = vmatprep.subr.mxu0 0.0
        %2316 = vmatpush1.msra.mxu0 0.0
        %2317 = vmatprep.subr.mxu0 0.0
        %2318 = vmatpush1.msra.mxu0 0.0
        %2319 = vmatprep.subr.mxu0 0.0
        %2320 = vmatpush1.msra.mxu0 0.0
        %2321 = vmatprep.subr.mxu0 0.0
        %2322 = vmatpush1.msra.mxu0 0.0
        %2323 = vmatprep.subr.mxu0 0.0
        %2324 = vmatpush1.msra.mxu0 0.0
        %2325 = vmatprep.subr.mxu0 0.0
        %2326 = vmatpush1.msra.mxu0 0.0
        %2327 = vmatprep.subr.mxu0 0.0
        %2328 = vmatpush1.msra.mxu0 0.0
        %2329 = vmatprep.subr.mxu0 0.0
        %2330 = vmatpush1.msra.mxu0 0.0
        %2331 = vmatprep.subr.mxu0 0.0
        %2332 = vmatpush1.msra.mxu0 0.0
        %2333 = vmatprep.subr.mxu0 0.0
        %2334 = vmatpush1.msra.mxu0 0.0
        %2335 = vmatprep.subr.mxu0 0.0
        %2336 = vmatpush1.msra.mxu0 0.0
        %2337 = vmatprep.subr.mxu0 0.0
        %2338 = vmatpush1.msra.mxu0 0.0
        %2339 = vmatprep.subr.mxu0 0.0
        %2340 = vmatpush1.msra.mxu0 0.0
        %2341 = vmatprep.subr.mxu0 0.0
        %2342 = vmatpush1.msra.mxu0 0.0
        %2343 = vmatprep.mubr.f32.mxu0 0.0
        %2344 = vmatmul.mubr.f32.gmra.mrb[0].mxu0 %v2151
        %v2345 = vpop.f32.mrb[0].mxu0
        %v2346 = vadd.f32 %v2241, %v2345
        %v2347 = vpop.f32.mrb[0].mxu0
        %2348 = vmatprep.mubr.f32.mxu0 0.0
        %2349 = vmatmul.mubr.f32.gmra.mrb[0].mxu0 %v2154
        %v2350 = vpop.f32.mrb[0].mxu0
        %v2351 = vadd.f32 %v2246, %v2350
        %v2352 = vpop.f32.mrb[0].mxu0
        %2353 = vmatprep.mubr.f32.mxu0 0.0
        %2354 = vmatmul.mubr.f32.gmra.mrb[0].mxu0 %v2157
        %v2355 = vpop.f32.mrb[0].mxu0
        %v2356 = vadd.f32 %v2251, %v2355
        %v2357 = vpop.f32.mrb[0].mxu0
        %2358 = vmatprep.mubr.f32.mxu0 0.0
        %2359 = vmatmul.mubr.f32.gmra.mrb[0].mxu0 %v2160
        %v2360 = vpop.f32.mrb[0].mxu0
        %v2361 = vadd.f32 %v2256, %v2360
        %v2362 = vpop.f32.mrb[0].mxu0
        %2363 = vmatprep.mubr.f32.mxu0 0.0
        %2364 = vmatmul.mubr.f32.gmra.mrb[0].mxu0 %v2163
        %v2365 = vpop.f32.mrb[0].mxu0
        %v2366 = vadd.f32 %v2261, %v2365
        %v2367 = vpop.f32.mrb[0].mxu0
        %2368 = vmatprep.mubr.f32.mxu0 0.0
        %2369 = vmatmul.mubr.f32.gmra.mrb[0].mxu0 %v2166
        %v2370 = vpop.f32.mrb[0].mxu0
        %v2371 = vadd.f32 %v2266, %v2370
        %v2372 = vpop.f32.mrb[0].mxu0
        %2373 = vmatprep.mubr.f32.mxu0 0.0
        %2374 = vmatmul.mubr.f32.gmra.mrb[0].mxu0 %v2169
        %v2375 = vpop.f32.mrb[0].mxu0
        %v2376 = vadd.f32 %v2271, %v2375
        %v2377 = vpop.f32.mrb[0].mxu0
        %2378 = vmatprep.mubr.f32.mxu0 0.0
        %2379 = vmatmul.mubr.f32.gmra.mrb[0].mxu0 %v2172
        %v2380 = vpop.f32.mrb[0].mxu0
        %v2381 = vadd.f32 %v2276, %v2380
        %v2382 = vpop.f32.mrb[0].mxu0
        %2383 = vdwg.mxu0
        %v2384 = vmax.f32 %v2118, %v2346
        %v2385 = vmax.f32 %v2119, %v2351
        %v2386 = vmax.f32 %v2120, %v2356
        %v2387 = vmax.f32 %v2121, %v2361
        %v2388 = vmax.f32 %v2122, %v2366
        %v2389 = vmax.f32 %v2123, %v2371
        %v2390 = vmax.f32 %v2124, %v2376
        %v2391 = vmax.f32 %v2125, %v2381
        %2408 = vrot.lane.b32.xlu0 %v2126, 64
        %v2409 = vpop.permute.xlu0 %2408
        %2410 = vrot.lane.b32.xlu0 %v2127, 64
        %v2411 = vpop.permute.xlu0 %2410
        %2412 = vrot.lane.b32.xlu0 %v2128, 64
        %v2413 = vpop.permute.xlu0 %2412
        %2414 = vrot.lane.b32.xlu0 %v2129, 64
        %v2415 = vpop.permute.xlu0 %2414
        %2416 = vrot.lane.b32.xlu0 %v2130, 64
        %v2417 = vpop.permute.xlu0 %2416
        %2418 = vrot.lane.b32.xlu0 %v2131, 64
        %v2419 = vpop.permute.xlu0 %2418
        %2420 = vrot.lane.b32.xlu0 %v2132, 64
        %v2421 = vpop.permute.xlu0 %2420
        %2422 = vrot.lane.b32.xlu0 %v2133, 64
        %v2423 = vpop.permute.xlu0 %2422
        %2424 = vrot.lane.b32.xlu0 %v2134, 64
        %v2425 = vpop.permute.xlu0 %2424
        %2426 = vrot.lane.b32.xlu0 %v2135, 64
        %v2427 = vpop.permute.xlu0 %2426
        %2428 = vrot.lane.b32.xlu0 %v2136, 64
        %v2429 = vpop.permute.xlu0 %2428
        %2430 = vrot.lane.b32.xlu0 %v2137, 64
        %v2431 = vpop.permute.xlu0 %2430
        %2432 = vrot.lane.b32.xlu0 %v2138, 64
        %v2433 = vpop.permute.xlu0 %2432
        %2434 = vrot.lane.b32.xlu0 %v2139, 64
        %v2435 = vpop.permute.xlu0 %2434
        %2436 = vrot.lane.b32.xlu0 %v2140, 64
        %v2437 = vpop.permute.xlu0 %2436
        %2438 = vrot.lane.b32.xlu0 %v2141, 64
        %v2439 = vpop.permute.xlu0 %2438
        %2440 = vrot.lane.b32.xlu0 %v2142, 64
        %v2441 = vpop.permute.xlu0 %2440
        %2442 = vrot.lane.b32.xlu0 %v2143, 64
        %v2443 = vpop.permute.xlu0 %2442
        %2444 = vrot.lane.b32.xlu0 %v2144, 64
        %v2445 = vpop.permute.xlu0 %2444
        %2446 = vrot.lane.b32.xlu0 %v2145, 64
        %v2447 = vpop.permute.xlu0 %2446
        %2448 = vrot.lane.b32.xlu0 %v2146, 64
        %v2449 = vpop.permute.xlu0 %2448
        %2450 = vrot.lane.b32.xlu0 %v2147, 64
        %v2451 = vpop.permute.xlu0 %2450
        %2452 = vrot.lane.b32.xlu0 %v2148, 64
        %v2453 = vpop.permute.xlu0 %2452
        %2454 = vrot.lane.b32.xlu0 %v2149, 64
        %v2455 = vpop.permute.xlu0 %2454
        %v2456 = vsel %vm369, %v2409, %v2411
        %v2457 = vsel %vm369, %v2411, %v2413
        %v2458 = vsel %vm369, %v2415, %v2417
        %v2459 = vsel %vm369, %v2417, %v2419
        %v2460 = vsel %vm369, %v2421, %v2423
        %v2461 = vsel %vm369, %v2423, %v2425
        %v2462 = vsel %vm369, %v2427, %v2429
        %v2463 = vsel %vm369, %v2429, %v2431
        %v2464 = vsel %vm369, %v2433, %v2435
        %v2465 = vsel %vm369, %v2435, %v2437
        %v2466 = vsel %vm369, %v2439, %v2441
        %v2467 = vsel %vm369, %v2441, %v2443
        %v2468 = vsel %vm369, %v2445, %v2447
        %v2469 = vsel %vm369, %v2447, %v2449
        %v2470 = vsel %vm369, %v2451, %v2453
        %v2471 = vsel %vm369, %v2453, %v2455
        %v2488 = vsel %vm369, %v2413, 0
        %v2490 = vsel %vm369, %v2419, 0
        %v2492 = vsel %vm369, %v2425, 0
        %v2494 = vsel %vm369, %v2431, 0
        %v2496 = vsel %vm369, %v2437, 0
        %v2498 = vsel %vm369, %v2443, 0
        %v2500 = vsel %vm369, %v2449, 0
        %v2502 = vsel %vm369, %v2455, 0
        %2504 = vmatprep.subr.mxu0 0.0
        %2505 = vmatpush1.msra.mxu0 %v329
        %2506 = vmatprep.subr.mxu0 0.0
        %2507 = vmatpush1.msra.mxu0 %v330
        %2508 = vmatprep.subr.mxu0 0.0
        %2509 = vmatpush1.msra.mxu0 %v331
        %2510 = vmatprep.subr.mxu0 0.0
        %2511 = vmatpush1.msra.mxu0 %v332
        %2512 = vmatprep.subr.mxu0 0.0
        %2513 = vmatpush1.msra.mxu0 %v333
        %2514 = vmatprep.subr.mxu0 0.0
        %2515 = vmatpush1.msra.mxu0 %v334
        %2516 = vmatprep.subr.mxu0 0.0
        %2517 = vmatpush1.msra.mxu0 %v335
        %2518 = vmatprep.subr.mxu0 0.0
        %2519 = vmatpush1.msra.mxu0 %v336
        %2520 = vmatprep.subr.mxu0 0.0
        %2521 = vmatpush1.msra.mxu0 %v337
        %2522 = vmatprep.subr.mxu0 0.0
        %2523 = vmatpush1.msra.mxu0 %v338
        %2524 = vmatprep.subr.mxu0 0.0
        %2525 = vmatpush1.msra.mxu0 %v339
        %2526 = vmatprep.subr.mxu0 0.0
        %2527 = vmatpush1.msra.mxu0 %v340
        %2528 = vmatprep.subr.mxu0 0.0
        %2529 = vmatpush1.msra.mxu0 %v341
        %2530 = vmatprep.subr.mxu0 0.0
        %2531 = vmatpush1.msra.mxu0 %v342
        %2532 = vmatprep.subr.mxu0 0.0
        %2533 = vmatpush1.msra.mxu0 %v343
        %2534 = vmatprep.subr.mxu0 0.0
        %2535 = vmatpush1.msra.mxu0 %v344
        %2536 = vmatprep.subr.mxu0 0.0
        %2537 = vmatpush1.msra.mxu0 %v345
        %2538 = vmatprep.subr.mxu0 0.0
        %2539 = vmatpush1.msra.mxu0 %v346
        %2540 = vmatprep.subr.mxu0 0.0
        %2541 = vmatpush1.msra.mxu0 %v347
        %2542 = vmatprep.subr.mxu0 0.0
        %2543 = vmatpush1.msra.mxu0 %v348
        %2544 = vmatprep.subr.mxu0 0.0
        %2545 = vmatpush1.msra.mxu0 %v349
        %2546 = vmatprep.subr.mxu0 0.0
        %2547 = vmatpush1.msra.mxu0 %v350
        %2548 = vmatprep.subr.mxu0 0.0
        %2549 = vmatpush1.msra.mxu0 %v351
        %2550 = vmatprep.subr.mxu0 0.0
        %2551 = vmatpush1.msra.mxu0 %v352
        %2552 = vmatprep.subr.mxu0 0.0
        %2553 = vmatpush1.msra.mxu0 %v353
        %2554 = vmatprep.subr.mxu0 0.0
        %2555 = vmatpush1.msra.mxu0 %v354
        %2556 = vmatprep.subr.mxu0 0.0
        %2557 = vmatpush1.msra.mxu0 %v355
        %2558 = vmatprep.subr.mxu0 0.0
        %2559 = vmatpush1.msra.mxu0 %v356
        %2560 = vmatprep.subr.mxu0 0.0
        %2561 = vmatpush1.msra.mxu0 %v357
        %2562 = vmatprep.subr.mxu0 0.0
        %2563 = vmatpush1.msra.mxu0 %v358
        %2564 = vmatprep.subr.mxu0 0.0
        %2565 = vmatpush1.msra.mxu0 %v359
        %2566 = vmatprep.subr.mxu0 0.0
        %2567 = vmatpush1.msra.mxu0 %v360
        %2568 = vmatprep.mubr.f32.mxu0 %v2457
        %2569 = vmatmul.mubr.f32.gmra.mrb[0].mxu0 %v2456
        %v2570 = vpop.f32.mrb[0].mxu0
        %v2571 = vadd.f32 0.0, %v2570
        %v2572 = vpop.f32.mrb[0].mxu0
        %2573 = vmatprep.mubr.f32.mxu0 %v2459
        %2574 = vmatmul.mubr.f32.gmra.mrb[0].mxu0 %v2458
        %v2575 = vpop.f32.mrb[0].mxu0
        %v2576 = vadd.f32 0.0, %v2575
        %v2577 = vpop.f32.mrb[0].mxu0
        %2578 = vmatprep.mubr.f32.mxu0 %v2461
        %2579 = vmatmul.mubr.f32.gmra.mrb[0].mxu0 %v2460
        %v2580 = vpop.f32.mrb[0].mxu0
        %v2581 = vadd.f32 0.0, %v2580
        %v2582 = vpop.f32.mrb[0].mxu0
        %2583 = vmatprep.mubr.f32.mxu0 %v2463
        %2584 = vmatmul.mubr.f32.gmra.mrb[0].mxu0 %v2462
        %v2585 = vpop.f32.mrb[0].mxu0
        %v2586 = vadd.f32 0.0, %v2585
        %v2587 = vpop.f32.mrb[0].mxu0
        %2588 = vmatprep.mubr.f32.mxu0 %v2465
        %2589 = vmatmul.mubr.f32.gmra.mrb[0].mxu0 %v2464
        %v2590 = vpop.f32.mrb[0].mxu0
        %v2591 = vadd.f32 0.0, %v2590
        %v2592 = vpop.f32.mrb[0].mxu0
        %2593 = vmatprep.mubr.f32.mxu0 %v2467
        %2594 = vmatmul.mubr.f32.gmra.mrb[0].mxu0 %v2466
        %v2595 = vpop.f32.mrb[0].mxu0
        %v2596 = vadd.f32 0.0, %v2595
        %v2597 = vpop.f32.mrb[0].mxu0
        %2598 = vmatprep.mubr.f32.mxu0 %v2469
        %2599 = vmatmul.mubr.f32.gmra.mrb[0].mxu0 %v2468
        %v2600 = vpop.f32.mrb[0].mxu0
        %v2601 = vadd.f32 0.0, %v2600
        %v2602 = vpop.f32.mrb[0].mxu0
        %2603 = vmatprep.mubr.f32.mxu0 %v2471
        %2604 = vmatmul.mubr.f32.gmra.mrb[0].mxu0 %v2470
        %v2605 = vpop.f32.mrb[0].mxu0
        %v2606 = vadd.f32 0.0, %v2605
        %v2607 = vpop.f32.mrb[0].mxu0
        %2608 = vdwg.mxu0
        %2609 = vmatprep.subr.mxu0 0.0
        %2610 = vmatpush1.msra.mxu0 %v361
        %2611 = vmatprep.subr.mxu0 0.0
        %2612 = vmatpush1.msra.mxu0 %v362
        %2613 = vmatprep.subr.mxu0 0.0
        %2614 = vmatpush1.msra.mxu0 %v363
        %2615 = vmatprep.subr.mxu0 0.0
        %2616 = vmatpush1.msra.mxu0 %v364
        %2617 = vmatprep.subr.mxu0 0.0
        %2618 = vmatpush1.msra.mxu0 %v365
        %2619 = vmatprep.subr.mxu0 0.0
        %2620 = vmatpush1.msra.mxu0 %v366
        %2621 = vmatprep.subr.mxu0 0.0
        %2622 = vmatpush1.msra.mxu0 %v367
        %2623 = vmatprep.subr.mxu0 0.0
        %2624 = vmatpush1.msra.mxu0 %v368
        %2625 = vmatprep.subr.mxu0 0.0
        %2626 = vmatpush1.msra.mxu0 0.0
        %2627 = vmatprep.subr.mxu0 0.0
        %2628 = vmatpush1.msra.mxu0 0.0
        %2629 = vmatprep.subr.mxu0 0.0
        %2630 = vmatpush1.msra.mxu0 0.0
        %2631 = vmatprep.subr.mxu0 0.0
        %2632 = vmatpush1.msra.mxu0 0.0
        %2633 = vmatprep.subr.mxu0 0.0
        %2634 = vmatpush1.msra.mxu0 0.0
        %2635 = vmatprep.subr.mxu0 0.0
        %2636 = vmatpush1.msra.mxu0 0.0
        %2637 = vmatprep.subr.mxu0 0.0
        %2638 = vmatpush1.msra.mxu0 0.0
        %2639 = vmatprep.subr.mxu0 0.0
        %2640 = vmatpush1.msra.mxu0 0.0
        %2641 = vmatprep.subr.mxu0 0.0
        %2642 = vmatpush1.msra.mxu0 0.0
        %2643 = vmatprep.subr.mxu0 0.0
        %2644 = vmatpush1.msra.mxu0 0.0
        %2645 = vmatprep.subr.mxu0 0.0
        %2646 = vmatpush1.msra.mxu0 0.0
        %2647 = vmatprep.subr.mxu0 0.0
        %2648 = vmatpush1.msra.mxu0 0.0
        %2649 = vmatprep.subr.mxu0 0.0
        %2650 = vmatpush1.msra.mxu0 0.0
        %2651 = vmatprep.subr.mxu0 0.0
        %2652 = vmatpush1.msra.mxu0 0.0
        %2653 = vmatprep.subr.mxu0 0.0
        %2654 = vmatpush1.msra.mxu0 0.0
        %2655 = vmatprep.subr.mxu0 0.0
        %2656 = vmatpush1.msra.mxu0 0.0
        %2657 = vmatprep.subr.mxu0 0.0
        %2658 = vmatpush1.msra.mxu0 0.0
        %2659 = vmatprep.subr.mxu0 0.0
        %2660 = vmatpush1.msra.mxu0 0.0
        %2661 = vmatprep.subr.mxu0 0.0
        %2662 = vmatpush1.msra.mxu0 0.0
        %2663 = vmatprep.subr.mxu0 0.0
        %2664 = vmatpush1.msra.mxu0 0.0
        %2665 = vmatprep.subr.mxu0 0.0
        %2666 = vmatpush1.msra.mxu0 0.0
        %2667 = vmatprep.subr.mxu0 0.0
        %2668 = vmatpush1.msra.mxu0 0.0
        %2669 = vmatprep.subr.mxu0 0.0
        %2670 = vmatpush1.msra.mxu0 0.0
        %2671 = vmatprep.subr.mxu0 0.0
        %2672 = vmatpush1.msra.mxu0 0.0
        %2673 = vmatprep.mubr.f32.mxu0 0.0
        %2674 = vmatmul.mubr.f32.gmra.mrb[0].mxu0 %v2488
        %v2675 = vpop.f32.mrb[0].mxu0
        %v2676 = vadd.f32 %v2571, %v2675
        %v2677 = vpop.f32.mrb[0].mxu0
        %2678 = vmatprep.mubr.f32.mxu0 0.0
        %2679 = vmatmul.mubr.f32.gmra.mrb[0].mxu0 %v2490
        %v2680 = vpop.f32.mrb[0].mxu0
        %v2681 = vadd.f32 %v2576, %v2680
        %v2682 = vpop.f32.mrb[0].mxu0
        %2683 = vmatprep.mubr.f32.mxu0 0.0
        %2684 = vmatmul.mubr.f32.gmra.mrb[0].mxu0 %v2492
        %v2685 = vpop.f32.mrb[0].mxu0
        %v2686 = vadd.f32 %v2581, %v2685
        %v2687 = vpop.f32.mrb[0].mxu0
        %2688 = vmatprep.mubr.f32.mxu0 0.0
        %2689 = vmatmul.mubr.f32.gmra.mrb[0].mxu0 %v2494
        %v2690 = vpop.f32.mrb[0].mxu0
        %v2691 = vadd.f32 %v2586, %v2690
        %v2692 = vpop.f32.mrb[0].mxu0
        %2693 = vmatprep.mubr.f32.mxu0 0.0
        %2694 = vmatmul.mubr.f32.gmra.mrb[0].mxu0 %v2496
        %v2695 = vpop.f32.mrb[0].mxu0
        %v2696 = vadd.f32 %v2591, %v2695
        %v2697 = vpop.f32.mrb[0].mxu0
        %2698 = vmatprep.mubr.f32.mxu0 0.0
        %2699 = vmatmul.mubr.f32.gmra.mrb[0].mxu0 %v2498
        %v2700 = vpop.f32.mrb[0].mxu0
        %v2701 = vadd.f32 %v2596, %v2700
        %v2702 = vpop.f32.mrb[0].mxu0
        %2703 = vmatprep.mubr.f32.mxu0 0.0
        %2704 = vmatmul.mubr.f32.gmra.mrb[0].mxu0 %v2500
        %v2705 = vpop.f32.mrb[0].mxu0
        %v2706 = vadd.f32 %v2601, %v2705
        %v2707 = vpop.f32.mrb[0].mxu0
        %2708 = vmatprep.mubr.f32.mxu0 0.0
        %2709 = vmatmul.mubr.f32.gmra.mrb[0].mxu0 %v2502
        %v2710 = vpop.f32.mrb[0].mxu0
        %v2711 = vadd.f32 %v2606, %v2710
        %v2712 = vpop.f32.mrb[0].mxu0
        %2713 = vdwg.mxu0
        %v2714 = vmax.f32 %v2384, %v2676
        %v2715 = vmax.f32 %v2385, %v2681
        %v2716 = vmax.f32 %v2386, %v2686
        %v2717 = vmax.f32 %v2387, %v2691
        %v2718 = vmax.f32 %v2388, %v2696
        %v2719 = vmax.f32 %v2389, %v2701
        %v2720 = vmax.f32 %v2390, %v2706
        %v2721 = vmax.f32 %v2391, %v2711
        %v2722 = vld [vmem:[%s296 + $0x20] sm:$0xff]
        %v2723 = vld [vmem:[%s296 + $0x28] sm:$0xff]
        %v2724 = vld [vmem:[%s296 + $0x30] sm:$0xff]
        %v2725 = vld [vmem:[%s296 + $0x60] sm:$0xff]
        %v2726 = vld [vmem:[%s296 + $0x68] sm:$0xff]
        %v2727 = vld [vmem:[%s296 + $0x70] sm:$0xff]
        %v2728 = vld [vmem:[%s296 + $0xa0] sm:$0xff]
        %v2729 = vld [vmem:[%s296 + $0xa8] sm:$0xff]
        %v2730 = vld [vmem:[%s296 + $0xb0] sm:$0xff]
        %v2731 = vld [vmem:[%s296 + $0xe0] sm:$0xff]
        %v2732 = vld [vmem:[%s296 + $0xe8] sm:$0xff]
        %v2733 = vld [vmem:[%s296 + $0xf0] sm:$0xff]
        %v2734 = vld [vmem:[%s296 + $0x120] sm:$0xff]
        %v2735 = vld [vmem:[%s296 + $0x128] sm:$0xff]
        %v2736 = vld [vmem:[%s296 + $0x130] sm:$0xff]
        %v2737 = vld [vmem:[%s296 + $0x160] sm:$0xff]
        %v2738 = vld [vmem:[%s296 + $0x168] sm:$0xff]
        %v2739 = vld [vmem:[%s296 + $0x170] sm:$0xff]
        %v2740 = vld [vmem:[%s296 + $0x1a0] sm:$0xff]
        %v2741 = vld [vmem:[%s296 + $0x1a8] sm:$0xff]
        %v2742 = vld [vmem:[%s296 + $0x1b0] sm:$0xff]
        %v2743 = vld [vmem:[%s296 + $0x1e0] sm:$0xff]
        %v2744 = vld [vmem:[%s296 + $0x1e8] sm:$0xff]
        %v2745 = vld [vmem:[%s296 + $0x1f0] sm:$0xff]
        %v2747 = vsel %vm369, %v2724, 0
        %v2750 = vsel %vm369, %v2727, 0
        %v2753 = vsel %vm369, %v2730, 0
        %v2756 = vsel %vm369, %v2733, 0
        %v2759 = vsel %vm369, %v2736, 0
        %v2762 = vsel %vm369, %v2739, 0
        %v2765 = vsel %vm369, %v2742, 0
        %v2768 = vsel %vm369, %v2745, 0
        %2770 = vmatprep.subr.mxu0 0.0
        %2771 = vmatpush1.msra.mxu0 %v329
        %2772 = vmatprep.subr.mxu0 0.0
        %2773 = vmatpush1.msra.mxu0 %v330
        %2774 = vmatprep.subr.mxu0 0.0
        %2775 = vmatpush1.msra.mxu0 %v331
        %2776 = vmatprep.subr.mxu0 0.0
        %2777 = vmatpush1.msra.mxu0 %v332
        %2778 = vmatprep.subr.mxu0 0.0
        %2779 = vmatpush1.msra.mxu0 %v333
        %2780 = vmatprep.subr.mxu0 0.0
        %2781 = vmatpush1.msra.mxu0 %v334
        %2782 = vmatprep.subr.mxu0 0.0
        %2783 = vmatpush1.msra.mxu0 %v335
        %2784 = vmatprep.subr.mxu0 0.0
        %2785 = vmatpush1.msra.mxu0 %v336
        %2786 = vmatprep.subr.mxu0 0.0
        %2787 = vmatpush1.msra.mxu0 %v337
        %2788 = vmatprep.subr.mxu0 0.0
        %2789 = vmatpush1.msra.mxu0 %v338
        %2790 = vmatprep.subr.mxu0 0.0
        %2791 = vmatpush1.msra.mxu0 %v339
        %2792 = vmatprep.subr.mxu0 0.0
        %2793 = vmatpush1.msra.mxu0 %v340
        %2794 = vmatprep.subr.mxu0 0.0
        %2795 = vmatpush1.msra.mxu0 %v341
        %2796 = vmatprep.subr.mxu0 0.0
        %2797 = vmatpush1.msra.mxu0 %v342
        %2798 = vmatprep.subr.mxu0 0.0
        %2799 = vmatpush1.msra.mxu0 %v343
        %2800 = vmatprep.subr.mxu0 0.0
        %2801 = vmatpush1.msra.mxu0 %v344
        %2802 = vmatprep.subr.mxu0 0.0
        %2803 = vmatpush1.msra.mxu0 %v345
        %2804 = vmatprep.subr.mxu0 0.0
        %2805 = vmatpush1.msra.mxu0 %v346
        %2806 = vmatprep.subr.mxu0 0.0
        %2807 = vmatpush1.msra.mxu0 %v347
        %2808 = vmatprep.subr.mxu0 0.0
        %2809 = vmatpush1.msra.mxu0 %v348
        %2810 = vmatprep.subr.mxu0 0.0
        %2811 = vmatpush1.msra.mxu0 %v349
        %2812 = vmatprep.subr.mxu0 0.0
        %2813 = vmatpush1.msra.mxu0 %v350
        %2814 = vmatprep.subr.mxu0 0.0
        %2815 = vmatpush1.msra.mxu0 %v351
        %2816 = vmatprep.subr.mxu0 0.0
        %2817 = vmatpush1.msra.mxu0 %v352
        %2818 = vmatprep.subr.mxu0 0.0
        %2819 = vmatpush1.msra.mxu0 %v353
        %2820 = vmatprep.subr.mxu0 0.0
        %2821 = vmatpush1.msra.mxu0 %v354
        %2822 = vmatprep.subr.mxu0 0.0
        %2823 = vmatpush1.msra.mxu0 %v355
        %2824 = vmatprep.subr.mxu0 0.0
        %2825 = vmatpush1.msra.mxu0 %v356
        %2826 = vmatprep.subr.mxu0 0.0
        %2827 = vmatpush1.msra.mxu0 %v357
        %2828 = vmatprep.subr.mxu0 0.0
        %2829 = vmatpush1.msra.mxu0 %v358
        %2830 = vmatprep.subr.mxu0 0.0
        %2831 = vmatpush1.msra.mxu0 %v359
        %2832 = vmatprep.subr.mxu0 0.0
        %2833 = vmatpush1.msra.mxu0 %v360
        %2834 = vmatprep.mubr.f32.mxu0 %v2723
        %2835 = vmatmul.mubr.f32.gmra.mrb[0].mxu0 %v2722
        %v2836 = vpop.f32.mrb[0].mxu0
        %v2837 = vadd.f32 0.0, %v2836
        %v2838 = vpop.f32.mrb[0].mxu0
        %2839 = vmatprep.mubr.f32.mxu0 %v2726
        %2840 = vmatmul.mubr.f32.gmra.mrb[0].mxu0 %v2725
        %v2841 = vpop.f32.mrb[0].mxu0
        %v2842 = vadd.f32 0.0, %v2841
        %v2843 = vpop.f32.mrb[0].mxu0
        %2844 = vmatprep.mubr.f32.mxu0 %v2729
        %2845 = vmatmul.mubr.f32.gmra.mrb[0].mxu0 %v2728
        %v2846 = vpop.f32.mrb[0].mxu0
        %v2847 = vadd.f32 0.0, %v2846
        %v2848 = vpop.f32.mrb[0].mxu0
        %2849 = vmatprep.mubr.f32.mxu0 %v2732
        %2850 = vmatmul.mubr.f32.gmra.mrb[0].mxu0 %v2731
        %v2851 = vpop.f32.mrb[0].mxu0
        %v2852 = vadd.f32 0.0, %v2851
        %v2853 = vpop.f32.mrb[0].mxu0
        %2854 = vmatprep.mubr.f32.mxu0 %v2735
        %2855 = vmatmul.mubr.f32.gmra.mrb[0].mxu0 %v2734
        %v2856 = vpop.f32.mrb[0].mxu0
        %v2857 = vadd.f32 0.0, %v2856
        %v2858 = vpop.f32.mrb[0].mxu0
        %2859 = vmatprep.mubr.f32.mxu0 %v2738
        %2860 = vmatmul.mubr.f32.gmra.mrb[0].mxu0 %v2737
        %v2861 = vpop.f32.mrb[0].mxu0
        %v2862 = vadd.f32 0.0, %v2861
        %v2863 = vpop.f32.mrb[0].mxu0
        %2864 = vmatprep.mubr.f32.mxu0 %v2741
        %2865 = vmatmul.mubr.f32.gmra.mrb[0].mxu0 %v2740
        %v2866 = vpop.f32.mrb[0].mxu0
        %v2867 = vadd.f32 0.0, %v2866
        %v2868 = vpop.f32.mrb[0].mxu0
        %2869 = vmatprep.mubr.f32.mxu0 %v2744
        %2870 = vmatmul.mubr.f32.gmra.mrb[0].mxu0 %v2743
        %v2871 = vpop.f32.mrb[0].mxu0
        %v2872 = vadd.f32 0.0, %v2871
        %v2873 = vpop.f32.mrb[0].mxu0
        %2874 = vdwg.mxu0
        %2875 = vmatprep.subr.mxu0 0.0
        %2876 = vmatpush1.msra.mxu0 %v361
        %2877 = vmatprep.subr.mxu0 0.0
        %2878 = vmatpush1.msra.mxu0 %v362
        %2879 = vmatprep.subr.mxu0 0.0
        %2880 = vmatpush1.msra.mxu0 %v363
        %2881 = vmatprep.subr.mxu0 0.0
        %2882 = vmatpush1.msra.mxu0 %v364
        %2883 = vmatprep.subr.mxu0 0.0
        %2884 = vmatpush1.msra.mxu0 %v365
        %2885 = vmatprep.subr.mxu0 0.0
        %2886 = vmatpush1.msra.mxu0 %v366
        %2887 = vmatprep.subr.mxu0 0.0
        %2888 = vmatpush1.msra.mxu0 %v367
        %2889 = vmatprep.subr.mxu0 0.0
        %2890 = vmatpush1.msra.mxu0 %v368
        %2891 = vmatprep.subr.mxu0 0.0
        %2892 = vmatpush1.msra.mxu0 0.0
        %2893 = vmatprep.subr.mxu0 0.0
        %2894 = vmatpush1.msra.mxu0 0.0
        %2895 = vmatprep.subr.mxu0 0.0
        %2896 = vmatpush1.msra.mxu0 0.0
        %2897 = vmatprep.subr.mxu0 0.0
        %2898 = vmatpush1.msra.mxu0 0.0
        %2899 = vmatprep.subr.mxu0 0.0
        %2900 = vmatpush1.msra.mxu0 0.0
        %2901 = vmatprep.subr.mxu0 0.0
        %2902 = vmatpush1.msra.mxu0 0.0
        %2903 = vmatprep.subr.mxu0 0.0
        %2904 = vmatpush1.msra.mxu0 0.0
        %2905 = vmatprep.subr.mxu0 0.0
        %2906 = vmatpush1.msra.mxu0 0.0
        %2907 = vmatprep.subr.mxu0 0.0
        %2908 = vmatpush1.msra.mxu0 0.0
        %2909 = vmatprep.subr.mxu0 0.0
        %2910 = vmatpush1.msra.mxu0 0.0
        %2911 = vmatprep.subr.mxu0 0.0
        %2912 = vmatpush1.msra.mxu0 0.0
        %2913 = vmatprep.subr.mxu0 0.0
        %2914 = vmatpush1.msra.mxu0 0.0
        %2915 = vmatprep.subr.mxu0 0.0
        %2916 = vmatpush1.msra.mxu0 0.0
        %2917 = vmatprep.subr.mxu0 0.0
        %2918 = vmatpush1.msra.mxu0 0.0
        %2919 = vmatprep.subr.mxu0 0.0
        %2920 = vmatpush1.msra.mxu0 0.0
        %2921 = vmatprep.subr.mxu0 0.0
        %2922 = vmatpush1.msra.mxu0 0.0
        %2923 = vmatprep.subr.mxu0 0.0
        %2924 = vmatpush1.msra.mxu0 0.0
        %2925 = vmatprep.subr.mxu0 0.0
        %2926 = vmatpush1.msra.mxu0 0.0
        %2927 = vmatprep.subr.mxu0 0.0
        %2928 = vmatpush1.msra.mxu0 0.0
        %2929 = vmatprep.subr.mxu0 0.0
        %2930 = vmatpush1.msra.mxu0 0.0
        %2931 = vmatprep.subr.mxu0 0.0
        %2932 = vmatpush1.msra.mxu0 0.0
        %2933 = vmatprep.subr.mxu0 0.0
        %2934 = vmatpush1.msra.mxu0 0.0
        %2935 = vmatprep.subr.mxu0 0.0
        %2936 = vmatpush1.msra.mxu0 0.0
        %2937 = vmatprep.subr.mxu0 0.0
        %2938 = vmatpush1.msra.mxu0 0.0
        %2939 = vmatprep.mubr.f32.mxu0 0.0
        %2940 = vmatmul.mubr.f32.gmra.mrb[0].mxu0 %v2747
        %v2941 = vpop.f32.mrb[0].mxu0
        %v2942 = vadd.f32 %v2837, %v2941
        %v2943 = vpop.f32.mrb[0].mxu0
        %2944 = vmatprep.mubr.f32.mxu0 0.0
        %2945 = vmatmul.mubr.f32.gmra.mrb[0].mxu0 %v2750
        %v2946 = vpop.f32.mrb[0].mxu0
        %v2947 = vadd.f32 %v2842, %v2946
        %v2948 = vpop.f32.mrb[0].mxu0
        %2949 = vmatprep.mubr.f32.mxu0 0.0
        %2950 = vmatmul.mubr.f32.gmra.mrb[0].mxu0 %v2753
        %v2951 = vpop.f32.mrb[0].mxu0
        %v2952 = vadd.f32 %v2847, %v2951
        %v2953 = vpop.f32.mrb[0].mxu0
        %2954 = vmatprep.mubr.f32.mxu0 0.0
        %2955 = vmatmul.mubr.f32.gmra.mrb[0].mxu0 %v2756
        %v2956 = vpop.f32.mrb[0].mxu0
        %v2957 = vadd.f32 %v2852, %v2956
        %v2958 = vpop.f32.mrb[0].mxu0
        %2959 = vmatprep.mubr.f32.mxu0 0.0
        %2960 = vmatmul.mubr.f32.gmra.mrb[0].mxu0 %v2759
        %v2961 = vpop.f32.mrb[0].mxu0
        %v2962 = vadd.f32 %v2857, %v2961
        %v2963 = vpop.f32.mrb[0].mxu0
        %2964 = vmatprep.mubr.f32.mxu0 0.0
        %2965 = vmatmul.mubr.f32.gmra.mrb[0].mxu0 %v2762
        %v2966 = vpop.f32.mrb[0].mxu0
        %v2967 = vadd.f32 %v2862, %v2966
        %v2968 = vpop.f32.mrb[0].mxu0
        %2969 = vmatprep.mubr.f32.mxu0 0.0
        %2970 = vmatmul.mubr.f32.gmra.mrb[0].mxu0 %v2765
        %v2971 = vpop.f32.mrb[0].mxu0
        %v2972 = vadd.f32 %v2867, %v2971
        %v2973 = vpop.f32.mrb[0].mxu0
        %2974 = vmatprep.mubr.f32.mxu0 0.0
        %2975 = vmatmul.mubr.f32.gmra.mrb[0].mxu0 %v2768
        %v2976 = vpop.f32.mrb[0].mxu0
        %v2977 = vadd.f32 %v2872, %v2976
        %v2978 = vpop.f32.mrb[0].mxu0
        %2979 = vdwg.mxu0
        %v2980 = vmax.f32 %v2714, %v2942
        %v2981 = vmax.f32 %v2715, %v2947
        %v2982 = vmax.f32 %v2716, %v2952
        %v2983 = vmax.f32 %v2717, %v2957
        %v2984 = vmax.f32 %v2718, %v2962
        %v2985 = vmax.f32 %v2719, %v2967
        %v2986 = vmax.f32 %v2720, %v2972
        %v2987 = vmax.f32 %v2721, %v2977
        %3004 = vrot.lane.b32.xlu0 %v2722, 64
        %v3005 = vpop.permute.xlu0 %3004
        %3006 = vrot.lane.b32.xlu0 %v2723, 64
        %v3007 = vpop.permute.xlu0 %3006
        %3008 = vrot.lane.b32.xlu0 %v2724, 64
        %v3009 = vpop.permute.xlu0 %3008
        %3010 = vrot.lane.b32.xlu0 %v2725, 64
        %v3011 = vpop.permute.xlu0 %3010
        %3012 = vrot.lane.b32.xlu0 %v2726, 64
        %v3013 = vpop.permute.xlu0 %3012
        %3014 = vrot.lane.b32.xlu0 %v2727, 64
        %v3015 = vpop.permute.xlu0 %3014
        %3016 = vrot.lane.b32.xlu0 %v2728, 64
        %v3017 = vpop.permute.xlu0 %3016
        %3018 = vrot.lane.b32.xlu0 %v2729, 64
        %v3019 = vpop.permute.xlu0 %3018
        %3020 = vrot.lane.b32.xlu0 %v2730, 64
        %v3021 = vpop.permute.xlu0 %3020
        %3022 = vrot.lane.b32.xlu0 %v2731, 64
        %v3023 = vpop.permute.xlu0 %3022
        %3024 = vrot.lane.b32.xlu0 %v2732, 64
        %v3025 = vpop.permute.xlu0 %3024
        %3026 = vrot.lane.b32.xlu0 %v2733, 64
        %v3027 = vpop.permute.xlu0 %3026
        %3028 = vrot.lane.b32.xlu0 %v2734, 64
        %v3029 = vpop.permute.xlu0 %3028
        %3030 = vrot.lane.b32.xlu0 %v2735, 64
        %v3031 = vpop.permute.xlu0 %3030
        %3032 = vrot.lane.b32.xlu0 %v2736, 64
        %v3033 = vpop.permute.xlu0 %3032
        %3034 = vrot.lane.b32.xlu0 %v2737, 64
        %v3035 = vpop.permute.xlu0 %3034
        %3036 = vrot.lane.b32.xlu0 %v2738, 64
        %v3037 = vpop.permute.xlu0 %3036
        %3038 = vrot.lane.b32.xlu0 %v2739, 64
        %v3039 = vpop.permute.xlu0 %3038
        %3040 = vrot.lane.b32.xlu0 %v2740, 64
        %v3041 = vpop.permute.xlu0 %3040
        %3042 = vrot.lane.b32.xlu0 %v2741, 64
        %v3043 = vpop.permute.xlu0 %3042
        %3044 = vrot.lane.b32.xlu0 %v2742, 64
        %v3045 = vpop.permute.xlu0 %3044
        %3046 = vrot.lane.b32.xlu0 %v2743, 64
        %v3047 = vpop.permute.xlu0 %3046
        %3048 = vrot.lane.b32.xlu0 %v2744, 64
        %v3049 = vpop.permute.xlu0 %3048
        %3050 = vrot.lane.b32.xlu0 %v2745, 64
        %v3051 = vpop.permute.xlu0 %3050
        %v3052 = vsel %vm369, %v3005, %v3007
        %v3053 = vsel %vm369, %v3007, %v3009
        %v3054 = vsel %vm369, %v3011, %v3013
        %v3055 = vsel %vm369, %v3013, %v3015
        %v3056 = vsel %vm369, %v3017, %v3019
        %v3057 = vsel %vm369, %v3019, %v3021
        %v3058 = vsel %vm369, %v3023, %v3025
        %v3059 = vsel %vm369, %v3025, %v3027
        %v3060 = vsel %vm369, %v3029, %v3031
        %v3061 = vsel %vm369, %v3031, %v3033
        %v3062 = vsel %vm369, %v3035, %v3037
        %v3063 = vsel %vm369, %v3037, %v3039
        %v3064 = vsel %vm369, %v3041, %v3043
        %v3065 = vsel %vm369, %v3043, %v3045
        %v3066 = vsel %vm369, %v3047, %v3049
        %v3067 = vsel %vm369, %v3049, %v3051
        %v3084 = vsel %vm369, %v3009, 0
        %v3086 = vsel %vm369, %v3015, 0
        %v3088 = vsel %vm369, %v3021, 0
        %v3090 = vsel %vm369, %v3027, 0
        %v3092 = vsel %vm369, %v3033, 0
        %v3094 = vsel %vm369, %v3039, 0
        %v3096 = vsel %vm369, %v3045, 0
        %v3098 = vsel %vm369, %v3051, 0
        %3100 = vmatprep.subr.mxu0 0.0
        %3101 = vmatpush1.msra.mxu0 %v329
        %3102 = vmatprep.subr.mxu0 0.0
        %3103 = vmatpush1.msra.mxu0 %v330
        %3104 = vmatprep.subr.mxu0 0.0
        %3105 = vmatpush1.msra.mxu0 %v331
        %3106 = vmatprep.subr.mxu0 0.0
        %3107 = vmatpush1.msra.mxu0 %v332
        %3108 = vmatprep.subr.mxu0 0.0
        %3109 = vmatpush1.msra.mxu0 %v333
        %3110 = vmatprep.subr.mxu0 0.0
        %3111 = vmatpush1.msra.mxu0 %v334
        %3112 = vmatprep.subr.mxu0 0.0
        %3113 = vmatpush1.msra.mxu0 %v335
        %3114 = vmatprep.subr.mxu0 0.0
        %3115 = vmatpush1.msra.mxu0 %v336
        %3116 = vmatprep.subr.mxu0 0.0
        %3117 = vmatpush1.msra.mxu0 %v337
        %3118 = vmatprep.subr.mxu0 0.0
        %3119 = vmatpush1.msra.mxu0 %v338
        %3120 = vmatprep.subr.mxu0 0.0
        %3121 = vmatpush1.msra.mxu0 %v339
        %3122 = vmatprep.subr.mxu0 0.0
        %3123 = vmatpush1.msra.mxu0 %v340
        %3124 = vmatprep.subr.mxu0 0.0
        %3125 = vmatpush1.msra.mxu0 %v341
        %3126 = vmatprep.subr.mxu0 0.0
        %3127 = vmatpush1.msra.mxu0 %v342
        %3128 = vmatprep.subr.mxu0 0.0
        %3129 = vmatpush1.msra.mxu0 %v343
        %3130 = vmatprep.subr.mxu0 0.0
        %3131 = vmatpush1.msra.mxu0 %v344
        %3132 = vmatprep.subr.mxu0 0.0
        %3133 = vmatpush1.msra.mxu0 %v345
        %3134 = vmatprep.subr.mxu0 0.0
        %3135 = vmatpush1.msra.mxu0 %v346
        %3136 = vmatprep.subr.mxu0 0.0
        %3137 = vmatpush1.msra.mxu0 %v347
        %3138 = vmatprep.subr.mxu0 0.0
        %3139 = vmatpush1.msra.mxu0 %v348
        %3140 = vmatprep.subr.mxu0 0.0
        %3141 = vmatpush1.msra.mxu0 %v349
        %3142 = vmatprep.subr.mxu0 0.0
        %3143 = vmatpush1.msra.mxu0 %v350
        %3144 = vmatprep.subr.mxu0 0.0
        %3145 = vmatpush1.msra.mxu0 %v351
        %3146 = vmatprep.subr.mxu0 0.0
        %3147 = vmatpush1.msra.mxu0 %v352
        %3148 = vmatprep.subr.mxu0 0.0
        %3149 = vmatpush1.msra.mxu0 %v353
        %3150 = vmatprep.subr.mxu0 0.0
        %3151 = vmatpush1.msra.mxu0 %v354
        %3152 = vmatprep.subr.mxu0 0.0
        %3153 = vmatpush1.msra.mxu0 %v355
        %3154 = vmatprep.subr.mxu0 0.0
        %3155 = vmatpush1.msra.mxu0 %v356
        %3156 = vmatprep.subr.mxu0 0.0
        %3157 = vmatpush1.msra.mxu0 %v357
        %3158 = vmatprep.subr.mxu0 0.0
        %3159 = vmatpush1.msra.mxu0 %v358
        %3160 = vmatprep.subr.mxu0 0.0
        %3161 = vmatpush1.msra.mxu0 %v359
        %3162 = vmatprep.subr.mxu0 0.0
        %3163 = vmatpush1.msra.mxu0 %v360
        %3164 = vmatprep.mubr.f32.mxu0 %v3053
        %3165 = vmatmul.mubr.f32.gmra.mrb[0].mxu0 %v3052
        %v3166 = vpop.f32.mrb[0].mxu0
        %v3167 = vadd.f32 0.0, %v3166
        %v3168 = vpop.f32.mrb[0].mxu0
        %3169 = vmatprep.mubr.f32.mxu0 %v3055
        %3170 = vmatmul.mubr.f32.gmra.mrb[0].mxu0 %v3054
        %v3171 = vpop.f32.mrb[0].mxu0
        %v3172 = vadd.f32 0.0, %v3171
        %v3173 = vpop.f32.mrb[0].mxu0
        %3174 = vmatprep.mubr.f32.mxu0 %v3057
        %3175 = vmatmul.mubr.f32.gmra.mrb[0].mxu0 %v3056
        %v3176 = vpop.f32.mrb[0].mxu0
        %v3177 = vadd.f32 0.0, %v3176
        %v3178 = vpop.f32.mrb[0].mxu0
        %3179 = vmatprep.mubr.f32.mxu0 %v3059
        %3180 = vmatmul.mubr.f32.gmra.mrb[0].mxu0 %v3058
        %v3181 = vpop.f32.mrb[0].mxu0
        %v3182 = vadd.f32 0.0, %v3181
        %v3183 = vpop.f32.mrb[0].mxu0
        %3184 = vmatprep.mubr.f32.mxu0 %v3061
        %3185 = vmatmul.mubr.f32.gmra.mrb[0].mxu0 %v3060
        %v3186 = vpop.f32.mrb[0].mxu0
        %v3187 = vadd.f32 0.0, %v3186
        %v3188 = vpop.f32.mrb[0].mxu0
        %3189 = vmatprep.mubr.f32.mxu0 %v3063
        %3190 = vmatmul.mubr.f32.gmra.mrb[0].mxu0 %v3062
        %v3191 = vpop.f32.mrb[0].mxu0
        %v3192 = vadd.f32 0.0, %v3191
        %v3193 = vpop.f32.mrb[0].mxu0
        %3194 = vmatprep.mubr.f32.mxu0 %v3065
        %3195 = vmatmul.mubr.f32.gmra.mrb[0].mxu0 %v3064
        %v3196 = vpop.f32.mrb[0].mxu0
        %v3197 = vadd.f32 0.0, %v3196
        %v3198 = vpop.f32.mrb[0].mxu0
        %3199 = vmatprep.mubr.f32.mxu0 %v3067
        %3200 = vmatmul.mubr.f32.gmra.mrb[0].mxu0 %v3066
        %v3201 = vpop.f32.mrb[0].mxu0
        %v3202 = vadd.f32 0.0, %v3201
        %v3203 = vpop.f32.mrb[0].mxu0
        %3204 = vdwg.mxu0
        %3205 = vmatprep.subr.mxu0 0.0
        %3206 = vmatpush1.msra.mxu0 %v361
        %3207 = vmatprep.subr.mxu0 0.0
        %3208 = vmatpush1.msra.mxu0 %v362
        %3209 = vmatprep.subr.mxu0 0.0
        %3210 = vmatpush1.msra.mxu0 %v363
        %3211 = vmatprep.subr.mxu0 0.0
        %3212 = vmatpush1.msra.mxu0 %v364
        %3213 = vmatprep.subr.mxu0 0.0
        %3214 = vmatpush1.msra.mxu0 %v365
        %3215 = vmatprep.subr.mxu0 0.0
        %3216 = vmatpush1.msra.mxu0 %v366
        %3217 = vmatprep.subr.mxu0 0.0
        %3218 = vmatpush1.msra.mxu0 %v367
        %3219 = vmatprep.subr.mxu0 0.0
        %3220 = vmatpush1.msra.mxu0 %v368
        %3221 = vmatprep.subr.mxu0 0.0
        %3222 = vmatpush1.msra.mxu0 0.0
        %3223 = vmatprep.subr.mxu0 0.0
        %3224 = vmatpush1.msra.mxu0 0.0
        %3225 = vmatprep.subr.mxu0 0.0
        %3226 = vmatpush1.msra.mxu0 0.0
        %3227 = vmatprep.subr.mxu0 0.0
        %3228 = vmatpush1.msra.mxu0 0.0
        %3229 = vmatprep.subr.mxu0 0.0
        %3230 = vmatpush1.msra.mxu0 0.0
        %3231 = vmatprep.subr.mxu0 0.0
        %3232 = vmatpush1.msra.mxu0 0.0
        %3233 = vmatprep.subr.mxu0 0.0
        %3234 = vmatpush1.msra.mxu0 0.0
        %3235 = vmatprep.subr.mxu0 0.0
        %3236 = vmatpush1.msra.mxu0 0.0
        %3237 = vmatprep.subr.mxu0 0.0
        %3238 = vmatpush1.msra.mxu0 0.0
        %3239 = vmatprep.subr.mxu0 0.0
        %3240 = vmatpush1.msra.mxu0 0.0
        %3241 = vmatprep.subr.mxu0 0.0
        %3242 = vmatpush1.msra.mxu0 0.0
        %3243 = vmatprep.subr.mxu0 0.0
        %3244 = vmatpush1.msra.mxu0 0.0
        %3245 = vmatprep.subr.mxu0 0.0
        %3246 = vmatpush1.msra.mxu0 0.0
        %3247 = vmatprep.subr.mxu0 0.0
        %3248 = vmatpush1.msra.mxu0 0.0
        %3249 = vmatprep.subr.mxu0 0.0
        %3250 = vmatpush1.msra.mxu0 0.0
        %3251 = vmatprep.subr.mxu0 0.0
        %3252 = vmatpush1.msra.mxu0 0.0
        %3253 = vmatprep.subr.mxu0 0.0
        %3254 = vmatpush1.msra.mxu0 0.0
        %3255 = vmatprep.subr.mxu0 0.0
        %3256 = vmatpush1.msra.mxu0 0.0
        %3257 = vmatprep.subr.mxu0 0.0
        %3258 = vmatpush1.msra.mxu0 0.0
        %3259 = vmatprep.subr.mxu0 0.0
        %3260 = vmatpush1.msra.mxu0 0.0
        %3261 = vmatprep.subr.mxu0 0.0
        %3262 = vmatpush1.msra.mxu0 0.0
        %3263 = vmatprep.subr.mxu0 0.0
        %3264 = vmatpush1.msra.mxu0 0.0
        %3265 = vmatprep.subr.mxu0 0.0
        %3266 = vmatpush1.msra.mxu0 0.0
        %3267 = vmatprep.subr.mxu0 0.0
        %3268 = vmatpush1.msra.mxu0 0.0
        %3269 = vmatprep.mubr.f32.mxu0 0.0
        %3270 = vmatmul.mubr.f32.gmra.mrb[0].mxu0 %v3084
        %v3271 = vpop.f32.mrb[0].mxu0
        %v3272 = vadd.f32 %v3167, %v3271
        %v3273 = vpop.f32.mrb[0].mxu0
        %3274 = vmatprep.mubr.f32.mxu0 0.0
        %3275 = vmatmul.mubr.f32.gmra.mrb[0].mxu0 %v3086
        %v3276 = vpop.f32.mrb[0].mxu0
        %v3277 = vadd.f32 %v3172, %v3276
        %v3278 = vpop.f32.mrb[0].mxu0
        %3279 = vmatprep.mubr.f32.mxu0 0.0
        %3280 = vmatmul.mubr.f32.gmra.mrb[0].mxu0 %v3088
        %v3281 = vpop.f32.mrb[0].mxu0
        %v3282 = vadd.f32 %v3177, %v3281
        %v3283 = vpop.f32.mrb[0].mxu0
        %3284 = vmatprep.mubr.f32.mxu0 0.0
        %3285 = vmatmul.mubr.f32.gmra.mrb[0].mxu0 %v3090
        %v3286 = vpop.f32.mrb[0].mxu0
        %v3287 = vadd.f32 %v3182, %v3286
        %v3288 = vpop.f32.mrb[0].mxu0
        %3289 = vmatprep.mubr.f32.mxu0 0.0
        %3290 = vmatmul.mubr.f32.gmra.mrb[0].mxu0 %v3092
        %v3291 = vpop.f32.mrb[0].mxu0
        %v3292 = vadd.f32 %v3187, %v3291
        %v3293 = vpop.f32.mrb[0].mxu0
        %3294 = vmatprep.mubr.f32.mxu0 0.0
        %3295 = vmatmul.mubr.f32.gmra.mrb[0].mxu0 %v3094
        %v3296 = vpop.f32.mrb[0].mxu0
        %v3297 = vadd.f32 %v3192, %v3296
        %v3298 = vpop.f32.mrb[0].mxu0
        %3299 = vmatprep.mubr.f32.mxu0 0.0
        %3300 = vmatmul.mubr.f32.gmra.mrb[0].mxu0 %v3096
        %v3301 = vpop.f32.mrb[0].mxu0
        %v3302 = vadd.f32 %v3197, %v3301
        %v3303 = vpop.f32.mrb[0].mxu0
        %3304 = vmatprep.mubr.f32.mxu0 0.0
        %3305 = vmatmul.mubr.f32.gmra.mrb[0].mxu0 %v3098
        %v3306 = vpop.f32.mrb[0].mxu0
        %v3307 = vadd.f32 %v3202, %v3306
        %v3308 = vpop.f32.mrb[0].mxu0
        %3309 = vdwg.mxu0
        %v3310 = vmax.f32 %v2980, %v3272
        %v3311 = vmax.f32 %v2981, %v3277
        %v3312 = vmax.f32 %v2982, %v3282
        %v3313 = vmax.f32 %v2983, %v3287
        %v3314 = vmax.f32 %v2984, %v3292
        %v3315 = vmax.f32 %v2985, %v3297
        %v3316 = vmax.f32 %v2986, %v3302
        %v3317 = vmax.f32 %v2987, %v3307
        %v3318 = vld [vmem:[%s296 + $0x28] sm:$0xff]
        %v3319 = vld [vmem:[%s296 + $0x30] sm:$0xff]
        %v3320 = vld [vmem:[%s296 + $0x38] sm:$0xff]
        %v3321 = vld [vmem:[%s296 + $0x68] sm:$0xff]
        %v3322 = vld [vmem:[%s296 + $0x70] sm:$0xff]
        %v3323 = vld [vmem:[%s296 + $0x78] sm:$0xff]
        %v3324 = vld [vmem:[%s296 + $0xa8] sm:$0xff]
        %v3325 = vld [vmem:[%s296 + $0xb0] sm:$0xff]
        %v3326 = vld [vmem:[%s296 + $0xb8] sm:$0xff]
        %v3327 = vld [vmem:[%s296 + $0xe8] sm:$0xff]
        %v3328 = vld [vmem:[%s296 + $0xf0] sm:$0xff]
        %v3329 = vld [vmem:[%s296 + $0xf8] sm:$0xff]
        %v3330 = vld [vmem:[%s296 + $0x128] sm:$0xff]
        %v3331 = vld [vmem:[%s296 + $0x130] sm:$0xff]
        %v3332 = vld [vmem:[%s296 + $0x138] sm:$0xff]
        %v3333 = vld [vmem:[%s296 + $0x168] sm:$0xff]
        %v3334 = vld [vmem:[%s296 + $0x170] sm:$0xff]
        %v3335 = vld [vmem:[%s296 + $0x178] sm:$0xff]
        %v3336 = vld [vmem:[%s296 + $0x1a8] sm:$0xff]
        %v3337 = vld [vmem:[%s296 + $0x1b0] sm:$0xff]
        %v3338 = vld [vmem:[%s296 + $0x1b8] sm:$0xff]
        %v3339 = vld [vmem:[%s296 + $0x1e8] sm:$0xff]
        %v3340 = vld [vmem:[%s296 + $0x1f0] sm:$0xff]
        %v3341 = vld [vmem:[%s296 + $0x1f8] sm:$0xff]
        %v3343 = vsel %vm369, %v3320, 0
        %v3346 = vsel %vm369, %v3323, 0
        %v3349 = vsel %vm369, %v3326, 0
        %v3352 = vsel %vm369, %v3329, 0
        %v3355 = vsel %vm369, %v3332, 0
        %v3358 = vsel %vm369, %v3335, 0
        %v3361 = vsel %vm369, %v3338, 0
        %v3364 = vsel %vm369, %v3341, 0
        %3366 = vmatprep.subr.mxu0 0.0
        %3367 = vmatpush1.msra.mxu0 %v329
        %3368 = vmatprep.subr.mxu0 0.0
        %3369 = vmatpush1.msra.mxu0 %v330
        %3370 = vmatprep.subr.mxu0 0.0
        %3371 = vmatpush1.msra.mxu0 %v331
        %3372 = vmatprep.subr.mxu0 0.0
        %3373 = vmatpush1.msra.mxu0 %v332
        %3374 = vmatprep.subr.mxu0 0.0
        %3375 = vmatpush1.msra.mxu0 %v333
        %3376 = vmatprep.subr.mxu0 0.0
        %3377 = vmatpush1.msra.mxu0 %v334
        %3378 = vmatprep.subr.mxu0 0.0
        %3379 = vmatpush1.msra.mxu0 %v335
        %3380 = vmatprep.subr.mxu0 0.0
        %3381 = vmatpush1.msra.mxu0 %v336
        %3382 = vmatprep.subr.mxu0 0.0
        %3383 = vmatpush1.msra.mxu0 %v337
        %3384 = vmatprep.subr.mxu0 0.0
        %3385 = vmatpush1.msra.mxu0 %v338
        %3386 = vmatprep.subr.mxu0 0.0
        %3387 = vmatpush1.msra.mxu0 %v339
        %3388 = vmatprep.subr.mxu0 0.0
        %3389 = vmatpush1.msra.mxu0 %v340
        %3390 = vmatprep.subr.mxu0 0.0
        %3391 = vmatpush1.msra.mxu0 %v341
        %3392 = vmatprep.subr.mxu0 0.0
        %3393 = vmatpush1.msra.mxu0 %v342
        %3394 = vmatprep.subr.mxu0 0.0
        %3395 = vmatpush1.msra.mxu0 %v343
        %3396 = vmatprep.subr.mxu0 0.0
        %3397 = vmatpush1.msra.mxu0 %v344
        %3398 = vmatprep.subr.mxu0 0.0
        %3399 = vmatpush1.msra.mxu0 %v345
        %3400 = vmatprep.subr.mxu0 0.0
        %3401 = vmatpush1.msra.mxu0 %v346
        %3402 = vmatprep.subr.mxu0 0.0
        %3403 = vmatpush1.msra.mxu0 %v347
        %3404 = vmatprep.subr.mxu0 0.0
        %3405 = vmatpush1.msra.mxu0 %v348
        %3406 = vmatprep.subr.mxu0 0.0
        %3407 = vmatpush1.msra.mxu0 %v349
        %3408 = vmatprep.subr.mxu0 0.0
        %3409 = vmatpush1.msra.mxu0 %v350
        %3410 = vmatprep.subr.mxu0 0.0
        %3411 = vmatpush1.msra.mxu0 %v351
        %3412 = vmatprep.subr.mxu0 0.0
        %3413 = vmatpush1.msra.mxu0 %v352
        %3414 = vmatprep.subr.mxu0 0.0
        %3415 = vmatpush1.msra.mxu0 %v353
        %3416 = vmatprep.subr.mxu0 0.0
        %3417 = vmatpush1.msra.mxu0 %v354
        %3418 = vmatprep.subr.mxu0 0.0
        %3419 = vmatpush1.msra.mxu0 %v355
        %3420 = vmatprep.subr.mxu0 0.0
        %3421 = vmatpush1.msra.mxu0 %v356
        %3422 = vmatprep.subr.mxu0 0.0
        %3423 = vmatpush1.msra.mxu0 %v357
        %3424 = vmatprep.subr.mxu0 0.0
        %3425 = vmatpush1.msra.mxu0 %v358
        %3426 = vmatprep.subr.mxu0 0.0
        %3427 = vmatpush1.msra.mxu0 %v359
        %3428 = vmatprep.subr.mxu0 0.0
        %3429 = vmatpush1.msra.mxu0 %v360
        %3430 = vmatprep.mubr.f32.mxu0 %v3319
        %3431 = vmatmul.mubr.f32.gmra.mrb[0].mxu0 %v3318
        %v3432 = vpop.f32.mrb[0].mxu0
        %v3433 = vadd.f32 0.0, %v3432
        %v3434 = vpop.f32.mrb[0].mxu0
        %3435 = vmatprep.mubr.f32.mxu0 %v3322
        %3436 = vmatmul.mubr.f32.gmra.mrb[0].mxu0 %v3321
        %v3437 = vpop.f32.mrb[0].mxu0
        %v3438 = vadd.f32 0.0, %v3437
        %v3439 = vpop.f32.mrb[0].mxu0
        %3440 = vmatprep.mubr.f32.mxu0 %v3325
        %3441 = vmatmul.mubr.f32.gmra.mrb[0].mxu0 %v3324
        %v3442 = vpop.f32.mrb[0].mxu0
        %v3443 = vadd.f32 0.0, %v3442
        %v3444 = vpop.f32.mrb[0].mxu0
        %3445 = vmatprep.mubr.f32.mxu0 %v3328
        %3446 = vmatmul.mubr.f32.gmra.mrb[0].mxu0 %v3327
        %v3447 = vpop.f32.mrb[0].mxu0
        %v3448 = vadd.f32 0.0, %v3447
        %v3449 = vpop.f32.mrb[0].mxu0
        %3450 = vmatprep.mubr.f32.mxu0 %v3331
        %3451 = vmatmul.mubr.f32.gmra.mrb[0].mxu0 %v3330
        %v3452 = vpop.f32.mrb[0].mxu0
        %v3453 = vadd.f32 0.0, %v3452
        %v3454 = vpop.f32.mrb[0].mxu0
        %3455 = vmatprep.mubr.f32.mxu0 %v3334
        %3456 = vmatmul.mubr.f32.gmra.mrb[0].mxu0 %v3333
        %v3457 = vpop.f32.mrb[0].mxu0
        %v3458 = vadd.f32 0.0, %v3457
        %v3459 = vpop.f32.mrb[0].mxu0
        %3460 = vmatprep.mubr.f32.mxu0 %v3337
        %3461 = vmatmul.mubr.f32.gmra.mrb[0].mxu0 %v3336
        %v3462 = vpop.f32.mrb[0].mxu0
        %v3463 = vadd.f32 0.0, %v3462
        %v3464 = vpop.f32.mrb[0].mxu0
        %3465 = vmatprep.mubr.f32.mxu0 %v3340
        %3466 = vmatmul.mubr.f32.gmra.mrb[0].mxu0 %v3339
        %v3467 = vpop.f32.mrb[0].mxu0
        %v3468 = vadd.f32 0.0, %v3467
        %v3469 = vpop.f32.mrb[0].mxu0
        %3470 = vdwg.mxu0
        %3471 = vmatprep.subr.mxu0 0.0
        %3472 = vmatpush1.msra.mxu0 %v361
        %3473 = vmatprep.subr.mxu0 0.0
        %3474 = vmatpush1.msra.mxu0 %v362
        %3475 = vmatprep.subr.mxu0 0.0
        %3476 = vmatpush1.msra.mxu0 %v363
        %3477 = vmatprep.subr.mxu0 0.0
        %3478 = vmatpush1.msra.mxu0 %v364
        %3479 = vmatprep.subr.mxu0 0.0
        %3480 = vmatpush1.msra.mxu0 %v365
        %3481 = vmatprep.subr.mxu0 0.0
        %3482 = vmatpush1.msra.mxu0 %v366
        %3483 = vmatprep.subr.mxu0 0.0
        %3484 = vmatpush1.msra.mxu0 %v367
        %3485 = vmatprep.subr.mxu0 0.0
        %3486 = vmatpush1.msra.mxu0 %v368
        %3487 = vmatprep.subr.mxu0 0.0
        %3488 = vmatpush1.msra.mxu0 0.0
        %3489 = vmatprep.subr.mxu0 0.0
        %3490 = vmatpush1.msra.mxu0 0.0
        %3491 = vmatprep.subr.mxu0 0.0
        %3492 = vmatpush1.msra.mxu0 0.0
        %3493 = vmatprep.subr.mxu0 0.0
        %3494 = vmatpush1.msra.mxu0 0.0
        %3495 = vmatprep.subr.mxu0 0.0
        %3496 = vmatpush1.msra.mxu0 0.0
        %3497 = vmatprep.subr.mxu0 0.0
        %3498 = vmatpush1.msra.mxu0 0.0
        %3499 = vmatprep.subr.mxu0 0.0
        %3500 = vmatpush1.msra.mxu0 0.0
        %3501 = vmatprep.subr.mxu0 0.0
        %3502 = vmatpush1.msra.mxu0 0.0
        %3503 = vmatprep.subr.mxu0 0.0
        %3504 = vmatpush1.msra.mxu0 0.0
        %3505 = vmatprep.subr.mxu0 0.0
        %3506 = vmatpush1.msra.mxu0 0.0
        %3507 = vmatprep.subr.mxu0 0.0
        %3508 = vmatpush1.msra.mxu0 0.0
        %3509 = vmatprep.subr.mxu0 0.0
        %3510 = vmatpush1.msra.mxu0 0.0
        %3511 = vmatprep.subr.mxu0 0.0
        %3512 = vmatpush1.msra.mxu0 0.0
        %3513 = vmatprep.subr.mxu0 0.0
        %3514 = vmatpush1.msra.mxu0 0.0
        %3515 = vmatprep.subr.mxu0 0.0
        %3516 = vmatpush1.msra.mxu0 0.0
        %3517 = vmatprep.subr.mxu0 0.0
        %3518 = vmatpush1.msra.mxu0 0.0
        %3519 = vmatprep.subr.mxu0 0.0
        %3520 = vmatpush1.msra.mxu0 0.0
        %3521 = vmatprep.subr.mxu0 0.0
        %3522 = vmatpush1.msra.mxu0 0.0
        %3523 = vmatprep.subr.mxu0 0.0
        %3524 = vmatpush1.msra.mxu0 0.0
        %3525 = vmatprep.subr.mxu0 0.0
        %3526 = vmatpush1.msra.mxu0 0.0
        %3527 = vmatprep.subr.mxu0 0.0
        %3528 = vmatpush1.msra.mxu0 0.0
        %3529 = vmatprep.subr.mxu0 0.0
        %3530 = vmatpush1.msra.mxu0 0.0
        %3531 = vmatprep.subr.mxu0 0.0
        %3532 = vmatpush1.msra.mxu0 0.0
        %3533 = vmatprep.subr.mxu0 0.0
        %3534 = vmatpush1.msra.mxu0 0.0
        %3535 = vmatprep.mubr.f32.mxu0 0.0
        %3536 = vmatmul.mubr.f32.gmra.mrb[0].mxu0 %v3343
        %v3537 = vpop.f32.mrb[0].mxu0
        %v3538 = vadd.f32 %v3433, %v3537
        %v3539 = vpop.f32.mrb[0].mxu0
        %3540 = vmatprep.mubr.f32.mxu0 0.0
        %3541 = vmatmul.mubr.f32.gmra.mrb[0].mxu0 %v3346
        %v3542 = vpop.f32.mrb[0].mxu0
        %v3543 = vadd.f32 %v3438, %v3542
        %v3544 = vpop.f32.mrb[0].mxu0
        %3545 = vmatprep.mubr.f32.mxu0 0.0
        %3546 = vmatmul.mubr.f32.gmra.mrb[0].mxu0 %v3349
        %v3547 = vpop.f32.mrb[0].mxu0
        %v3548 = vadd.f32 %v3443, %v3547
        %v3549 = vpop.f32.mrb[0].mxu0
        %3550 = vmatprep.mubr.f32.mxu0 0.0
        %3551 = vmatmul.mubr.f32.gmra.mrb[0].mxu0 %v3352
        %v3552 = vpop.f32.mrb[0].mxu0
        %v3553 = vadd.f32 %v3448, %v3552
        %v3554 = vpop.f32.mrb[0].mxu0
        %3555 = vmatprep.mubr.f32.mxu0 0.0
        %3556 = vmatmul.mubr.f32.gmra.mrb[0].mxu0 %v3355
        %v3557 = vpop.f32.mrb[0].mxu0
        %v3558 = vadd.f32 %v3453, %v3557
        %v3559 = vpop.f32.mrb[0].mxu0
        %3560 = vmatprep.mubr.f32.mxu0 0.0
        %3561 = vmatmul.mubr.f32.gmra.mrb[0].mxu0 %v3358
        %v3562 = vpop.f32.mrb[0].mxu0
        %v3563 = vadd.f32 %v3458, %v3562
        %v3564 = vpop.f32.mrb[0].mxu0
        %3565 = vmatprep.mubr.f32.mxu0 0.0
        %3566 = vmatmul.mubr.f32.gmra.mrb[0].mxu0 %v3361
        %v3567 = vpop.f32.mrb[0].mxu0
        %v3568 = vadd.f32 %v3463, %v3567
        %v3569 = vpop.f32.mrb[0].mxu0
        %3570 = vmatprep.mubr.f32.mxu0 0.0
        %3571 = vmatmul.mubr.f32.gmra.mrb[0].mxu0 %v3364
        %v3572 = vpop.f32.mrb[0].mxu0
        %v3573 = vadd.f32 %v3468, %v3572
        %v3574 = vpop.f32.mrb[0].mxu0
        %3575 = vdwg.mxu0
        %v3576 = vmax.f32 %v3310, %v3538
        %v3577 = vmax.f32 %v3311, %v3543
        %v3578 = vmax.f32 %v3312, %v3548
        %v3579 = vmax.f32 %v3313, %v3553
        %v3580 = vmax.f32 %v3314, %v3558
        %v3581 = vmax.f32 %v3315, %v3563
        %v3582 = vmax.f32 %v3316, %v3568
        %v3583 = vmax.f32 %v3317, %v3573
        %3600 = vrot.lane.b32.xlu0 %v3318, 64
        %v3601 = vpop.permute.xlu0 %3600
        %3602 = vrot.lane.b32.xlu0 %v3319, 64
        %v3603 = vpop.permute.xlu0 %3602
        %3604 = vrot.lane.b32.xlu0 %v3320, 64
        %v3605 = vpop.permute.xlu0 %3604
        %3606 = vrot.lane.b32.xlu0 %v3321, 64
        %v3607 = vpop.permute.xlu0 %3606
        %3608 = vrot.lane.b32.xlu0 %v3322, 64
        %v3609 = vpop.permute.xlu0 %3608
        %3610 = vrot.lane.b32.xlu0 %v3323, 64
        %v3611 = vpop.permute.xlu0 %3610
        %3612 = vrot.lane.b32.xlu0 %v3324, 64
        %v3613 = vpop.permute.xlu0 %3612
        %3614 = vrot.lane.b32.xlu0 %v3325, 64
        %v3615 = vpop.permute.xlu0 %3614
        %3616 = vrot.lane.b32.xlu0 %v3326, 64
        %v3617 = vpop.permute.xlu0 %3616
        %3618 = vrot.lane.b32.xlu0 %v3327, 64
        %v3619 = vpop.permute.xlu0 %3618
        %3620 = vrot.lane.b32.xlu0 %v3328, 64
        %v3621 = vpop.permute.xlu0 %3620
        %3622 = vrot.lane.b32.xlu0 %v3329, 64
        %v3623 = vpop.permute.xlu0 %3622
        %3624 = vrot.lane.b32.xlu0 %v3330, 64
        %v3625 = vpop.permute.xlu0 %3624
        %3626 = vrot.lane.b32.xlu0 %v3331, 64
        %v3627 = vpop.permute.xlu0 %3626
        %3628 = vrot.lane.b32.xlu0 %v3332, 64
        %v3629 = vpop.permute.xlu0 %3628
        %3630 = vrot.lane.b32.xlu0 %v3333, 64
        %v3631 = vpop.permute.xlu0 %3630
        %3632 = vrot.lane.b32.xlu0 %v3334, 64
        %v3633 = vpop.permute.xlu0 %3632
        %3634 = vrot.lane.b32.xlu0 %v3335, 64
        %v3635 = vpop.permute.xlu0 %3634
        %3636 = vrot.lane.b32.xlu0 %v3336, 64
        %v3637 = vpop.permute.xlu0 %3636
        %3638 = vrot.lane.b32.xlu0 %v3337, 64
        %v3639 = vpop.permute.xlu0 %3638
        %3640 = vrot.lane.b32.xlu0 %v3338, 64
        %v3641 = vpop.permute.xlu0 %3640
        %3642 = vrot.lane.b32.xlu0 %v3339, 64
        %v3643 = vpop.permute.xlu0 %3642
        %3644 = vrot.lane.b32.xlu0 %v3340, 64
        %v3645 = vpop.permute.xlu0 %3644
        %3646 = vrot.lane.b32.xlu0 %v3341, 64
        %v3647 = vpop.permute.xlu0 %3646
        %v3648 = vsel %vm369, %v3601, %v3603
        %v3649 = vsel %vm369, %v3603, %v3605
        %v3650 = vsel %vm369, %v3607, %v3609
        %v3651 = vsel %vm369, %v3609, %v3611
        %v3652 = vsel %vm369, %v3613, %v3615
        %v3653 = vsel %vm369, %v3615, %v3617
        %v3654 = vsel %vm369, %v3619, %v3621
        %v3655 = vsel %vm369, %v3621, %v3623
        %v3656 = vsel %vm369, %v3625, %v3627
        %v3657 = vsel %vm369, %v3627, %v3629
        %v3658 = vsel %vm369, %v3631, %v3633
        %v3659 = vsel %vm369, %v3633, %v3635
        %v3660 = vsel %vm369, %v3637, %v3639
        %v3661 = vsel %vm369, %v3639, %v3641
        %v3662 = vsel %vm369, %v3643, %v3645
        %v3663 = vsel %vm369, %v3645, %v3647
        %v3680 = vsel %vm369, %v3605, 0
        %v3682 = vsel %vm369, %v3611, 0
        %v3684 = vsel %vm369, %v3617, 0
        %v3686 = vsel %vm369, %v3623, 0
        %v3688 = vsel %vm369, %v3629, 0
        %v3690 = vsel %vm369, %v3635, 0
        %v3692 = vsel %vm369, %v3641, 0
        %v3694 = vsel %vm369, %v3647, 0
        %3696 = vmatprep.subr.mxu0 0.0
        %3697 = vmatpush1.msra.mxu0 %v329
        %3698 = vmatprep.subr.mxu0 0.0
        %3699 = vmatpush1.msra.mxu0 %v330
        %3700 = vmatprep.subr.mxu0 0.0
        %3701 = vmatpush1.msra.mxu0 %v331
        %3702 = vmatprep.subr.mxu0 0.0
        %3703 = vmatpush1.msra.mxu0 %v332
        %3704 = vmatprep.subr.mxu0 0.0
        %3705 = vmatpush1.msra.mxu0 %v333
        %3706 = vmatprep.subr.mxu0 0.0
        %3707 = vmatpush1.msra.mxu0 %v334
        %3708 = vmatprep.subr.mxu0 0.0
        %3709 = vmatpush1.msra.mxu0 %v335
        %3710 = vmatprep.subr.mxu0 0.0
        %3711 = vmatpush1.msra.mxu0 %v336
        %3712 = vmatprep.subr.mxu0 0.0
        %3713 = vmatpush1.msra.mxu0 %v337
        %3714 = vmatprep.subr.mxu0 0.0
        %3715 = vmatpush1.msra.mxu0 %v338
        %3716 = vmatprep.subr.mxu0 0.0
        %3717 = vmatpush1.msra.mxu0 %v339
        %3718 = vmatprep.subr.mxu0 0.0
        %3719 = vmatpush1.msra.mxu0 %v340
        %3720 = vmatprep.subr.mxu0 0.0
        %3721 = vmatpush1.msra.mxu0 %v341
        %3722 = vmatprep.subr.mxu0 0.0
        %3723 = vmatpush1.msra.mxu0 %v342
        %3724 = vmatprep.subr.mxu0 0.0
        %3725 = vmatpush1.msra.mxu0 %v343
        %3726 = vmatprep.subr.mxu0 0.0
        %3727 = vmatpush1.msra.mxu0 %v344
        %3728 = vmatprep.subr.mxu0 0.0
        %3729 = vmatpush1.msra.mxu0 %v345
        %3730 = vmatprep.subr.mxu0 0.0
        %3731 = vmatpush1.msra.mxu0 %v346
        %3732 = vmatprep.subr.mxu0 0.0
        %3733 = vmatpush1.msra.mxu0 %v347
        %3734 = vmatprep.subr.mxu0 0.0
        %3735 = vmatpush1.msra.mxu0 %v348
        %3736 = vmatprep.subr.mxu0 0.0
        %3737 = vmatpush1.msra.mxu0 %v349
        %3738 = vmatprep.subr.mxu0 0.0
        %3739 = vmatpush1.msra.mxu0 %v350
        %3740 = vmatprep.subr.mxu0 0.0
        %3741 = vmatpush1.msra.mxu0 %v351
        %3742 = vmatprep.subr.mxu0 0.0
        %3743 = vmatpush1.msra.mxu0 %v352
        %3744 = vmatprep.subr.mxu0 0.0
        %3745 = vmatpush1.msra.mxu0 %v353
        %3746 = vmatprep.subr.mxu0 0.0
        %3747 = vmatpush1.msra.mxu0 %v354
        %3748 = vmatprep.subr.mxu0 0.0
        %3749 = vmatpush1.msra.mxu0 %v355
        %3750 = vmatprep.subr.mxu0 0.0
        %3751 = vmatpush1.msra.mxu0 %v356
        %3752 = vmatprep.subr.mxu0 0.0
        %3753 = vmatpush1.msra.mxu0 %v357
        %3754 = vmatprep.subr.mxu0 0.0
        %3755 = vmatpush1.msra.mxu0 %v358
        %3756 = vmatprep.subr.mxu0 0.0
        %3757 = vmatpush1.msra.mxu0 %v359
        %3758 = vmatprep.subr.mxu0 0.0
        %3759 = vmatpush1.msra.mxu0 %v360
        %3760 = vmatprep.mubr.f32.mxu0 %v3649
        %3761 = vmatmul.mubr.f32.gmra.mrb[0].mxu0 %v3648
        %v3762 = vpop.f32.mrb[0].mxu0
        %v3763 = vadd.f32 0.0, %v3762
        %v3764 = vpop.f32.mrb[0].mxu0
        %3765 = vmatprep.mubr.f32.mxu0 %v3651
        %3766 = vmatmul.mubr.f32.gmra.mrb[0].mxu0 %v3650
        %v3767 = vpop.f32.mrb[0].mxu0
        %v3768 = vadd.f32 0.0, %v3767
        %v3769 = vpop.f32.mrb[0].mxu0
        %3770 = vmatprep.mubr.f32.mxu0 %v3653
        %3771 = vmatmul.mubr.f32.gmra.mrb[0].mxu0 %v3652
        %v3772 = vpop.f32.mrb[0].mxu0
        %v3773 = vadd.f32 0.0, %v3772
        %v3774 = vpop.f32.mrb[0].mxu0
        %3775 = vmatprep.mubr.f32.mxu0 %v3655
        %3776 = vmatmul.mubr.f32.gmra.mrb[0].mxu0 %v3654
        %v3777 = vpop.f32.mrb[0].mxu0
        %v3778 = vadd.f32 0.0, %v3777
        %v3779 = vpop.f32.mrb[0].mxu0
        %3780 = vmatprep.mubr.f32.mxu0 %v3657
        %3781 = vmatmul.mubr.f32.gmra.mrb[0].mxu0 %v3656
        %v3782 = vpop.f32.mrb[0].mxu0
        %v3783 = vadd.f32 0.0, %v3782
        %v3784 = vpop.f32.mrb[0].mxu0
        %3785 = vmatprep.mubr.f32.mxu0 %v3659
        %3786 = vmatmul.mubr.f32.gmra.mrb[0].mxu0 %v3658
        %v3787 = vpop.f32.mrb[0].mxu0
        %v3788 = vadd.f32 0.0, %v3787
        %v3789 = vpop.f32.mrb[0].mxu0
        %3790 = vmatprep.mubr.f32.mxu0 %v3661
        %3791 = vmatmul.mubr.f32.gmra.mrb[0].mxu0 %v3660
        %v3792 = vpop.f32.mrb[0].mxu0
        %v3793 = vadd.f32 0.0, %v3792
        %v3794 = vpop.f32.mrb[0].mxu0
        %3795 = vmatprep.mubr.f32.mxu0 %v3663
        %3796 = vmatmul.mubr.f32.gmra.mrb[0].mxu0 %v3662
        %v3797 = vpop.f32.mrb[0].mxu0
        %v3798 = vadd.f32 0.0, %v3797
        %v3799 = vpop.f32.mrb[0].mxu0
        %3800 = vdwg.mxu0
        %3801 = vmatprep.subr.mxu0 0.0
        %3802 = vmatpush1.msra.mxu0 %v361
        %3803 = vmatprep.subr.mxu0 0.0
        %3804 = vmatpush1.msra.mxu0 %v362
        %3805 = vmatprep.subr.mxu0 0.0
        %3806 = vmatpush1.msra.mxu0 %v363
        %3807 = vmatprep.subr.mxu0 0.0
        %3808 = vmatpush1.msra.mxu0 %v364
        %3809 = vmatprep.subr.mxu0 0.0
        %3810 = vmatpush1.msra.mxu0 %v365
        %3811 = vmatprep.subr.mxu0 0.0
        %3812 = vmatpush1.msra.mxu0 %v366
        %3813 = vmatprep.subr.mxu0 0.0
        %3814 = vmatpush1.msra.mxu0 %v367
        %3815 = vmatprep.subr.mxu0 0.0
        %3816 = vmatpush1.msra.mxu0 %v368
        %3817 = vmatprep.subr.mxu0 0.0
        %3818 = vmatpush1.msra.mxu0 0.0
        %3819 = vmatprep.subr.mxu0 0.0
        %3820 = vmatpush1.msra.mxu0 0.0
        %3821 = vmatprep.subr.mxu0 0.0
        %3822 = vmatpush1.msra.mxu0 0.0
        %3823 = vmatprep.subr.mxu0 0.0
        %3824 = vmatpush1.msra.mxu0 0.0
        %3825 = vmatprep.subr.mxu0 0.0
        %3826 = vmatpush1.msra.mxu0 0.0
        %3827 = vmatprep.subr.mxu0 0.0
        %3828 = vmatpush1.msra.mxu0 0.0
        %3829 = vmatprep.subr.mxu0 0.0
        %3830 = vmatpush1.msra.mxu0 0.0
        %3831 = vmatprep.subr.mxu0 0.0
        %3832 = vmatpush1.msra.mxu0 0.0
        %3833 = vmatprep.subr.mxu0 0.0
        %3834 = vmatpush1.msra.mxu0 0.0
        %3835 = vmatprep.subr.mxu0 0.0
        %3836 = vmatpush1.msra.mxu0 0.0
        %3837 = vmatprep.subr.mxu0 0.0
        %3838 = vmatpush1.msra.mxu0 0.0
        %3839 = vmatprep.subr.mxu0 0.0
        %3840 = vmatpush1.msra.mxu0 0.0
        %3841 = vmatprep.subr.mxu0 0.0
        %3842 = vmatpush1.msra.mxu0 0.0
        %3843 = vmatprep.subr.mxu0 0.0
        %3844 = vmatpush1.msra.mxu0 0.0
        %3845 = vmatprep.subr.mxu0 0.0
        %3846 = vmatpush1.msra.mxu0 0.0
        %3847 = vmatprep.subr.mxu0 0.0
        %3848 = vmatpush1.msra.mxu0 0.0
        %3849 = vmatprep.subr.mxu0 0.0
        %3850 = vmatpush1.msra.mxu0 0.0
        %3851 = vmatprep.subr.mxu0 0.0
        %3852 = vmatpush1.msra.mxu0 0.0
        %3853 = vmatprep.subr.mxu0 0.0
        %3854 = vmatpush1.msra.mxu0 0.0
        %3855 = vmatprep.subr.mxu0 0.0
        %3856 = vmatpush1.msra.mxu0 0.0
        %3857 = vmatprep.subr.mxu0 0.0
        %3858 = vmatpush1.msra.mxu0 0.0
        %3859 = vmatprep.subr.mxu0 0.0
        %3860 = vmatpush1.msra.mxu0 0.0
        %3861 = vmatprep.subr.mxu0 0.0
        %3862 = vmatpush1.msra.mxu0 0.0
        %3863 = vmatprep.subr.mxu0 0.0
        %3864 = vmatpush1.msra.mxu0 0.0
        %3865 = vmatprep.mubr.f32.mxu0 0.0
        %3866 = vmatmul.mubr.f32.gmra.mrb[0].mxu0 %v3680
        %v3867 = vpop.f32.mrb[0].mxu0
        %v3868 = vadd.f32 %v3763, %v3867
        %v3869 = vpop.f32.mrb[0].mxu0
        %3870 = vmatprep.mubr.f32.mxu0 0.0
        %3871 = vmatmul.mubr.f32.gmra.mrb[0].mxu0 %v3682
        %v3872 = vpop.f32.mrb[0].mxu0
        %v3873 = vadd.f32 %v3768, %v3872
        %v3874 = vpop.f32.mrb[0].mxu0
        %3875 = vmatprep.mubr.f32.mxu0 0.0
        %3876 = vmatmul.mubr.f32.gmra.mrb[0].mxu0 %v3684
        %v3877 = vpop.f32.mrb[0].mxu0
        %v3878 = vadd.f32 %v3773, %v3877
        %v3879 = vpop.f32.mrb[0].mxu0
        %3880 = vmatprep.mubr.f32.mxu0 0.0
        %3881 = vmatmul.mubr.f32.gmra.mrb[0].mxu0 %v3686
        %v3882 = vpop.f32.mrb[0].mxu0
        %v3883 = vadd.f32 %v3778, %v3882
        %v3884 = vpop.f32.mrb[0].mxu0
        %3885 = vmatprep.mubr.f32.mxu0 0.0
        %3886 = vmatmul.mubr.f32.gmra.mrb[0].mxu0 %v3688
        %v3887 = vpop.f32.mrb[0].mxu0
        %v3888 = vadd.f32 %v3783, %v3887
        %v3889 = vpop.f32.mrb[0].mxu0
        %3890 = vmatprep.mubr.f32.mxu0 0.0
        %3891 = vmatmul.mubr.f32.gmra.mrb[0].mxu0 %v3690
        %v3892 = vpop.f32.mrb[0].mxu0
        %v3893 = vadd.f32 %v3788, %v3892
        %v3894 = vpop.f32.mrb[0].mxu0
        %3895 = vmatprep.mubr.f32.mxu0 0.0
        %3896 = vmatmul.mubr.f32.gmra.mrb[0].mxu0 %v3692
        %v3897 = vpop.f32.mrb[0].mxu0
        %v3898 = vadd.f32 %v3793, %v3897
        %v3899 = vpop.f32.mrb[0].mxu0
        %3900 = vmatprep.mubr.f32.mxu0 0.0
        %3901 = vmatmul.mubr.f32.gmra.mrb[0].mxu0 %v3694
        %v3902 = vpop.f32.mrb[0].mxu0
        %v3903 = vadd.f32 %v3798, %v3902
        %v3904 = vpop.f32.mrb[0].mxu0
        %3905 = vdwg.mxu0
        %v3906 = vmax.f32 %v3576, %v3868
        %v3907 = vmax.f32 %v3577, %v3873
        %v3908 = vmax.f32 %v3578, %v3878
        %v3909 = vmax.f32 %v3579, %v3883
        %v3910 = vmax.f32 %v3580, %v3888
        %v3911 = vmax.f32 %v3581, %v3893
        %v3912 = vmax.f32 %v3582, %v3898
        %v3913 = vmax.f32 %v3583, %v3903
        %v3914 = vld [vmem:[%s3] sm:$0x1]
        %v3916 = vlaneseq
        %v3917 = vshrl.u32 %v3916, 7
        %v3918 = vsub.s32 0, %v3917
        %v3919 = vrot.slane %v3914, %v3918
        %v3921 = vadd.f32 %v3906, %v3919
        %v3922 = vadd.f32 %v3907, %v3919
        %v3923 = vadd.f32 %v3908, %v3919
        %v3924 = vadd.f32 %v3909, %v3919
        %v3925 = vadd.f32 %v3910, %v3919
        %v3926 = vadd.f32 %v3911, %v3919
        %v3927 = vadd.f32 %v3912, %v3919
        %v3928 = vadd.f32 %v3913, %v3919
        %v3929 = vmax.f32 %v3921, 0.0
        %v3930 = vmax.f32 %v3922, 0.0
        %v3931 = vmax.f32 %v3923, 0.0
        %v3932 = vmax.f32 %v3924, 0.0
        %v3933 = vmax.f32 %v3925, 0.0
        %v3934 = vmax.f32 %v3926, 0.0
        %v3935 = vmax.f32 %v3927, 0.0
        %v3936 = vmax.f32 %v3928, 0.0
        %v3937 = vld [vmem:[%s302] sm:$0xff]
        %v3938 = vld [vmem:[%s302 + $0x8] sm:$0xff]
        %v3939 = vld [vmem:[%s302 + $0x10] sm:$0xff]
        %v3940 = vld [vmem:[%s302 + $0x18] sm:$0xff]
        %v3941 = vld [vmem:[%s302 + $0x20] sm:$0xff]
        %v3942 = vld [vmem:[%s302 + $0x28] sm:$0xff]
        %v3943 = vld [vmem:[%s302 + $0x30] sm:$0xff]
        %v3944 = vld [vmem:[%s302 + $0x38] sm:$0xff]
        %v3945 = vld [vmem:[%s4] sm:$0xff]
        %v3946 = vld [vmem:[%s4 + $0x8] sm:$0xff]
        %v3947 = vld [vmem:[%s4 + $0x10] sm:$0xff]
        %v3948 = vld [vmem:[%s4 + $0x18] sm:$0xff]
        %v3949 = vld [vmem:[%s4 + $0x20] sm:$0xff]
        %v3950 = vld [vmem:[%s4 + $0x28] sm:$0xff]
        %v3951 = vld [vmem:[%s4 + $0x30] sm:$0xff]
        %v3952 = vld [vmem:[%s4 + $0x38] sm:$0xff]
        %v3953 = vld [vmem:[%s4 + $0x40] sm:$0xff]
        %v3954 = vld [vmem:[%s4 + $0x48] sm:$0xff]
        %v3955 = vld [vmem:[%s4 + $0x50] sm:$0xff]
        %v3956 = vld [vmem:[%s4 + $0x58] sm:$0xff]
        %v3957 = vld [vmem:[%s4 + $0x60] sm:$0xff]
        %v3958 = vld [vmem:[%s4 + $0x68] sm:$0xff]
        %v3959 = vld [vmem:[%s4 + $0x70] sm:$0xff]
        %v3960 = vld [vmem:[%s4 + $0x78] sm:$0xff]
        %v3961 = vld [vmem:[%s4 + $0x80] sm:$0xff]
        %v3962 = vld [vmem:[%s4 + $0x88] sm:$0xff]
        %v3963 = vld [vmem:[%s4 + $0x90] sm:$0xff]
        %v3964 = vld [vmem:[%s4 + $0x98] sm:$0xff]
        %v3965 = vld [vmem:[%s4 + $0xa0] sm:$0xff]
        %v3966 = vld [vmem:[%s4 + $0xa8] sm:$0xff]
        %v3967 = vld [vmem:[%s4 + $0xb0] sm:$0xff]
        %v3968 = vld [vmem:[%s4 + $0xb8] sm:$0xff]
        %v3969 = vld [vmem:[%s4 + $0xc0] sm:$0xff]
        %v3970 = vld [vmem:[%s4 + $0xc8] sm:$0xff]
        %v3971 = vld [vmem:[%s4 + $0xd0] sm:$0xff]
        %v3972 = vld [vmem:[%s4 + $0xd8] sm:$0xff]
        %v3973 = vld [vmem:[%s4 + $0xe0] sm:$0xff]
        %v3974 = vld [vmem:[%s4 + $0xe8] sm:$0xff]
        %v3975 = vld [vmem:[%s4 + $0xf0] sm:$0xff]
        %v3976 = vld [vmem:[%s4 + $0xf8] sm:$0xff]
        %3977 = vmatprep.subr.mxu0 0.0
        %3978 = vmatpush1.msra.mxu0 %v3945
        %3979 = vmatprep.subr.mxu0 0.0
        %3980 = vmatpush1.msra.mxu0 %v3946
        %3981 = vmatprep.subr.mxu0 0.0
        %3982 = vmatpush1.msra.mxu0 %v3947
        %3983 = vmatprep.subr.mxu0 0.0
        %3984 = vmatpush1.msra.mxu0 %v3948
        %3985 = vmatprep.subr.mxu0 0.0
        %3986 = vmatpush1.msra.mxu0 %v3949
        %3987 = vmatprep.subr.mxu0 0.0
        %3988 = vmatpush1.msra.mxu0 %v3950
        %3989 = vmatprep.subr.mxu0 0.0
        %3990 = vmatpush1.msra.mxu0 %v3951
        %3991 = vmatprep.subr.mxu0 0.0
        %3992 = vmatpush1.msra.mxu0 %v3952
        %3993 = vmatprep.subr.mxu0 0.0
        %3994 = vmatpush1.msra.mxu0 %v3953
        %3995 = vmatprep.subr.mxu0 0.0
        %3996 = vmatpush1.msra.mxu0 %v3954
        %3997 = vmatprep.subr.mxu0 0.0
        %3998 = vmatpush1.msra.mxu0 %v3955
        %3999 = vmatprep.subr.mxu0 0.0
        %4000 = vmatpush1.msra.mxu0 %v3956
        %4001 = vmatprep.subr.mxu0 0.0
        %4002 = vmatpush1.msra.mxu0 %v3957
        %4003 = vmatprep.subr.mxu0 0.0
        %4004 = vmatpush1.msra.mxu0 %v3958
        %4005 = vmatprep.subr.mxu0 0.0
        %4006 = vmatpush1.msra.mxu0 %v3959
        %4007 = vmatprep.subr.mxu0 0.0
        %4008 = vmatpush1.msra.mxu0 %v3960
        %4009 = vmatprep.subr.mxu0 0.0
        %4010 = vmatpush1.msra.mxu0 %v3961
        %4011 = vmatprep.subr.mxu0 0.0
        %4012 = vmatpush1.msra.mxu0 %v3962
        %4013 = vmatprep.subr.mxu0 0.0
        %4014 = vmatpush1.msra.mxu0 %v3963
        %4015 = vmatprep.subr.mxu0 0.0
        %4016 = vmatpush1.msra.mxu0 %v3964
        %4017 = vmatprep.subr.mxu0 0.0
        %4018 = vmatpush1.msra.mxu0 %v3965
        %4019 = vmatprep.subr.mxu0 0.0
        %4020 = vmatpush1.msra.mxu0 %v3966
        %4021 = vmatprep.subr.mxu0 0.0
        %4022 = vmatpush1.msra.mxu0 %v3967
        %4023 = vmatprep.subr.mxu0 0.0
        %4024 = vmatpush1.msra.mxu0 %v3968
        %4025 = vmatprep.subr.mxu0 0.0
        %4026 = vmatpush1.msra.mxu0 %v3969
        %4027 = vmatprep.subr.mxu0 0.0
        %4028 = vmatpush1.msra.mxu0 %v3970
        %4029 = vmatprep.subr.mxu0 0.0
        %4030 = vmatpush1.msra.mxu0 %v3971
        %4031 = vmatprep.subr.mxu0 0.0
        %4032 = vmatpush1.msra.mxu0 %v3972
        %4033 = vmatprep.subr.mxu0 0.0
        %4034 = vmatpush1.msra.mxu0 %v3973
        %4035 = vmatprep.subr.mxu0 0.0
        %4036 = vmatpush1.msra.mxu0 %v3974
        %4037 = vmatprep.subr.mxu0 0.0
        %4038 = vmatpush1.msra.mxu0 %v3975
        %4039 = vmatprep.subr.mxu0 0.0
        %4040 = vmatpush1.msra.mxu0 %v3976
        %4041 = vmatprep.mubr.f32.mxu0 %v3937
        %4042 = vmatmul.mubr.f32.gmra.mrb[0].mxu0 %v3929
        %v4043 = vpop.f32.mrb[0].mxu0
        %v4044 = vadd.f32 0.0, %v4043
        %v4045 = vpop.f32.mrb[0].mxu0
        %4046 = vmatprep.mubr.f32.mxu0 %v3938
        %4047 = vmatmul.mubr.f32.gmra.mrb[0].mxu0 %v3930
        %v4048 = vpop.f32.mrb[0].mxu0
        %v4049 = vadd.f32 0.0, %v4048
        %v4050 = vpop.f32.mrb[0].mxu0
        %4051 = vmatprep.mubr.f32.mxu0 %v3939
        %4052 = vmatmul.mubr.f32.gmra.mrb[0].mxu0 %v3931
        %v4053 = vpop.f32.mrb[0].mxu0
        %v4054 = vadd.f32 0.0, %v4053
        %v4055 = vpop.f32.mrb[0].mxu0
        %4056 = vmatprep.mubr.f32.mxu0 %v3940
        %4057 = vmatmul.mubr.f32.gmra.mrb[0].mxu0 %v3932
        %v4058 = vpop.f32.mrb[0].mxu0
        %v4059 = vadd.f32 0.0, %v4058
        %v4060 = vpop.f32.mrb[0].mxu0
        %4061 = vmatprep.mubr.f32.mxu0 %v3941
        %4062 = vmatmul.mubr.f32.gmra.mrb[0].mxu0 %v3933
        %v4063 = vpop.f32.mrb[0].mxu0
        %v4064 = vadd.f32 0.0, %v4063
        %v4065 = vpop.f32.mrb[0].mxu0
        %4066 = vmatprep.mubr.f32.mxu0 %v3942
        %4067 = vmatmul.mubr.f32.gmra.mrb[0].mxu0 %v3934
        %v4068 = vpop.f32.mrb[0].mxu0
        %v4069 = vadd.f32 0.0, %v4068
        %v4070 = vpop.f32.mrb[0].mxu0
        %4071 = vmatprep.mubr.f32.mxu0 %v3943
        %4072 = vmatmul.mubr.f32.gmra.mrb[0].mxu0 %v3935
        %v4073 = vpop.f32.mrb[0].mxu0
        %v4074 = vadd.f32 0.0, %v4073
        %v4075 = vpop.f32.mrb[0].mxu0
        %4076 = vmatprep.mubr.f32.mxu0 %v3944
        %4077 = vmatmul.mubr.f32.gmra.mrb[0].mxu0 %v3936
        %v4078 = vpop.f32.mrb[0].mxu0
        %v4079 = vadd.f32 0.0, %v4078
        %v4080 = vpop.f32.mrb[0].mxu0
        %4081 = vdwg.mxu0
        %v4082 = vld [vmem:[%s5] sm:$0xff]
        %v4083 = vld [vmem:[%s5 + $0x8] sm:$0xff]
        %v4084 = vld [vmem:[%s5 + $0x10] sm:$0xff]
        %v4085 = vld [vmem:[%s5 + $0x18] sm:$0xff]
        %v4086 = vld [vmem:[%s5 + $0x20] sm:$0xff]
        %v4087 = vld [vmem:[%s5 + $0x28] sm:$0xff]
        %v4088 = vld [vmem:[%s5 + $0x30] sm:$0xff]
        %v4089 = vld [vmem:[%s5 + $0x38] sm:$0xff]
        %v4090 = vld [vmem:[%s5 + $0x40] sm:$0xff]
        %v4091 = vld [vmem:[%s5 + $0x48] sm:$0xff]
        %v4092 = vld [vmem:[%s5 + $0x50] sm:$0xff]
        %v4093 = vld [vmem:[%s5 + $0x58] sm:$0xff]
        %v4094 = vld [vmem:[%s5 + $0x60] sm:$0xff]
        %v4095 = vld [vmem:[%s5 + $0x68] sm:$0xff]
        %v4096 = vld [vmem:[%s5 + $0x70] sm:$0xff]
        %v4097 = vld [vmem:[%s5 + $0x78] sm:$0xff]
        %v4098 = vld [vmem:[%s5 + $0x80] sm:$0xff]
        %v4099 = vld [vmem:[%s5 + $0x88] sm:$0xff]
        %v4100 = vld [vmem:[%s5 + $0x90] sm:$0xff]
        %v4101 = vld [vmem:[%s5 + $0x98] sm:$0xff]
        %v4102 = vld [vmem:[%s5 + $0xa0] sm:$0xff]
        %v4103 = vld [vmem:[%s5 + $0xa8] sm:$0xff]
        %v4104 = vld [vmem:[%s5 + $0xb0] sm:$0xff]
        %v4105 = vld [vmem:[%s5 + $0xb8] sm:$0xff]
        %v4106 = vld [vmem:[%s5 + $0xc0] sm:$0xff]
        %v4107 = vld [vmem:[%s5 + $0xc8] sm:$0xff]
        %v4108 = vld [vmem:[%s5 + $0xd0] sm:$0xff]
        %v4109 = vld [vmem:[%s5 + $0xd8] sm:$0xff]
        %v4110 = vld [vmem:[%s5 + $0xe0] sm:$0xff]
        %v4111 = vld [vmem:[%s5 + $0xe8] sm:$0xff]
        %v4112 = vld [vmem:[%s5 + $0xf0] sm:$0xff]
        %v4113 = vld [vmem:[%s5 + $0xf8] sm:$0xff]
        %v4114 = vld [vmem:[%s6] sm:$0x3]
        %v4116 = vlaneseq
        %v4117 = vshrl.u32 %v4116, 7
        %v4118 = vsub.s32 0, %v4117
        %v4119 = vrot.slane %v4114, %v4118
        %v4120 = vlaneseq
        %v4121 = vshrl.u32 %v4120, 7
        %v4122 = vsub.s32 1, %v4121
        %v4123 = vrot.slane %v4114, %v4122
        %4126 = vmatprep.subr.mxu0 %v4083
        %4127 = vmatpush1.msra.mxu0 %v4082
        %4128 = vmatprep.subr.mxu0 %v4085
        %4129 = vmatpush1.msra.mxu0 %v4084
        %4130 = vmatprep.subr.mxu0 %v4087
        %4131 = vmatpush1.msra.mxu0 %v4086
        %4132 = vmatprep.subr.mxu0 %v4089
        %4133 = vmatpush1.msra.mxu0 %v4088
        %4134 = vmatprep.subr.mxu0 %v4091
        %4135 = vmatpush1.msra.mxu0 %v4090
        %4136 = vmatprep.subr.mxu0 %v4093
        %4137 = vmatpush1.msra.mxu0 %v4092
        %4138 = vmatprep.subr.mxu0 %v4095
        %4139 = vmatpush1.msra.mxu0 %v4094
        %4140 = vmatprep.subr.mxu0 %v4097
        %4141 = vmatpush1.msra.mxu0 %v4096
        %4142 = vmatprep.subr.mxu0 %v4099
        %4143 = vmatpush1.msra.mxu0 %v4098
        %4144 = vmatprep.subr.mxu0 %v4101
        %4145 = vmatpush1.msra.mxu0 %v4100
        %4146 = vmatprep.subr.mxu0 %v4103
        %4147 = vmatpush1.msra.mxu0 %v4102
        %4148 = vmatprep.subr.mxu0 %v4105
        %4149 = vmatpush1.msra.mxu0 %v4104
        %4150 = vmatprep.subr.mxu0 %v4107
        %4151 = vmatpush1.msra.mxu0 %v4106
        %4152 = vmatprep.subr.mxu0 %v4109
        %4153 = vmatpush1.msra.mxu0 %v4108
        %4154 = vmatprep.subr.mxu0 %v4111
        %4155 = vmatpush1.msra.mxu0 %v4110
        %4156 = vmatprep.subr.mxu0 %v4113
        %4157 = vmatpush1.msra.mxu0 %v4112
        %4158 = vmatprep.subr.mxu0 0.0
        %4159 = vmatpush1.msra.mxu0 0.0
        %4160 = vmatprep.subr.mxu0 0.0
        %4161 = vmatpush1.msra.mxu0 0.0
        %4162 = vmatprep.subr.mxu0 0.0
        %4163 = vmatpush1.msra.mxu0 0.0
        %4164 = vmatprep.subr.mxu0 0.0
        %4165 = vmatpush1.msra.mxu0 0.0
        %4166 = vmatprep.subr.mxu0 0.0
        %4167 = vmatpush1.msra.mxu0 0.0
        %4168 = vmatprep.subr.mxu0 0.0
        %4169 = vmatpush1.msra.mxu0 0.0
        %4170 = vmatprep.subr.mxu0 0.0
        %4171 = vmatpush1.msra.mxu0 0.0
        %4172 = vmatprep.subr.mxu0 0.0
        %4173 = vmatpush1.msra.mxu0 0.0
        %4174 = vmatprep.subr.mxu0 0.0
        %4175 = vmatpush1.msra.mxu0 0.0
        %4176 = vmatprep.subr.mxu0 0.0
        %4177 = vmatpush1.msra.mxu0 0.0
        %4178 = vmatprep.subr.mxu0 0.0
        %4179 = vmatpush1.msra.mxu0 0.0
        %4180 = vmatprep.subr.mxu0 0.0
        %4181 = vmatpush1.msra.mxu0 0.0
        %4182 = vmatprep.subr.mxu0 0.0
        %4183 = vmatpush1.msra.mxu0 0.0
        %4184 = vmatprep.subr.mxu0 0.0
        %4185 = vmatpush1.msra.mxu0 0.0
        %4186 = vmatprep.subr.mxu0 0.0
        %4187 = vmatpush1.msra.mxu0 0.0
        %4188 = vmatprep.subr.mxu0 0.0
        %4189 = vmatpush1.msra.mxu0 0.0
        %4190 = vmatprep.mubr.f32.mxu0 0.0
        %4191 = vmatmul.mubr.f32.gmra.mrb[0].mxu0 %v4044
        %v4192 = vpop.f32.mrb[0].mxu0
        %v4193 = vadd.f32 %v4119, %v4192
        %v4194 = vpop.f32.mrb[0].mxu0
        %v4195 = vadd.f32 %v4123, %v4194
        %4196 = vmatprep.mubr.f32.mxu0 0.0
        %4197 = vmatmul.mubr.f32.gmra.mrb[0].mxu0 %v4049
        %v4198 = vpop.f32.mrb[0].mxu0
        %v4199 = vadd.f32 %v4119, %v4198
        %v4200 = vpop.f32.mrb[0].mxu0
        %v4201 = vadd.f32 %v4123, %v4200
        %4202 = vmatprep.mubr.f32.mxu0 0.0
        %4203 = vmatmul.mubr.f32.gmra.mrb[0].mxu0 %v4054
        %v4204 = vpop.f32.mrb[0].mxu0
        %v4205 = vadd.f32 %v4119, %v4204
        %v4206 = vpop.f32.mrb[0].mxu0
        %v4207 = vadd.f32 %v4123, %v4206
        %4208 = vmatprep.mubr.f32.mxu0 0.0
        %4209 = vmatmul.mubr.f32.gmra.mrb[0].mxu0 %v4059
        %v4210 = vpop.f32.mrb[0].mxu0
        %v4211 = vadd.f32 %v4119, %v4210
        %v4212 = vpop.f32.mrb[0].mxu0
        %v4213 = vadd.f32 %v4123, %v4212
        %4214 = vmatprep.mubr.f32.mxu0 0.0
        %4215 = vmatmul.mubr.f32.gmra.mrb[0].mxu0 %v4064
        %v4216 = vpop.f32.mrb[0].mxu0
        %v4217 = vadd.f32 %v4119, %v4216
        %v4218 = vpop.f32.mrb[0].mxu0
        %v4219 = vadd.f32 %v4123, %v4218
        %4220 = vmatprep.mubr.f32.mxu0 0.0
        %4221 = vmatmul.mubr.f32.gmra.mrb[0].mxu0 %v4069
        %v4222 = vpop.f32.mrb[0].mxu0
        %v4223 = vadd.f32 %v4119, %v4222
        %v4224 = vpop.f32.mrb[0].mxu0
        %v4225 = vadd.f32 %v4123, %v4224
        %4226 = vmatprep.mubr.f32.mxu0 0.0
        %4227 = vmatmul.mubr.f32.gmra.mrb[0].mxu0 %v4074
        %v4228 = vpop.f32.mrb[0].mxu0
        %v4229 = vadd.f32 %v4119, %v4228
        %v4230 = vpop.f32.mrb[0].mxu0
        %v4231 = vadd.f32 %v4123, %v4230
        %4232 = vmatprep.mubr.f32.mxu0 0.0
        %4233 = vmatmul.mubr.f32.gmra.mrb[0].mxu0 %v4079
        %v4234 = vpop.f32.mrb[0].mxu0
        %v4235 = vadd.f32 %v4119, %v4234
        %v4236 = vpop.f32.mrb[0].mxu0
        %v4237 = vadd.f32 %v4123, %v4236
        %4238 = vdwg.mxu0
        %v4239 = vmul.f32 %v4193, 0.5
        %v4240 = vmul.f32 %v4199, 0.5
        %v4241 = vmul.f32 %v4205, 0.5
        %v4242 = vmul.f32 %v4211, 0.5
        %v4243 = vmul.f32 %v4217, 0.5
        %v4244 = vmul.f32 %v4223, 0.5
        %v4245 = vmul.f32 %v4229, 0.5
        %v4246 = vmul.f32 %v4235, 0.5
        %v4247 = vtanh.pop %v4239
        %v4248 = vtanh.pop %v4240
        %v4249 = vtanh.pop %v4241
        %v4250 = vtanh.pop %v4242
        %v4251 = vtanh.pop %v4243
        %v4252 = vtanh.pop %v4244
        %v4253 = vtanh.pop %v4245
        %v4254 = vtanh.pop %v4246
        %v4255 = vmul.f32 %v4247, 0.5
        %v4256 = vmul.f32 %v4248, 0.5
        %v4257 = vmul.f32 %v4249, 0.5
        %v4258 = vmul.f32 %v4250, 0.5
        %v4259 = vmul.f32 %v4251, 0.5
        %v4260 = vmul.f32 %v4252, 0.5
        %v4261 = vmul.f32 %v4253, 0.5
        %v4262 = vmul.f32 %v4254, 0.5
        %v4263 = vadd.f32 %v4255, 0.5
        %v4264 = vadd.f32 %v4256, 0.5
        %v4265 = vadd.f32 %v4257, 0.5
        %v4266 = vadd.f32 %v4258, 0.5
        %v4267 = vadd.f32 %v4259, 0.5
        %v4268 = vadd.f32 %v4260, 0.5
        %v4269 = vadd.f32 %v4261, 0.5
        %v4270 = vadd.f32 %v4262, 0.5
        %v4271 = vsub.f32 %v4195, %v4044
        %v4272 = vsub.f32 %v4201, %v4049
        %v4273 = vsub.f32 %v4207, %v4054
        %v4274 = vsub.f32 %v4213, %v4059
        %v4275 = vsub.f32 %v4219, %v4064
        %v4276 = vsub.f32 %v4225, %v4069
        %v4277 = vsub.f32 %v4231, %v4074
        %v4278 = vsub.f32 %v4237, %v4079
        %v4279 = vmul.f32 %v4263, %v4271
        %v4280 = vmul.f32 %v4264, %v4272
        %v4281 = vmul.f32 %v4265, %v4273
        %v4282 = vmul.f32 %v4266, %v4274
        %v4283 = vmul.f32 %v4267, %v4275
        %v4284 = vmul.f32 %v4268, %v4276
        %v4285 = vmul.f32 %v4269, %v4277
        %v4286 = vmul.f32 %v4270, %v4278
        %v4287 = vadd.f32 %v4044, %v4279
        %v4288 = vadd.f32 %v4049, %v4280
        %v4289 = vadd.f32 %v4054, %v4281
        %v4290 = vadd.f32 %v4059, %v4282
        %v4291 = vadd.f32 %v4064, %v4283
        %v4292 = vadd.f32 %v4069, %v4284
        %v4293 = vadd.f32 %v4074, %v4285
        %v4294 = vadd.f32 %v4079, %v4286
        %s4295 = scalar_lea.vmem %s5, 256
        %v4296 = vld [vmem:[%s4295] sm:$0xff]
        %v4297 = vld [vmem:[%s4295 + $0x8] sm:$0xff]
        %v4298 = vld [vmem:[%s4295 + $0x10] sm:$0xff]
        %v4299 = vld [vmem:[%s4295 + $0x18] sm:$0xff]
        %v4300 = vld [vmem:[%s4295 + $0x20] sm:$0xff]
        %v4301 = vld [vmem:[%s4295 + $0x28] sm:$0xff]
        %v4302 = vld [vmem:[%s4295 + $0x30] sm:$0xff]
        %v4303 = vld [vmem:[%s4295 + $0x38] sm:$0xff]
        %v4304 = vld [vmem:[%s4295 + $0x40] sm:$0xff]
        %v4305 = vld [vmem:[%s4295 + $0x48] sm:$0xff]
        %v4306 = vld [vmem:[%s4295 + $0x50] sm:$0xff]
        %v4307 = vld [vmem:[%s4295 + $0x58] sm:$0xff]
        %v4308 = vld [vmem:[%s4295 + $0x60] sm:$0xff]
        %v4309 = vld [vmem:[%s4295 + $0x68] sm:$0xff]
        %v4310 = vld [vmem:[%s4295 + $0x70] sm:$0xff]
        %v4311 = vld [vmem:[%s4295 + $0x78] sm:$0xff]
        %v4312 = vld [vmem:[%s4295 + $0x80] sm:$0xff]
        %v4313 = vld [vmem:[%s4295 + $0x88] sm:$0xff]
        %v4314 = vld [vmem:[%s4295 + $0x90] sm:$0xff]
        %v4315 = vld [vmem:[%s4295 + $0x98] sm:$0xff]
        %v4316 = vld [vmem:[%s4295 + $0xa0] sm:$0xff]
        %v4317 = vld [vmem:[%s4295 + $0xa8] sm:$0xff]
        %v4318 = vld [vmem:[%s4295 + $0xb0] sm:$0xff]
        %v4319 = vld [vmem:[%s4295 + $0xb8] sm:$0xff]
        %v4320 = vld [vmem:[%s4295 + $0xc0] sm:$0xff]
        %v4321 = vld [vmem:[%s4295 + $0xc8] sm:$0xff]
        %v4322 = vld [vmem:[%s4295 + $0xd0] sm:$0xff]
        %v4323 = vld [vmem:[%s4295 + $0xd8] sm:$0xff]
        %v4324 = vld [vmem:[%s4295 + $0xe0] sm:$0xff]
        %v4325 = vld [vmem:[%s4295 + $0xe8] sm:$0xff]
        %v4326 = vld [vmem:[%s4295 + $0xf0] sm:$0xff]
        %v4327 = vld [vmem:[%s4295 + $0xf8] sm:$0xff]
        %s4328 = scalar_lea.vmem %s6, 2
        %v4329 = vld [vmem:[%s4328] sm:$0x3]
        %v4331 = vlaneseq
        %v4332 = vshrl.u32 %v4331, 7
        %v4333 = vsub.s32 0, %v4332
        %v4334 = vrot.slane %v4329, %v4333
        %v4335 = vlaneseq
        %v4336 = vshrl.u32 %v4335, 7
        %v4337 = vsub.s32 1, %v4336
        %v4338 = vrot.slane %v4329, %v4337
        %4341 = vmatprep.subr.mxu0 %v4297
        %4342 = vmatpush1.msra.mxu0 %v4296
        %4343 = vmatprep.subr.mxu0 %v4299
        %4344 = vmatpush1.msra.mxu0 %v4298
        %4345 = vmatprep.subr.mxu0 %v4301
        %4346 = vmatpush1.msra.mxu0 %v4300
        %4347 = vmatprep.subr.mxu0 %v4303
        %4348 = vmatpush1.msra.mxu0 %v4302
        %4349 = vmatprep.subr.mxu0 %v4305
        %4350 = vmatpush1.msra.mxu0 %v4304
        %4351 = vmatprep.subr.mxu0 %v4307
        %4352 = vmatpush1.msra.mxu0 %v4306
        %4353 = vmatprep.subr.mxu0 %v4309
        %4354 = vmatpush1.msra.mxu0 %v4308
        %4355 = vmatprep.subr.mxu0 %v4311
        %4356 = vmatpush1.msra.mxu0 %v4310
        %4357 = vmatprep.subr.mxu0 %v4313
        %4358 = vmatpush1.msra.mxu0 %v4312
        %4359 = vmatprep.subr.mxu0 %v4315
        %4360 = vmatpush1.msra.mxu0 %v4314
        %4361 = vmatprep.subr.mxu0 %v4317
        %4362 = vmatpush1.msra.mxu0 %v4316
        %4363 = vmatprep.subr.mxu0 %v4319
        %4364 = vmatpush1.msra.mxu0 %v4318
        %4365 = vmatprep.subr.mxu0 %v4321
        %4366 = vmatpush1.msra.mxu0 %v4320
        %4367 = vmatprep.subr.mxu0 %v4323
        %4368 = vmatpush1.msra.mxu0 %v4322
        %4369 = vmatprep.subr.mxu0 %v4325
        %4370 = vmatpush1.msra.mxu0 %v4324
        %4371 = vmatprep.subr.mxu0 %v4327
        %4372 = vmatpush1.msra.mxu0 %v4326
        %4373 = vmatprep.subr.mxu0 0.0
        %4374 = vmatpush1.msra.mxu0 0.0
        %4375 = vmatprep.subr.mxu0 0.0
        %4376 = vmatpush1.msra.mxu0 0.0
        %4377 = vmatprep.subr.mxu0 0.0
        %4378 = vmatpush1.msra.mxu0 0.0
        %4379 = vmatprep.subr.mxu0 0.0
        %4380 = vmatpush1.msra.mxu0 0.0
        %4381 = vmatprep.subr.mxu0 0.0
        %4382 = vmatpush1.msra.mxu0 0.0
        %4383 = vmatprep.subr.mxu0 0.0
        %4384 = vmatpush1.msra.mxu0 0.0
        %4385 = vmatprep.subr.mxu0 0.0
        %4386 = vmatpush1.msra.mxu0 0.0
        %4387 = vmatprep.subr.mxu0 0.0
        %4388 = vmatpush1.msra.mxu0 0.0
        %4389 = vmatprep.subr.mxu0 0.0
        %4390 = vmatpush1.msra.mxu0 0.0
        %4391 = vmatprep.subr.mxu0 0.0
        %4392 = vmatpush1.msra.mxu0 0.0
        %4393 = vmatprep.subr.mxu0 0.0
        %4394 = vmatpush1.msra.mxu0 0.0
        %4395 = vmatprep.subr.mxu0 0.0
        %4396 = vmatpush1.msra.mxu0 0.0
        %4397 = vmatprep.subr.mxu0 0.0
        %4398 = vmatpush1.msra.mxu0 0.0
        %4399 = vmatprep.subr.mxu0 0.0
        %4400 = vmatpush1.msra.mxu0 0.0
        %4401 = vmatprep.subr.mxu0 0.0
        %4402 = vmatpush1.msra.mxu0 0.0
        %4403 = vmatprep.subr.mxu0 0.0
        %4404 = vmatpush1.msra.mxu0 0.0
        %4405 = vmatprep.mubr.f32.mxu0 0.0
        %4406 = vmatmul.mubr.f32.gmra.mrb[0].mxu0 %v4287
        %v4407 = vpop.f32.mrb[0].mxu0
        %v4408 = vadd.f32 %v4334, %v4407
        %v4409 = vpop.f32.mrb[0].mxu0
        %v4410 = vadd.f32 %v4338, %v4409
        %4411 = vmatprep.mubr.f32.mxu0 0.0
        %4412 = vmatmul.mubr.f32.gmra.mrb[0].mxu0 %v4288
        %v4413 = vpop.f32.mrb[0].mxu0
        %v4414 = vadd.f32 %v4334, %v4413
        %v4415 = vpop.f32.mrb[0].mxu0
        %v4416 = vadd.f32 %v4338, %v4415
        %4417 = vmatprep.mubr.f32.mxu0 0.0
        %4418 = vmatmul.mubr.f32.gmra.mrb[0].mxu0 %v4289
        %v4419 = vpop.f32.mrb[0].mxu0
        %v4420 = vadd.f32 %v4334, %v4419
        %v4421 = vpop.f32.mrb[0].mxu0
        %v4422 = vadd.f32 %v4338, %v4421
        %4423 = vmatprep.mubr.f32.mxu0 0.0
        %4424 = vmatmul.mubr.f32.gmra.mrb[0].mxu0 %v4290
        %v4425 = vpop.f32.mrb[0].mxu0
        %v4426 = vadd.f32 %v4334, %v4425
        %v4427 = vpop.f32.mrb[0].mxu0
        %v4428 = vadd.f32 %v4338, %v4427
        %4429 = vmatprep.mubr.f32.mxu0 0.0
        %4430 = vmatmul.mubr.f32.gmra.mrb[0].mxu0 %v4291
        %v4431 = vpop.f32.mrb[0].mxu0
        %v4432 = vadd.f32 %v4334, %v4431
        %v4433 = vpop.f32.mrb[0].mxu0
        %v4434 = vadd.f32 %v4338, %v4433
        %4435 = vmatprep.mubr.f32.mxu0 0.0
        %4436 = vmatmul.mubr.f32.gmra.mrb[0].mxu0 %v4292
        %v4437 = vpop.f32.mrb[0].mxu0
        %v4438 = vadd.f32 %v4334, %v4437
        %v4439 = vpop.f32.mrb[0].mxu0
        %v4440 = vadd.f32 %v4338, %v4439
        %4441 = vmatprep.mubr.f32.mxu0 0.0
        %4442 = vmatmul.mubr.f32.gmra.mrb[0].mxu0 %v4293
        %v4443 = vpop.f32.mrb[0].mxu0
        %v4444 = vadd.f32 %v4334, %v4443
        %v4445 = vpop.f32.mrb[0].mxu0
        %v4446 = vadd.f32 %v4338, %v4445
        %4447 = vmatprep.mubr.f32.mxu0 0.0
        %4448 = vmatmul.mubr.f32.gmra.mrb[0].mxu0 %v4294
        %v4449 = vpop.f32.mrb[0].mxu0
        %v4450 = vadd.f32 %v4334, %v4449
        %v4451 = vpop.f32.mrb[0].mxu0
        %v4452 = vadd.f32 %v4338, %v4451
        %4453 = vdwg.mxu0
        %v4454 = vmul.f32 %v4408, 0.5
        %v4455 = vmul.f32 %v4414, 0.5
        %v4456 = vmul.f32 %v4420, 0.5
        %v4457 = vmul.f32 %v4426, 0.5
        %v4458 = vmul.f32 %v4432, 0.5
        %v4459 = vmul.f32 %v4438, 0.5
        %v4460 = vmul.f32 %v4444, 0.5
        %v4461 = vmul.f32 %v4450, 0.5
        %v4462 = vtanh.pop %v4454
        %v4463 = vtanh.pop %v4455
        %v4464 = vtanh.pop %v4456
        %v4465 = vtanh.pop %v4457
        %v4466 = vtanh.pop %v4458
        %v4467 = vtanh.pop %v4459
        %v4468 = vtanh.pop %v4460
        %v4469 = vtanh.pop %v4461
        %v4470 = vmul.f32 %v4462, 0.5
        %v4471 = vmul.f32 %v4463, 0.5
        %v4472 = vmul.f32 %v4464, 0.5
        %v4473 = vmul.f32 %v4465, 0.5
        %v4474 = vmul.f32 %v4466, 0.5
        %v4475 = vmul.f32 %v4467, 0.5
        %v4476 = vmul.f32 %v4468, 0.5
        %v4477 = vmul.f32 %v4469, 0.5
        %v4478 = vadd.f32 %v4470, 0.5
        %v4479 = vadd.f32 %v4471, 0.5
        %v4480 = vadd.f32 %v4472, 0.5
        %v4481 = vadd.f32 %v4473, 0.5
        %v4482 = vadd.f32 %v4474, 0.5
        %v4483 = vadd.f32 %v4475, 0.5
        %v4484 = vadd.f32 %v4476, 0.5
        %v4485 = vadd.f32 %v4477, 0.5
        %v4486 = vsub.f32 %v4410, %v4287
        %v4487 = vsub.f32 %v4416, %v4288
        %v4488 = vsub.f32 %v4422, %v4289
        %v4489 = vsub.f32 %v4428, %v4290
        %v4490 = vsub.f32 %v4434, %v4291
        %v4491 = vsub.f32 %v4440, %v4292
        %v4492 = vsub.f32 %v4446, %v4293
        %v4493 = vsub.f32 %v4452, %v4294
        %v4494 = vmul.f32 %v4478, %v4486
        %v4495 = vmul.f32 %v4479, %v4487
        %v4496 = vmul.f32 %v4480, %v4488
        %v4497 = vmul.f32 %v4481, %v4489
        %v4498 = vmul.f32 %v4482, %v4490
        %v4499 = vmul.f32 %v4483, %v4491
        %v4500 = vmul.f32 %v4484, %v4492
        %v4501 = vmul.f32 %v4485, %v4493
        %v4502 = vadd.f32 %v4287, %v4494
        %v4503 = vadd.f32 %v4288, %v4495
        %v4504 = vadd.f32 %v4289, %v4496
        %v4505 = vadd.f32 %v4290, %v4497
        %v4506 = vadd.f32 %v4291, %v4498
        %v4507 = vadd.f32 %v4292, %v4499
        %v4508 = vadd.f32 %v4293, %v4500
        %v4509 = vadd.f32 %v4294, %v4501
        %4510 = vst [vmem:[%s290] sm:$0xff] %v4502
        %4511 = vst [vmem:[%s290 + $0x8] sm:$0xff] %v4503
        %4512 = vst [vmem:[%s290 + $0x10] sm:$0xff] %v4504
        %4513 = vst [vmem:[%s290 + $0x18] sm:$0xff] %v4505
        %4514 = vst [vmem:[%s290 + $0x20] sm:$0xff] %v4506
        %4515 = vst [vmem:[%s290 + $0x28] sm:$0xff] %v4507
        %4516 = vst [vmem:[%s290 + $0x30] sm:$0xff] %v4508
        %4517 = vst [vmem:[%s290 + $0x38] sm:$0xff] %v4509
        %s4518 = sand.u32 %s186, 1
        %s4519 = scalar_lea.sflag [#allocation3], %s4518
        %s4520 = sand.u32 %s186, 1
        %s4521 = smul.addr %s4520, 64
        %s4522 = scalar_lea.vmem [#allocation2], %s4521
        // Predicated region
        $region49: #{embedding_forward.1} parent=47 // pred_check
          %p4523 = pneg %p196
        $region50: #{embedding_forward.1} parent=47 // pred_check_branch
          %4525 = sbr.rel (%p4523) target = $region52
        $region51: #{embedding_forward.1} parent=47 // pred_region
          %s4526 = smul.u32 8, %s21
          %s4528 = ssub.s32 1024, 1024
          %4529 = vsyncadd %s4519, %s4528
          %s4530 = smul.addr %s4526, 128
          %s4531 = scalar_lea.hbm %s7, %s4530
          %s4532 = sshll.u32 %s4522, 4
          %s4533 = int_to_ptr.vmem [resolvable:$true] %s4532
          %4538 = dma.vmem_to_hbm [thread:$0]  %s4533, 1024, %s4531, %s4519, 128, 128, 8
        $region52: #{embedding_forward.1} parent=47 // pred_fallthru
          _
      $region48: #{embedding_forward.1} parent=5 // pred_fallthru
        _
      %p4539 = scmp.le.s32.totalorder 2, %s16
      // Predicated region
      $region53: #{embedding_forward.1} parent=5 // pred_check
        %p4540 = pneg %p4539
      $region54: #{embedding_forward.1} parent=5 // pred_check_branch
        %4542 = sbr.rel (%p4540) target = $region56
      $region55: #{embedding_forward.1} parent=5 // pred_region
        %s4543 = ssub.s32 %s16, 2
        // Predicated region
        $region57: #{embedding_forward.1} parent=55 // pred_check
          %p4544 = pneg %p202
        $region58: #{embedding_forward.1} parent=55 // pred_check_branch
          %4546 = sbr.rel (%p4544) target = $region60
        $region59: #{embedding_forward.1} parent=55 // pred_region
          %s4547 = sand.u32 %s187, 1
          %s4548 = scalar_lea.sflag [#allocation3], %s4547
          %s4549 = sand.u32 %s187, 1
          %s4550 = smul.addr %s4549, 64
          %s4551 = scalar_lea.vmem [#allocation2], %s4550
          %4552 = dma.done %s4548, 1024
        $region60: #{embedding_forward.1} parent=55 // pred_fallthru
          _
      $region56: #{embedding_forward.1} parent=5 // pred_fallthru
        _
    $region6: #{embedding_forward.1} parent=1 // loop_footer
      %s20 = sadd.s32 1, %s16
    $region7: #{embedding_forward.1} parent=1 // loop_footer_branch
      %15 = sbr.rel target = $region3
    $region8: #{embedding_forward.1} parent=1 // loop_exit
      _
    %4553 = vsyncpa [#allocation3], 1
    %s4554 = scalar_lea.sflag [#allocation3], 1
    %4555 = vsyncpa %s4554, 1

</llo_original>
